<compile_context>
chip_gen: v5e
topology: v5e:2x2
jax: 0.10.0
libtpu: 0.0.40
codegen_flags: <defaults>
</compile_context>

<pallas_src>
import math

import jax
import jax.numpy as jnp
from jax.experimental import pallas as pl
from jax.experimental.pallas import tpu as pltpu


def _round_up(x, m):
    return ((x + m - 1) // m) * m


def _block_vmem_bytes(shape, dtype):
    """Conservative VMEM footprint of one block (last two dims tile-padded)."""
    itemsize = jnp.dtype(dtype).itemsize
    if len(shape) == 1:
        return _round_up(shape[0] * itemsize, 4096)
    sub = _round_up(int(shape[-2]), max(8, 32 // itemsize))
    lane = _round_up(int(shape[-1]), 128)
    lead = 1
    for d in shape[:-2]:
        lead *= int(d)
    return lead * sub * lane * itemsize


def _make_rfb_kernel(*, taps, tile_h, w_out, cin_pad, mode, use_relu, eps,
                     m_valid, tile_m, mt_axis):
    """Kernel factory.

    taps: list of (tap_index, static row offset into the phase-stacked input,
          static column offset).  The conv tile is built in-kernel from the
          per-image VMEM block as KH*KW accumulated MXU matmuls.
    mode: 'plain' (no epilogue), 'affine' (y*scale + shift), 'instnorm'.
    """

    def conv_tile(x_ref, w_ref, mt):
        h0 = pl.multiple_of(mt * tile_h, tile_h)
        acc = None
        for t, row_off, col_off in taps:
            patch = x_ref[pl.ds(h0 + row_off, tile_h), pl.ds(col_off, w_out), :]
            lhs = patch.reshape(tile_h * w_out, cin_pad)
            part = jnp.dot(lhs, w_ref[t], preferred_element_type=jnp.float32)
            acc = part if acc is None else acc + part
        return acc

    if mode != "instnorm":

        def kernel(*refs):
            if mode == "affine":
                x_ref, w_ref, aff_ref, o_ref = refs
            else:
                x_ref, w_ref, o_ref = refs
            acc = conv_tile(x_ref, w_ref, pl.program_id(mt_axis))
            if mode == "affine":
                acc = acc * aff_ref[pl.ds(0, 1), :] + aff_ref[pl.ds(1, 1), :]
            if use_relu:
                acc = jnp.maximum(acc, 0.0)
            o_ref[...] = acc.astype(o_ref.dtype)

        return kernel

    # ---- InstanceNorm: two-pass row-tiled sweep over the same image.  The
    # input block index is constant per image, so pass 1 recomputes the conv
    # tile from VMEM (no extra HBM input traffic); only pass 1 writes output.
    def kernel(x_ref, w_ref, aff_ref, o_ref, sum_ref, ssq_ref):
        p = pl.program_id(1)
        mt = pl.program_id(mt_axis)
        acc = conv_tile(x_ref, w_ref, mt)

        @pl.when(p == 0)          # pass 0: accumulate per-channel sum / sumsq
        def _():
            @pl.when(mt == 0)
            def _():
                sum_ref[...] = jnp.zeros_like(sum_ref)
                ssq_ref[...] = jnp.zeros_like(ssq_ref)

            if m_valid % tile_m != 0:
                # Exclude zero-padded rows of the last tile from the stats.
                row = jax.lax.broadcasted_iota(jnp.int32, (tile_m, 1), 0)
                a = jnp.where(row < (m_valid - mt * tile_m), acc, 0.0)
            else:
                a = acc
            sum_ref[...] += jnp.sum(a, axis=0, keepdims=True)
            ssq_ref[...] += jnp.sum(a * a, axis=0, keepdims=True)

        @pl.when(p == 1)          # pass 1: normalize + affine + ReLU, write out
        def _():
            inv_n = 1.0 / float(m_valid)
            mean = sum_ref[...] * inv_n
            var = jnp.maximum(ssq_ref[...] * inv_n - mean * mean, 0.0)
            y = (acc - mean) * jax.lax.rsqrt(var + eps)
            y = y * aff_ref[pl.ds(0, 1), :] + aff_ref[pl.ds(1, 1), :]
            if use_relu:
                y = jnp.maximum(y, 0.0)
            o_ref[...] = y.astype(o_ref.dtype)

    return kernel


class RfbBasicConvPallas:
    """JAX/Pallas re-implementation of models.networks.RfbBasicConv (forward only)."""

    def __init__(self, in_planes, out_planes, kernel_size, stride=1, padding=0,
                 dilation=1, groups=1, relu=True, bn=False, sn=False, bias=False,
                 key=None, compute_dtype=jnp.bfloat16, out_dtype=None,
                 nhwc_out=False):
        assert not (bn and sn)
        assert groups == 1, "TODO(synk): grouped conv not implemented"
        if key is None:
            key = jax.random.PRNGKey(0)
        kh = kw = int(kernel_size)
        self.in_planes = in_planes
        self.out_channels = out_planes
        self.kh, self.kw = kh, kw
        self.stride = int(stride)
        self.padding = int(padding)
        self.dilation = int(dilation)
        self.use_relu, self.use_bn, self.use_sn = relu, bn, sn
        self.eps = 1e-5
        self.compute_dtype = compute_dtype
        self.out_dtype = compute_dtype if out_dtype is None else out_dtype
        self.nhwc_out = nhwc_out

        kw_key, kb_key = jax.random.split(key)
        # PyTorch weight layout OIHW -> HWIO.
        w_oihw = 0.1 * jax.random.normal(
            kw_key, (out_planes, in_planes, kh, kw), dtype=jnp.float32)
        self.w_hwio = jnp.transpose(w_oihw, (2, 3, 1, 0))   # (KH, KW, Cin, Cout)

        if bias:
            self.bias_vec = 0.1 * jax.random.normal(kb_key, (out_planes,), jnp.float32)
        else:
            self.bias_vec = jnp.zeros((out_planes,), jnp.float32)

        gamma = jnp.ones((out_planes,), jnp.float32)
        beta = jnp.zeros((out_planes,), jnp.float32)

        # Static padded channel sizes: K-side to a sublane multiple, Cout-side
        # lane-dense (256-aligned for the 256-wide MXU generations when large).
        self.cin_pad = _round_up(max(in_planes, 1), 8)
        self.c_pad = (_round_up(out_planes, 256) if out_planes >= 256
                      else _round_up(out_planes, 128))

        # Kernel-ready weight: (KH*KW, Cin_pad, Cout_pad) in compute dtype.
        w_k = jnp.pad(self.w_hwio,
                      ((0, 0), (0, 0), (0, self.cin_pad - in_planes),
                       (0, self.c_pad - out_planes)))
        self.w_kernel = w_k.reshape(kh * kw, self.cin_pad, self.c_pad
                                    ).astype(compute_dtype)

        # Epilogue mode and (scale, shift) rows kept in f32.
        if sn:
            # Conv bias cancels exactly inside InstanceNorm's mean subtraction,
            # so it is intentionally dropped (no-op in exact arithmetic).
            self.mode = "instnorm"
            scale_row, shift_row = gamma, beta
        elif bn:
            # Eval-mode BatchNorm (running stats).  Scale stays an f32 epilogue
            # multiply, not folded into the bf16 weights.
            self.mode = "affine"
            run_mean = jnp.zeros((out_planes,), jnp.float32)
            run_var = jnp.ones((out_planes,), jnp.float32)
            scale_row = gamma / jnp.sqrt(run_var + self.eps)
            shift_row = beta + (self.bias_vec - run_mean) * scale_row
        elif bias:
            self.mode = "affine"
            scale_row = jnp.ones((out_planes,), jnp.float32)
            shift_row = self.bias_vec
        else:
            self.mode = "plain"   # no affine input / epilogue at all
            scale_row = jnp.ones((out_planes,), jnp.float32)
            shift_row = jnp.zeros((out_planes,), jnp.float32)
        self.scale_row, self.shift_row = scale_row, shift_row
        aff = jnp.stack([scale_row, shift_row], axis=0)
        self.affine = jnp.pad(aff, ((0, 0), (0, self.c_pad - out_planes)))

    def __call__(self, x_nchw):
        n, cin, h, w = x_nchw.shape
        assert cin == self.in_planes
        kh, kw = self.kh, self.kw
        st, pad, dil = self.stride, self.padding, self.dilation
        h_out = (h + 2 * pad - dil * (kh - 1) - 1) // st + 1
        w_out = (w + 2 * pad - dil * (kw - 1) - 1) // st + 1
        cout = self.out_channels
        cin_pad, c_pad = self.cin_pad, self.c_pad

        # Row tile: target ~512 flattened output rows per grid step, with
        # tile_m = tile_h * w_out a multiple of 8 (sublane alignment).
        step = 8 // math.gcd(w_out, 8)
        tile_h = max(1, min(h_out, max(1, 512 // max(w_out, 1))))
        tile_h = min(_round_up(tile_h, step), _round_up(h_out, step))
        num_m = pl.cdiv(h_out, tile_h)
        h_out_pad = num_m * tile_h
        tile_m = tile_h * w_out
        m_valid = h_out * w_out
        m_pad = h_out_pad * w_out

        # ---- Glue (plain JAX, ~1x input bytes): bf16 cast FIRST, NHWC, pad,
        #      stride-phase relayout.  No im2col expansion. ----
        x = jnp.asarray(x_nchw).astype(self.compute_dtype)
        x = jnp.transpose(x, (0, 2, 3, 1))                       # NHWC
        q_max = (dil * (kh - 1)) // st
        p_max = (dil * (kw - 1)) // st
        h_ph = max(h_out_pad + q_max, pl.cdiv(h + 2 * pad, st))
        w_ph = max(w_out + p_max, pl.cdiv(w + 2 * pad, st))
        x = jnp.pad(x, ((0, 0),
                        (pad, st * h_ph - h - pad),
                        (pad, st * w_ph - w - pad),
                        (0, cin_pad - cin)))
        # Phase decomposition: padded row st*q + r -> phase r, row q (so every
        # kernel tap becomes a unit-stride slice inside the kernel).
        x = x.reshape(n, h_ph, st, w_ph, st, cin_pad)
        x = jnp.transpose(x, (0, 2, 4, 1, 3, 5))
        x = x.reshape(n, st * st * h_ph, w_ph, cin_pad)

        # Static per-tap (row offset, col offset) into the phase-stacked input.
        taps = []
        for i in range(kh):
            for j in range(kw):
                ri, qi = (i * dil) % st, (i * dil) // st
                rj, pj = (j * dil) % st, (j * dil) // st
                taps.append((i * kw + j, (ri * st + rj) * h_ph + qi, pj))

        use_sn = self.mode == "instnorm"
        mt_axis = 2 if use_sn else 1
        kernel = _make_rfb_kernel(
            taps=taps, tile_h=tile_h, w_out=w_out, cin_pad=cin_pad,
            mode=self.mode, use_relu=self.use_relu, eps=self.eps,
            m_valid=m_valid, tile_m=tile_m, mt_axis=mt_axis)

        x_block = (None, st * st * h_ph, w_ph, cin_pad)   # whole padded image
        w_block = (kh * kw, cin_pad, c_pad)
        o_block = (None, tile_m, c_pad)

        if use_sn:
            grid = (n, 2, num_m)
            in_specs = [
                pl.BlockSpec(x_block, lambda b, p, mt: (b, 0, 0, 0)),
                pl.BlockSpec(w_block, lambda b, p, mt: (0, 0, 0)),
                pl.BlockSpec((2, c_pad), lambda b, p, mt: (0, 0)),
            ]
            o_spec = pl.BlockSpec(o_block, lambda b, p, mt: (b, mt, 0))
            scratch = [pltpu.VMEM((1, c_pad), jnp.float32),
                       pltpu.VMEM((1, c_pad), jnp.float32)]
            semantics = ("parallel", "arbitrary", "arbitrary")
            args = (x, self.w_kernel, self.affine)
        else:
            grid = (n, num_m)
            x_spec = pl.BlockSpec(x_block, lambda b, mt: (b, 0, 0, 0))
            w_spec = pl.BlockSpec(w_block, lambda b, mt: (0, 0, 0))
            o_spec = pl.BlockSpec(o_block, lambda b, mt: (b, mt, 0))
            scratch = []
            semantics = ("parallel", "parallel")
            if self.mode == "affine":
                in_specs = [x_spec, w_spec,
                            pl.BlockSpec((2, c_pad), lambda b, mt: (0, 0))]
                args = (x, self.w_kernel, self.affine)
            else:
                in_specs = [x_spec, w_spec]
                args = (x, self.w_kernel)

        # VMEM budget from the actual block footprint, capped by the physical
        # capacity when it can be queried (v7x has only 64 MiB).
        need = (2 * _block_vmem_bytes(x_block[1:], self.compute_dtype)
                + 2 * _block_vmem_bytes(w_block, self.compute_dtype)
                + 2 * _block_vmem_bytes((2, c_pad), jnp.float32)
                + 2 * _block_vmem_bytes(o_block[1:], self.out_dtype)
                + 3 * _block_vmem_bytes((tile_m, c_pad), jnp.float32)
                + (4 << 20))
        vmem_limit = max(int(need), 32 << 20)
        try:
            cap = int(pltpu.get_tpu_info().vmem_capacity_bytes)
            vmem_limit = min(vmem_limit, (cap * 4) // 5)
        except Exception:
            vmem_limit = min(vmem_limit, 96 << 20)

        out = pl.pallas_call(
            kernel,
            out_shape=jax.ShapeDtypeStruct((n, m_pad, c_pad), self.out_dtype),
            grid_spec=pltpu.PrefetchScalarGridSpec(
                num_scalar_prefetch=0,
                grid=grid,
                in_specs=in_specs,
                out_specs=o_spec,
                scratch_shapes=scratch),
            compiler_params=pltpu.CompilerParams(
                dimension_semantics=semantics,
                vmem_limit_bytes=vmem_limit),
        )(*args)

        out = out[:, :m_valid, :cout].reshape(n, h_out, w_out, cout)
        if self.nhwc_out:
            return out                       # consumer-side layout, no transpose
        return jnp.transpose(out, (0, 3, 1, 2))    # back to NCHW (PyTorch layout)


def _reference(module, x_nchw):
    """Pure-JAX reference (lax conv) on the same quantized operands."""
    cd = module.compute_dtype
    x = jnp.asarray(x_nchw).astype(cd).astype(jnp.float32)
    w = module.w_hwio.astype(cd).astype(jnp.float32)            # (KH,KW,Cin,Cout)
    y = jax.lax.conv_general_dilated(
        x, w,
        window_strides=(module.stride, module.stride),
        padding=[(module.padding, module.padding)] * 2,
        rhs_dilation=(module.dilation, module.dilation),
        dimension_numbers=("NCHW", "HWIO", "NCHW"))
    if module.mode == "instnorm":
        mean = jnp.mean(y, axis=(2, 3), keepdims=True)
        var = jnp.mean((y - mean) ** 2, axis=(2, 3), keepdims=True)
        y = (y - mean) / jnp.sqrt(var + module.eps)
        y = (y * module.scale_row.reshape(1, -1, 1, 1)
             + module.shift_row.reshape(1, -1, 1, 1))
    elif module.mode == "affine":
        y = (y * module.scale_row.reshape(1, -1, 1, 1)
             + module.shift_row.reshape(1, -1, 1, 1))
    if module.use_relu:
        y = jnp.maximum(y, 0.0)
    # Quantize the reference to the kernel's output dtype for a like-for-like compare.
    return y.astype(module.out_dtype).astype(jnp.float32)


if __name__ == "__main__":
    key = jax.random.PRNGKey(0)
    k_x, k_w1, k_w2, k_w3, k_w4 = jax.random.split(key, 5)

    x = jax.random.normal(k_x, (2, 4, 16, 16), dtype=jnp.float32)   # NCHW

    # Config 1: defaults (conv + ReLU, no norm, no bias) -> no affine epilogue.
    m1 = RfbBasicConvPallas(4, 8, 3, stride=1, padding=1, key=k_w1)
    y1 = jax.block_until_ready(m1(x))
    assert y1.shape == (2, 8, 16, 16)
    assert jnp.allclose(jnp.asarray(y1, jnp.float32), _reference(m1, x),
                        atol=1e-2, rtol=1e-2)

    # Config 2: eval-mode BatchNorm + conv bias (f32 epilogue scale/shift).
    m2 = RfbBasicConvPallas(4, 8, 3, stride=1, padding=1, bn=True, bias=True,
                            key=k_w2)
    y2 = jax.block_until_ready(m2(x))
    assert jnp.allclose(jnp.asarray(y2, jnp.float32), _reference(m2, x),
                        atol=1e-2, rtol=1e-2)

    # Config 3: InstanceNorm (sn=True), stride 2 (phase-decomposed input,
    # two-pass row-tiled statistics).
    m3 = RfbBasicConvPallas(4, 8, 3, stride=2, padding=1, sn=True, key=k_w3)
    y3 = jax.block_until_ready(m3(x))
    assert y3.shape == (2, 8, 8, 8)
    assert jnp.allclose(jnp.asarray(y3, jnp.float32), _reference(m3, x),
                        atol=1e-2, rtol=1e-2)

    # Config 4: dilation=2 branch-style conv (as used inside RFB modules).
    m4 = RfbBasicConvPallas(4, 8, 3, stride=1, padding=2, dilation=2, bn=True,
                            key=k_w4)
    y4 = jax.block_until_ready(m4(x))
    assert y4.shape == (2, 8, 16, 16)
    assert jnp.allclose(jnp.asarray(y4, jnp.float32), _reference(m4, x),
                        atol=1e-2, rtol=1e-2)

    print("KERNEL_OK")
</pallas_src>

<mosaic_0001>
module attributes {stable_mosaic.version = 11 : i64} {
  func.func @kernel(%arg0: i32, %arg1: i32, %arg2: memref<1x18x18x8xbf16, #tpu.memory_space<vmem>>, %arg3: memref<9x8x128xbf16, #tpu.memory_space<vmem>>, %arg4: memref<1x256x128xbf16, #tpu.memory_space<vmem>>) attributes {dimension_semantics = [#tpu.dimension_semantics<parallel>, #tpu.dimension_semantics<parallel>], iteration_bounds = array<i64: 2, 1>, scalar_prefetch = 0 : i64, scratch_operands = 0 : i64, tpu.core_type = #tpu.core_type<tc>, window_params = [{transform_indices = @transform_0, window_bounds = array<i64: 1, 18, 18, 8>}, {pipeline_mode = #tpu.pipeline_mode<synchronous>, transform_indices = @transform_1, window_bounds = array<i64: 9, 8, 128>}, {transform_indices = @transform_2, window_bounds = array<i64: 1, 256, 128>}]} {
    %c16_i32 = arith.constant 16 : i32
    %0 = arith.muli %arg1, %c16_i32 : i32
    %1 = tpu.assume_multiple %0, 16 : i32
    %c0_i32 = arith.constant 0 : i32
    %2 = arith.addi %1, %c0_i32 : i32
    %c0 = arith.constant 0 : index
    %3 = arith.index_cast %2 : i32 to index
    %c0_0 = arith.constant 0 : index
    %c0_1 = arith.constant 0 : index
    %4 = vector.load %arg2[%c0, %3, %c0_0, %c0_1] : memref<1x18x18x8xbf16, #tpu.memory_space<vmem>>, vector<1x16x16x8xbf16>
    %5 = vector.shape_cast %4 : vector<1x16x16x8xbf16> to vector<16x16x8xbf16>
    %6 = vector.shape_cast %5 : vector<16x16x8xbf16> to vector<256x8xbf16>
    %c0_2 = arith.constant 0 : index
    %c0_3 = arith.constant 0 : index
    %c0_4 = arith.constant 0 : index
    %7 = vector.load %arg3[%c0_2, %c0_3, %c0_4] : memref<9x8x128xbf16, #tpu.memory_space<vmem>>, vector<1x8x128xbf16>
    %8 = vector.shape_cast %7 : vector<1x8x128xbf16> to vector<8x128xbf16>
    %cst = arith.constant dense<0.000000e+00> : vector<256x128xf32>
    %9 = tpu.matmul %6, %8, %cst {dimension_numbers = #tpu.dot_dimension_numbers<[1], [0], [0], [1], [0, 0, 1, 1], [], []>} : vector<256x8xbf16>, vector<8x128xbf16>, vector<256x128xf32> -> vector<256x128xf32>
    %c0_i32_5 = arith.constant 0 : i32
    %10 = arith.addi %1, %c0_i32_5 : i32
    %c0_6 = arith.constant 0 : index
    %11 = arith.index_cast %10 : i32 to index
    %c1 = arith.constant 1 : index
    %c0_7 = arith.constant 0 : index
    %12 = vector.load %arg2[%c0_6, %11, %c1, %c0_7] : memref<1x18x18x8xbf16, #tpu.memory_space<vmem>>, vector<1x16x16x8xbf16>
    %13 = vector.shape_cast %12 : vector<1x16x16x8xbf16> to vector<16x16x8xbf16>
    %14 = vector.shape_cast %13 : vector<16x16x8xbf16> to vector<256x8xbf16>
    %c1_8 = arith.constant 1 : index
    %c0_9 = arith.constant 0 : index
    %c0_10 = arith.constant 0 : index
    %15 = vector.load %arg3[%c1_8, %c0_9, %c0_10] : memref<9x8x128xbf16, #tpu.memory_space<vmem>>, vector<1x8x128xbf16>
    %16 = vector.shape_cast %15 : vector<1x8x128xbf16> to vector<8x128xbf16>
    %cst_11 = arith.constant dense<0.000000e+00> : vector<256x128xf32>
    %17 = tpu.matmul %14, %16, %cst_11 {dimension_numbers = #tpu.dot_dimension_numbers<[1], [0], [0], [1], [0, 0, 1, 1], [], []>} : vector<256x8xbf16>, vector<8x128xbf16>, vector<256x128xf32> -> vector<256x128xf32>
    %18 = arith.addf %9, %17 : vector<256x128xf32>
    %c0_i32_12 = arith.constant 0 : i32
    %19 = arith.addi %1, %c0_i32_12 : i32
    %c0_13 = arith.constant 0 : index
    %20 = arith.index_cast %19 : i32 to index
    %c2 = arith.constant 2 : index
    %c0_14 = arith.constant 0 : index
    %21 = vector.load %arg2[%c0_13, %20, %c2, %c0_14] : memref<1x18x18x8xbf16, #tpu.memory_space<vmem>>, vector<1x16x16x8xbf16>
    %22 = vector.shape_cast %21 : vector<1x16x16x8xbf16> to vector<16x16x8xbf16>
    %23 = vector.shape_cast %22 : vector<16x16x8xbf16> to vector<256x8xbf16>
    %c2_15 = arith.constant 2 : index
    %c0_16 = arith.constant 0 : index
    %c0_17 = arith.constant 0 : index
    %24 = vector.load %arg3[%c2_15, %c0_16, %c0_17] : memref<9x8x128xbf16, #tpu.memory_space<vmem>>, vector<1x8x128xbf16>
    %25 = vector.shape_cast %24 : vector<1x8x128xbf16> to vector<8x128xbf16>
    %cst_18 = arith.constant dense<0.000000e+00> : vector<256x128xf32>
    %26 = tpu.matmul %23, %25, %cst_18 {dimension_numbers = #tpu.dot_dimension_numbers<[1], [0], [0], [1], [0, 0, 1, 1], [], []>} : vector<256x8xbf16>, vector<8x128xbf16>, vector<256x128xf32> -> vector<256x128xf32>
    %27 = arith.addf %18, %26 : vector<256x128xf32>
    %c1_i32 = arith.constant 1 : i32
    %28 = arith.addi %1, %c1_i32 : i32
    %c0_19 = arith.constant 0 : index
    %29 = arith.index_cast %28 : i32 to index
    %c0_20 = arith.constant 0 : index
    %c0_21 = arith.constant 0 : index
    %30 = vector.load %arg2[%c0_19, %29, %c0_20, %c0_21] : memref<1x18x18x8xbf16, #tpu.memory_space<vmem>>, vector<1x16x16x8xbf16>
    %31 = vector.shape_cast %30 : vector<1x16x16x8xbf16> to vector<16x16x8xbf16>
    %32 = vector.shape_cast %31 : vector<16x16x8xbf16> to vector<256x8xbf16>
    %c3 = arith.constant 3 : index
    %c0_22 = arith.constant 0 : index
    %c0_23 = arith.constant 0 : index
    %33 = vector.load %arg3[%c3, %c0_22, %c0_23] : memref<9x8x128xbf16, #tpu.memory_space<vmem>>, vector<1x8x128xbf16>
    %34 = vector.shape_cast %33 : vector<1x8x128xbf16> to vector<8x128xbf16>
    %cst_24 = arith.constant dense<0.000000e+00> : vector<256x128xf32>
    %35 = tpu.matmul %32, %34, %cst_24 {dimension_numbers = #tpu.dot_dimension_numbers<[1], [0], [0], [1], [0, 0, 1, 1], [], []>} : vector<256x8xbf16>, vector<8x128xbf16>, vector<256x128xf32> -> vector<256x128xf32>
    %36 = arith.addf %27, %35 : vector<256x128xf32>
    %c1_i32_25 = arith.constant 1 : i32
    %37 = arith.addi %1, %c1_i32_25 : i32
    %c0_26 = arith.constant 0 : index
    %38 = arith.index_cast %37 : i32 to index
    %c1_27 = arith.constant 1 : index
    %c0_28 = arith.constant 0 : index
    %39 = vector.load %arg2[%c0_26, %38, %c1_27, %c0_28] : memref<1x18x18x8xbf16, #tpu.memory_space<vmem>>, vector<1x16x16x8xbf16>
    %40 = vector.shape_cast %39 : vector<1x16x16x8xbf16> to vector<16x16x8xbf16>
    %41 = vector.shape_cast %40 : vector<16x16x8xbf16> to vector<256x8xbf16>
    %c4 = arith.constant 4 : index
    %c0_29 = arith.constant 0 : index
    %c0_30 = arith.constant 0 : index
    %42 = vector.load %arg3[%c4, %c0_29, %c0_30] : memref<9x8x128xbf16, #tpu.memory_space<vmem>>, vector<1x8x128xbf16>
    %43 = vector.shape_cast %42 : vector<1x8x128xbf16> to vector<8x128xbf16>
    %cst_31 = arith.constant dense<0.000000e+00> : vector<256x128xf32>
    %44 = tpu.matmul %41, %43, %cst_31 {dimension_numbers = #tpu.dot_dimension_numbers<[1], [0], [0], [1], [0, 0, 1, 1], [], []>} : vector<256x8xbf16>, vector<8x128xbf16>, vector<256x128xf32> -> vector<256x128xf32>
    %45 = arith.addf %36, %44 : vector<256x128xf32>
    %c1_i32_32 = arith.constant 1 : i32
    %46 = arith.addi %1, %c1_i32_32 : i32
    %c0_33 = arith.constant 0 : index
    %47 = arith.index_cast %46 : i32 to index
    %c2_34 = arith.constant 2 : index
    %c0_35 = arith.constant 0 : index
    %48 = vector.load %arg2[%c0_33, %47, %c2_34, %c0_35] : memref<1x18x18x8xbf16, #tpu.memory_space<vmem>>, vector<1x16x16x8xbf16>
    %49 = vector.shape_cast %48 : vector<1x16x16x8xbf16> to vector<16x16x8xbf16>
    %50 = vector.shape_cast %49 : vector<16x16x8xbf16> to vector<256x8xbf16>
    %c5 = arith.constant 5 : index
    %c0_36 = arith.constant 0 : index
    %c0_37 = arith.constant 0 : index
    %51 = vector.load %arg3[%c5, %c0_36, %c0_37] : memref<9x8x128xbf16, #tpu.memory_space<vmem>>, vector<1x8x128xbf16>
    %52 = vector.shape_cast %51 : vector<1x8x128xbf16> to vector<8x128xbf16>
    %cst_38 = arith.constant dense<0.000000e+00> : vector<256x128xf32>
    %53 = tpu.matmul %50, %52, %cst_38 {dimension_numbers = #tpu.dot_dimension_numbers<[1], [0], [0], [1], [0, 0, 1, 1], [], []>} : vector<256x8xbf16>, vector<8x128xbf16>, vector<256x128xf32> -> vector<256x128xf32>
    %54 = arith.addf %45, %53 : vector<256x128xf32>
    %c2_i32 = arith.constant 2 : i32
    %55 = arith.addi %1, %c2_i32 : i32
    %c0_39 = arith.constant 0 : index
    %56 = arith.index_cast %55 : i32 to index
    %c0_40 = arith.constant 0 : index
    %c0_41 = arith.constant 0 : index
    %57 = vector.load %arg2[%c0_39, %56, %c0_40, %c0_41] : memref<1x18x18x8xbf16, #tpu.memory_space<vmem>>, vector<1x16x16x8xbf16>
    %58 = vector.shape_cast %57 : vector<1x16x16x8xbf16> to vector<16x16x8xbf16>
    %59 = vector.shape_cast %58 : vector<16x16x8xbf16> to vector<256x8xbf16>
    %c6 = arith.constant 6 : index
    %c0_42 = arith.constant 0 : index
    %c0_43 = arith.constant 0 : index
    %60 = vector.load %arg3[%c6, %c0_42, %c0_43] : memref<9x8x128xbf16, #tpu.memory_space<vmem>>, vector<1x8x128xbf16>
    %61 = vector.shape_cast %60 : vector<1x8x128xbf16> to vector<8x128xbf16>
    %cst_44 = arith.constant dense<0.000000e+00> : vector<256x128xf32>
    %62 = tpu.matmul %59, %61, %cst_44 {dimension_numbers = #tpu.dot_dimension_numbers<[1], [0], [0], [1], [0, 0, 1, 1], [], []>} : vector<256x8xbf16>, vector<8x128xbf16>, vector<256x128xf32> -> vector<256x128xf32>
    %63 = arith.addf %54, %62 : vector<256x128xf32>
    %c2_i32_45 = arith.constant 2 : i32
    %64 = arith.addi %1, %c2_i32_45 : i32
    %c0_46 = arith.constant 0 : index
    %65 = arith.index_cast %64 : i32 to index
    %c1_47 = arith.constant 1 : index
    %c0_48 = arith.constant 0 : index
    %66 = vector.load %arg2[%c0_46, %65, %c1_47, %c0_48] : memref<1x18x18x8xbf16, #tpu.memory_space<vmem>>, vector<1x16x16x8xbf16>
    %67 = vector.shape_cast %66 : vector<1x16x16x8xbf16> to vector<16x16x8xbf16>
    %68 = vector.shape_cast %67 : vector<16x16x8xbf16> to vector<256x8xbf16>
    %c7 = arith.constant 7 : index
    %c0_49 = arith.constant 0 : index
    %c0_50 = arith.constant 0 : index
    %69 = vector.load %arg3[%c7, %c0_49, %c0_50] : memref<9x8x128xbf16, #tpu.memory_space<vmem>>, vector<1x8x128xbf16>
    %70 = vector.shape_cast %69 : vector<1x8x128xbf16> to vector<8x128xbf16>
    %cst_51 = arith.constant dense<0.000000e+00> : vector<256x128xf32>
    %71 = tpu.matmul %68, %70, %cst_51 {dimension_numbers = #tpu.dot_dimension_numbers<[1], [0], [0], [1], [0, 0, 1, 1], [], []>} : vector<256x8xbf16>, vector<8x128xbf16>, vector<256x128xf32> -> vector<256x128xf32>
    %72 = arith.addf %63, %71 : vector<256x128xf32>
    %c2_i32_52 = arith.constant 2 : i32
    %73 = arith.addi %1, %c2_i32_52 : i32
    %c0_53 = arith.constant 0 : index
    %74 = arith.index_cast %73 : i32 to index
    %c2_54 = arith.constant 2 : index
    %c0_55 = arith.constant 0 : index
    %75 = vector.load %arg2[%c0_53, %74, %c2_54, %c0_55] : memref<1x18x18x8xbf16, #tpu.memory_space<vmem>>, vector<1x16x16x8xbf16>
    %76 = vector.shape_cast %75 : vector<1x16x16x8xbf16> to vector<16x16x8xbf16>
    %77 = vector.shape_cast %76 : vector<16x16x8xbf16> to vector<256x8xbf16>
    %c8 = arith.constant 8 : index
    %c0_56 = arith.constant 0 : index
    %c0_57 = arith.constant 0 : index
    %78 = vector.load %arg3[%c8, %c0_56, %c0_57] : memref<9x8x128xbf16, #tpu.memory_space<vmem>>, vector<1x8x128xbf16>
    %79 = vector.shape_cast %78 : vector<1x8x128xbf16> to vector<8x128xbf16>
    %cst_58 = arith.constant dense<0.000000e+00> : vector<256x128xf32>
    %80 = tpu.matmul %77, %79, %cst_58 {dimension_numbers = #tpu.dot_dimension_numbers<[1], [0], [0], [1], [0, 0, 1, 1], [], []>} : vector<256x8xbf16>, vector<8x128xbf16>, vector<256x128xf32> -> vector<256x128xf32>
    %81 = arith.addf %72, %80 : vector<256x128xf32>
    %cst_59 = arith.constant 0.000000e+00 : f32
    %82 = vector.broadcast %cst_59 : f32 to vector<256x128xf32>
    %83 = arith.maximumf %81, %82 : vector<256x128xf32>
    %84 = arith.truncf %83 : vector<256x128xf32> to vector<256x128xbf16>
    %c0_60 = arith.constant 0 : index
    %c0_61 = arith.constant 0 : index
    %c0_62 = arith.constant 0 : index
    %85 = vector.load %arg4[%c0_60, %c0_61, %c0_62] : memref<1x256x128xbf16, #tpu.memory_space<vmem>>, vector<1x256x128xbf16>
    %86 = vector.shape_cast %85 : vector<1x256x128xbf16> to vector<256x128xbf16>
    %87 = vector.shape_cast %84 : vector<256x128xbf16> to vector<1x256x128xbf16>
    tpu.vector_store %arg4[%c0_60, %c0_61, %c0_62], %87 {strides = array<i32>} : memref<1x256x128xbf16, #tpu.memory_space<vmem>>, vector<1x256x128xbf16>,
    return
  }
  func.func @transform_0(%arg0: i32, %arg1: i32) -> (i32, i32, i32, i32) {
    %c0_i32 = arith.constant 0 : i32
    %c0_i32_0 = arith.constant 0 : i32
    %c0_i32_1 = arith.constant 0 : i32
    %c0_i32_2 = arith.constant 0 : i32
    return %arg0, %c0_i32, %c0_i32_0, %c0_i32_1 : i32, i32, i32, i32
  }
  func.func @transform_1(%arg0: i32, %arg1: i32) -> (i32, i32, i32) {
    %c0_i32 = arith.constant 0 : i32
    %c0_i32_0 = arith.constant 0 : i32
    %c0_i32_1 = arith.constant 0 : i32
    %c0_i32_2 = arith.constant 0 : i32
    return %c0_i32, %c0_i32_0, %c0_i32_1 : i32, i32, i32
  }
  func.func @transform_2(%arg0: i32, %arg1: i32) -> (i32, i32, i32) {
    %c0_i32 = arith.constant 0 : i32
    %c0_i32_0 = arith.constant 0 : i32
    return %arg0, %arg1, %c0_i32 : i32, i32, i32
  }
}

</mosaic_0001>

<llo_original>
// kernel: tpu_custom_call.1
$region0: #{tpu_custom_call.1}
  #allocation0 [shape = 'u32[]', space=smem, size = 0x4, offset = 0x4, fixed_abs, tag = 'smem constant byte address 0x4 - core index']
  #allocation1 [shape = 'u32[72,128]{1,0:T(1,128)}', space=vmem, size = 0x9000, scoped, tag = 'internal scratch']
  %s0 = inlined_call_operand.vmem [shape: bf16[2,18,18,8], index: 0, kind: input, shape index: {}]
  %s1 = inlined_call_operand.vmem [shape: bf16[9,8,128], index: 1, kind: input, shape index: {}]
  %s2 = inlined_call_operand.hbm [shape: bf16[2,256,128], index: 2, kind: output, shape index: {}]
  %s3 = sld [smem:[#allocation0]]
  $region41: #{tpu_custom_call.1} parent=0
    _
  %s5 = ssub.s32 1, %s3
  %s6 = scalar_select 0, %s5, %s3
  $region1: #{tpu_custom_call.1} parent=0
    #allocation2 [shape = 'u8[131072]{0}', space=vmem, size = 0x20000, scoped, tag = 'output window, operand 0']
    #allocation3 [shape = 's32[2]{0}', space=sflag, size = 0x8, scoped, tag = 'scoped memory for tpu_custom_call.1']
    %7 = vsyncpa [#allocation3], 0
    %s8 = scalar_lea.sflag [#allocation3], 1
    %9 = vsyncpa %s8, 0
    loop: start=0, step=1, limit=4
    $region2: #{tpu_custom_call.1} parent=1 // loop_pre_header
      _
    $region3: #{tpu_custom_call.1} parent=1 // loop_header
      %s11 = sphi 0, %s15
      %p12 = scmp.ge.s32.totalorder %s11, 4
      %s18 = sphi 0, %s30
      %s19 = sphi 0, %s26
      %s20 = sphi 0, %s18
      %s21 = sphi 0, %s19
      %s22 = sphi 0, %s20
      %s23 = sphi 0, %s21
      %s33 = sphi 0, %s35
      %s36 = sphi 0, %s33
      %s37 = sphi 0, %s36
      %s53 = sphi 0, %s37
      %s57 = sphi 0, %s57
      %s59 = sphi 0, %s57
      %s60 = sphi 0, %s59
      %s74 = sphi 0, %s60
      %s82 = sphi 0, %s84
      %s85 = sphi 0, %s82
      %s86 = sphi 0, %s85
      %s102 = sphi 0, %s86
    $region4: #{tpu_custom_call.1} parent=1 // loop_header_branch
      %14 = sbr.rel (%p12) target = $region8
    $region5: #{tpu_custom_call.1} parent=1 // loop_body
      %s16 = ssub.s32 %s11, 1
      %s17 = ssub.s32 %s11, 2
      %s24 = sadd.s32 1, %s19
      %p25 = scmp.ge.s32.totalorder %s24, 1
      %s26 = scalar_select %p25, 0, %s24
      %s27 = sadd.s32 1, %s18
      %s28 = scalar_select %p25, %s27, %s18
      %p29 = scmp.ge.s32.totalorder %s28, 2
      %s30 = scalar_select %p29, 0, %s28
      %s31 = ssub.s32 %s18, %s30
      %p32 = scmp.eq.s32.totalorder %s31, 0
      %s34 = sadd.s32 %s33, 1
      %s35 = scalar_select %p32, %s33, %s34
      %p38 = pneg %p32
      %p39 = scmp.eq.s32.totalorder %s11, 1
      %p40 = por %p38, %p39
      %p41 = scmp.ne.s32.totalorder %s33, %s36
      %p42 = scmp.eq.s32.totalorder %s11, 0
      %p43 = por %p41, %p42
      %p44 = scmp.ne.s32.totalorder %s33, %s36
      %p45 = scmp.eq.s32.totalorder %s16, 1
      %p46 = por %p44, %p45
      %p47 = scmp.ne.s32.totalorder %s36, %s37
      %p48 = scmp.eq.s32.totalorder %s16, 0
      %p49 = por %p47, %p48
      %p50 = scmp.ne.s32.totalorder %s36, %s37
      %p51 = scmp.eq.s32.totalorder %s17, 1
      %p52 = por %p50, %p51
      %p54 = scmp.ne.s32.totalorder %s37, %s53
      %p55 = scmp.eq.s32.totalorder %s17, 0
      %p56 = por %p54, %p55
      %s58 = sadd.s32 %s57, 1
      %p61 = scmp.eq.s32.totalorder %s11, 1
      %p62 = scmp.ne.s32.totalorder %s57, %s59
      %p63 = scmp.eq.s32.totalorder %s11, 0
      %p64 = por %p62, %p63
      %p65 = scmp.ne.s32.totalorder %s57, %s59
      %p66 = scmp.eq.s32.totalorder %s16, 1
      %p67 = por %p65, %p66
      %p68 = scmp.ne.s32.totalorder %s59, %s60
      %p69 = scmp.eq.s32.totalorder %s16, 0
      %p70 = por %p68, %p69
      %p71 = scmp.ne.s32.totalorder %s59, %s60
      %p72 = scmp.eq.s32.totalorder %s17, 1
      %p73 = por %p71, %p72
      %p75 = scmp.ne.s32.totalorder %s60, %s74
      %p76 = scmp.eq.s32.totalorder %s17, 0
      %p77 = por %p75, %p76
      %s78 = ssub.s32 %s18, %s30
      %s79 = ssub.s32 %s19, %s26
      %s80 = sor.u32 %s78, %s79
      %p81 = scmp.eq.s32.totalorder %s80, 0
      %s83 = sadd.s32 %s82, 1
      %s84 = scalar_select %p81, %s82, %s83
      %p87 = pneg %p81
      %p88 = scmp.eq.s32.totalorder %s11, 1
      %p89 = por %p87, %p88
      %p90 = scmp.ne.s32.totalorder %s82, %s85
      %p91 = scmp.eq.s32.totalorder %s11, 0
      %p92 = por %p90, %p91
      %p93 = scmp.ne.s32.totalorder %s82, %s85
      %p94 = scmp.eq.s32.totalorder %s16, 1
      %p95 = por %p93, %p94
      %p96 = scmp.ne.s32.totalorder %s85, %s86
      %p97 = scmp.eq.s32.totalorder %s16, 0
      %p98 = por %p96, %p97
      %p99 = scmp.ne.s32.totalorder %s85, %s86
      %p100 = scmp.eq.s32.totalorder %s17, 1
      %p101 = por %p99, %p100
      %p103 = scmp.ne.s32.totalorder %s86, %s102
      %p104 = scmp.eq.s32.totalorder %s17, 0
      %p105 = por %p103, %p104
      %p106 = scmp.le.s32.totalorder 1, %s11
      %p107 = scmp.lt.s32.totalorder %s11, 3
      %p108 = pnand %p106, %p107
      %p109 = pneg %p108
      // Predicated region
      $region9: #{tpu_custom_call.1} parent=5 // pred_check
        _
      $region10: #{tpu_custom_call.1} parent=5 // pred_check_branch
        %111 = sbr.rel (%p108) target = $region12
      $region11: #{tpu_custom_call.1} parent=5 // pred_region
        %s112 = ssub.s32 %s11, 1
        // Predicated region
        $region13: #{tpu_custom_call.1} parent=11 // pred_check
          %p113 = pneg %p70
        $region14: #{tpu_custom_call.1} parent=11 // pred_check_branch
          %115 = sbr.rel (%p113) target = $region16
        $region15: #{tpu_custom_call.1} parent=11 // pred_region
          _
        $region16: #{tpu_custom_call.1} parent=11 // pred_fallthru
          _
      $region12: #{tpu_custom_call.1} parent=5 // pred_fallthru
        _
      %p116 = scmp.lt.s32.totalorder %s11, 2
      // Predicated region
      $region17: #{tpu_custom_call.1} parent=5 // pred_check
        %p117 = pneg %p116
      $region18: #{tpu_custom_call.1} parent=5 // pred_check_branch
        %119 = sbr.rel (%p117) target = $region20
      $region19: #{tpu_custom_call.1} parent=5 // pred_region
        // Predicated region
        $region21: #{tpu_custom_call.1} parent=19 // pred_check
          %p120 = pneg %p43
        $region22: #{tpu_custom_call.1} parent=19 // pred_check_branch
          %122 = sbr.rel (%p120) target = $region24
        $region23: #{tpu_custom_call.1} parent=19 // pred_region
          %p123 = scmp.lt.s32.totalorder %s18, 1
          %s124 = scalar_select %p123, %s18, 1
          %s125 = smul.addr %s124, 54
          %s126 = smul.addr %s125, 4
          %s127 = scalar_lea.vmem %s0, %s126
        $region24: #{tpu_custom_call.1} parent=19 // pred_fallthru
          _
      $region20: #{tpu_custom_call.1} parent=5 // pred_fallthru
        _
      %p128 = scmp.le.s32.totalorder 1, %s11
      %p129 = scmp.lt.s32.totalorder %s11, 3
      %p130 = pnand %p128, %p129
      %p131 = pneg %p130
      // Predicated region
      $region25: #{tpu_custom_call.1} parent=5 // pred_check
        _
      $region26: #{tpu_custom_call.1} parent=5 // pred_check_branch
        %133 = sbr.rel (%p130) target = $region28
      $region27: #{tpu_custom_call.1} parent=5 // pred_region
        %s134 = ssub.s32 %s11, 1
        %p135 = scmp.lt.s32.totalorder %s20, 1
        %s136 = scalar_select %p135, %s20, 1
        %s137 = smul.addr %s136, 54
        %s138 = smul.addr %s137, 4
        %s139 = scalar_lea.vmem %s0, %s138
        %p140 = pneg %p49
        %p141 = pneg %p46
        %p142 = pneg %p70
        %p143 = pneg %p67
        %p144 = pneg %p98
        %p145 = pneg %p95
        %s146 = sand.u32 %s85, 1
        %s147 = scalar_lea.sflag [#allocation3], %s146
        %s148 = sand.u32 %s85, 1
        %s149 = smul.addr %s148, 128
        %s150 = scalar_lea.vmem [#allocation2], %s149
        %p151 = scmp.lt.s32.totalorder %s20, 1
        %s152 = scalar_select %p151, %s20, 1
        %s153 = smul.addr %s152, 54
        %s154 = smul.addr %s153, 4
        %s155 = scalar_lea.vmem %s0, %s154
        %s156 = smul.u32 32, %s21
        %s158 = smul.u32 %s21, 16
        %s159 = smul.u32 %s158, 3
        %s160 = smul.addr %s159, 4
        %s161 = scalar_lea.vmem %s155, %s160
        %v162 = vld [vmem:[%s161] sm:$0xf]
        %v163 = vld [vmem:[%s161 + $0x4] sm:$0xf]
        %v164 = vld [vmem:[%s161 + $0xc] sm:$0xf]
        %v165 = vld [vmem:[%s161 + $0x10] sm:$0xf]
        %v166 = vld [vmem:[%s161 + $0x18] sm:$0xf]
        %v167 = vld [vmem:[%s161 + $0x1c] sm:$0xf]
        %v168 = vld [vmem:[%s161 + $0x24] sm:$0xf]
        %v169 = vld [vmem:[%s161 + $0x28] sm:$0xf]
        %v170 = vld [vmem:[%s161 + $0x30] sm:$0xf]
        %v171 = vld [vmem:[%s161 + $0x34] sm:$0xf]
        %v172 = vld [vmem:[%s161 + $0x3c] sm:$0xf]
        %v173 = vld [vmem:[%s161 + $0x40] sm:$0xf]
        %v174 = vld [vmem:[%s161 + $0x48] sm:$0xf]
        %v175 = vld [vmem:[%s161 + $0x4c] sm:$0xf]
        %v176 = vld [vmem:[%s161 + $0x54] sm:$0xf]
        %v177 = vld [vmem:[%s161 + $0x58] sm:$0xf]
        %v178 = vld [vmem:[%s161 + $0x60] sm:$0xf]
        %v179 = vld [vmem:[%s161 + $0x64] sm:$0xf]
        %v180 = vld [vmem:[%s161 + $0x6c] sm:$0xf]
        %v181 = vld [vmem:[%s161 + $0x70] sm:$0xf]
        %v182 = vld [vmem:[%s161 + $0x78] sm:$0xf]
        %v183 = vld [vmem:[%s161 + $0x7c] sm:$0xf]
        %v184 = vld [vmem:[%s161 + $0x84] sm:$0xf]
        %v185 = vld [vmem:[%s161 + $0x88] sm:$0xf]
        %v186 = vld [vmem:[%s161 + $0x90] sm:$0xf]
        %v187 = vld [vmem:[%s161 + $0x94] sm:$0xf]
        %v188 = vld [vmem:[%s161 + $0x9c] sm:$0xf]
        %v189 = vld [vmem:[%s161 + $0xa0] sm:$0xf]
        %v190 = vld [vmem:[%s161 + $0xa8] sm:$0xf]
        %v191 = vld [vmem:[%s161 + $0xac] sm:$0xf]
        %v192 = vld [vmem:[%s161 + $0xb4] sm:$0xf]
        %v193 = vld [vmem:[%s161 + $0xb8] sm:$0xf]
        %v194 = vld [vmem:[%s1] sm:$0xf]
        %v195 = vld [vmem:[%s161 + $0x8] sm:$0x1]
        %v196 = vld [vmem:[%s161 + $0x14] sm:$0x1]
        %v197 = vld [vmem:[%s161 + $0x20] sm:$0x1]
        %v198 = vld [vmem:[%s161 + $0x2c] sm:$0x1]
        %v199 = vld [vmem:[%s161 + $0x38] sm:$0x1]
        %v200 = vld [vmem:[%s161 + $0x44] sm:$0x1]
        %v201 = vld [vmem:[%s161 + $0x50] sm:$0x1]
        %v202 = vld [vmem:[%s161 + $0x5c] sm:$0x1]
        %v203 = vld [vmem:[%s161 + $0x68] sm:$0x1]
        %v204 = vld [vmem:[%s161 + $0x74] sm:$0x1]
        %v205 = vld [vmem:[%s161 + $0x80] sm:$0x1]
        %v206 = vld [vmem:[%s161 + $0x8c] sm:$0x1]
        %v207 = vld [vmem:[%s161 + $0x98] sm:$0x1]
        %v208 = vld [vmem:[%s161 + $0xa4] sm:$0x1]
        %v209 = vld [vmem:[%s161 + $0xb0] sm:$0x1]
        %v210 = vld [vmem:[%s161 + $0xbc] sm:$0x1]
        %vm211 = vsmask.f32 3328
        %vm212 = vsmask.f32 7440
        %vm213 = vmor %vm211, %vm212
        %v215 = vshrl.u32 %v162, 16
        %v217 = vrot.slane %v215, 4
        %v218 = vshll.u32 %v162, 16
        %v220 = vrot.slane %v218, 5
        %v221 = vor.u32 %v217, %v220
        %v222 = vrot.slane %v221, 4
        %v224 = vshll.u32 %v163, 16
        %v226 = vrot.slane %v224, 5
        %v227 = vsel %vm213, %v222, %v226
        %v228 = vshrl.u32 %v163, 16
        %v230 = vrot.slane %v228, 4
        %v231 = vor.u32 %v230, %v226
        %v232 = vrot.slane %v231, 4
        %v234 = vshll.u32 %v195, 16
        %v236 = vrot.slane %v234, 5
        %v237 = vsel %vm213, %v232, %v236
        %v239 = vshrl.u32 %v164, 16
        %v241 = vrot.slane %v239, 4
        %v242 = vshll.u32 %v164, 16
        %v244 = vrot.slane %v242, 5
        %v245 = vor.u32 %v241, %v244
        %v246 = vrot.slane %v245, 4
        %v248 = vshll.u32 %v165, 16
        %v250 = vrot.slane %v248, 5
        %v251 = vsel %vm213, %v246, %v250
        %v252 = vshrl.u32 %v165, 16
        %v254 = vrot.slane %v252, 4
        %v255 = vor.u32 %v254, %v250
        %v256 = vrot.slane %v255, 4
        %v258 = vshll.u32 %v196, 16
        %v260 = vrot.slane %v258, 5
        %v261 = vsel %vm213, %v256, %v260
        %v263 = vshrl.u32 %v166, 16
        %v265 = vrot.slane %v263, 4
        %v266 = vshll.u32 %v166, 16
        %v268 = vrot.slane %v266, 5
        %v269 = vor.u32 %v265, %v268
        %v270 = vrot.slane %v269, 4
        %v272 = vshll.u32 %v167, 16
        %v274 = vrot.slane %v272, 5
        %v275 = vsel %vm213, %v270, %v274
        %v276 = vshrl.u32 %v167, 16
        %v278 = vrot.slane %v276, 4
        %v279 = vor.u32 %v278, %v274
        %v280 = vrot.slane %v279, 4
        %v282 = vshll.u32 %v197, 16
        %v284 = vrot.slane %v282, 5
        %v285 = vsel %vm213, %v280, %v284
        %v287 = vshrl.u32 %v168, 16
        %v289 = vrot.slane %v287, 4
        %v290 = vshll.u32 %v168, 16
        %v292 = vrot.slane %v290, 5
        %v293 = vor.u32 %v289, %v292
        %v294 = vrot.slane %v293, 4
        %v296 = vshll.u32 %v169, 16
        %v298 = vrot.slane %v296, 5
        %v299 = vsel %vm213, %v294, %v298
        %v300 = vshrl.u32 %v169, 16
        %v302 = vrot.slane %v300, 4
        %v303 = vor.u32 %v302, %v298
        %v304 = vrot.slane %v303, 4
        %v306 = vshll.u32 %v198, 16
        %v308 = vrot.slane %v306, 5
        %v309 = vsel %vm213, %v304, %v308
        %v311 = vshrl.u32 %v170, 16
        %v313 = vrot.slane %v311, 4
        %v314 = vshll.u32 %v170, 16
        %v316 = vrot.slane %v314, 5
        %v317 = vor.u32 %v313, %v316
        %v318 = vrot.slane %v317, 4
        %v320 = vshll.u32 %v171, 16
        %v322 = vrot.slane %v320, 5
        %v323 = vsel %vm213, %v318, %v322
        %v324 = vshrl.u32 %v171, 16
        %v326 = vrot.slane %v324, 4
        %v327 = vor.u32 %v326, %v322
        %v328 = vrot.slane %v327, 4
        %v330 = vshll.u32 %v199, 16
        %v332 = vrot.slane %v330, 5
        %v333 = vsel %vm213, %v328, %v332
        %v335 = vshrl.u32 %v172, 16
        %v337 = vrot.slane %v335, 4
        %v338 = vshll.u32 %v172, 16
        %v340 = vrot.slane %v338, 5
        %v341 = vor.u32 %v337, %v340
        %v342 = vrot.slane %v341, 4
        %v344 = vshll.u32 %v173, 16
        %v346 = vrot.slane %v344, 5
        %v347 = vsel %vm213, %v342, %v346
        %v348 = vshrl.u32 %v173, 16
        %v350 = vrot.slane %v348, 4
        %v351 = vor.u32 %v350, %v346
        %v352 = vrot.slane %v351, 4
        %v354 = vshll.u32 %v200, 16
        %v356 = vrot.slane %v354, 5
        %v357 = vsel %vm213, %v352, %v356
        %v359 = vshrl.u32 %v174, 16
        %v361 = vrot.slane %v359, 4
        %v362 = vshll.u32 %v174, 16
        %v364 = vrot.slane %v362, 5
        %v365 = vor.u32 %v361, %v364
        %v366 = vrot.slane %v365, 4
        %v368 = vshll.u32 %v175, 16
        %v370 = vrot.slane %v368, 5
        %v371 = vsel %vm213, %v366, %v370
        %v372 = vshrl.u32 %v175, 16
        %v374 = vrot.slane %v372, 4
        %v375 = vor.u32 %v374, %v370
        %v376 = vrot.slane %v375, 4
        %v378 = vshll.u32 %v201, 16
        %v380 = vrot.slane %v378, 5
        %v381 = vsel %vm213, %v376, %v380
        %v383 = vshrl.u32 %v176, 16
        %v385 = vrot.slane %v383, 4
        %v386 = vshll.u32 %v176, 16
        %v388 = vrot.slane %v386, 5
        %v389 = vor.u32 %v385, %v388
        %v390 = vrot.slane %v389, 4
        %v392 = vshll.u32 %v177, 16
        %v394 = vrot.slane %v392, 5
        %v395 = vsel %vm213, %v390, %v394
        %v396 = vshrl.u32 %v177, 16
        %v398 = vrot.slane %v396, 4
        %v399 = vor.u32 %v398, %v394
        %v400 = vrot.slane %v399, 4
        %v402 = vshll.u32 %v202, 16
        %v404 = vrot.slane %v402, 5
        %v405 = vsel %vm213, %v400, %v404
        %v407 = vshrl.u32 %v178, 16
        %v409 = vrot.slane %v407, 4
        %v410 = vshll.u32 %v178, 16
        %v412 = vrot.slane %v410, 5
        %v413 = vor.u32 %v409, %v412
        %v414 = vrot.slane %v413, 4
        %v416 = vshll.u32 %v179, 16
        %v418 = vrot.slane %v416, 5
        %v419 = vsel %vm213, %v414, %v418
        %v420 = vshrl.u32 %v179, 16
        %v422 = vrot.slane %v420, 4
        %v423 = vor.u32 %v422, %v418
        %v424 = vrot.slane %v423, 4
        %v426 = vshll.u32 %v203, 16
        %v428 = vrot.slane %v426, 5
        %v429 = vsel %vm213, %v424, %v428
        %v431 = vshrl.u32 %v180, 16
        %v433 = vrot.slane %v431, 4
        %v434 = vshll.u32 %v180, 16
        %v436 = vrot.slane %v434, 5
        %v437 = vor.u32 %v433, %v436
        %v438 = vrot.slane %v437, 4
        %v440 = vshll.u32 %v181, 16
        %v442 = vrot.slane %v440, 5
        %v443 = vsel %vm213, %v438, %v442
        %v444 = vshrl.u32 %v181, 16
        %v446 = vrot.slane %v444, 4
        %v447 = vor.u32 %v446, %v442
        %v448 = vrot.slane %v447, 4
        %v450 = vshll.u32 %v204, 16
        %v452 = vrot.slane %v450, 5
        %v453 = vsel %vm213, %v448, %v452
        %v455 = vshrl.u32 %v182, 16
        %v457 = vrot.slane %v455, 4
        %v458 = vshll.u32 %v182, 16
        %v460 = vrot.slane %v458, 5
        %v461 = vor.u32 %v457, %v460
        %v462 = vrot.slane %v461, 4
        %v464 = vshll.u32 %v183, 16
        %v466 = vrot.slane %v464, 5
        %v467 = vsel %vm213, %v462, %v466
        %v468 = vshrl.u32 %v183, 16
        %v470 = vrot.slane %v468, 4
        %v471 = vor.u32 %v470, %v466
        %v472 = vrot.slane %v471, 4
        %v474 = vshll.u32 %v205, 16
        %v476 = vrot.slane %v474, 5
        %v477 = vsel %vm213, %v472, %v476
        %v479 = vshrl.u32 %v184, 16
        %v481 = vrot.slane %v479, 4
        %v482 = vshll.u32 %v184, 16
        %v484 = vrot.slane %v482, 5
        %v485 = vor.u32 %v481, %v484
        %v486 = vrot.slane %v485, 4
        %v488 = vshll.u32 %v185, 16
        %v490 = vrot.slane %v488, 5
        %v491 = vsel %vm213, %v486, %v490
        %v492 = vshrl.u32 %v185, 16
        %v494 = vrot.slane %v492, 4
        %v495 = vor.u32 %v494, %v490
        %v496 = vrot.slane %v495, 4
        %v498 = vshll.u32 %v206, 16
        %v500 = vrot.slane %v498, 5
        %v501 = vsel %vm213, %v496, %v500
        %v503 = vshrl.u32 %v186, 16
        %v505 = vrot.slane %v503, 4
        %v506 = vshll.u32 %v186, 16
        %v508 = vrot.slane %v506, 5
        %v509 = vor.u32 %v505, %v508
        %v510 = vrot.slane %v509, 4
        %v512 = vshll.u32 %v187, 16
        %v514 = vrot.slane %v512, 5
        %v515 = vsel %vm213, %v510, %v514
        %v516 = vshrl.u32 %v187, 16
        %v518 = vrot.slane %v516, 4
        %v519 = vor.u32 %v518, %v514
        %v520 = vrot.slane %v519, 4
        %v522 = vshll.u32 %v207, 16
        %v524 = vrot.slane %v522, 5
        %v525 = vsel %vm213, %v520, %v524
        %v527 = vshrl.u32 %v188, 16
        %v529 = vrot.slane %v527, 4
        %v530 = vshll.u32 %v188, 16
        %v532 = vrot.slane %v530, 5
        %v533 = vor.u32 %v529, %v532
        %v534 = vrot.slane %v533, 4
        %v536 = vshll.u32 %v189, 16
        %v538 = vrot.slane %v536, 5
        %v539 = vsel %vm213, %v534, %v538
        %v540 = vshrl.u32 %v189, 16
        %v542 = vrot.slane %v540, 4
        %v543 = vor.u32 %v542, %v538
        %v544 = vrot.slane %v543, 4
        %v546 = vshll.u32 %v208, 16
        %v548 = vrot.slane %v546, 5
        %v549 = vsel %vm213, %v544, %v548
        %v551 = vshrl.u32 %v190, 16
        %v553 = vrot.slane %v551, 4
        %v554 = vshll.u32 %v190, 16
        %v556 = vrot.slane %v554, 5
        %v557 = vor.u32 %v553, %v556
        %v558 = vrot.slane %v557, 4
        %v560 = vshll.u32 %v191, 16
        %v562 = vrot.slane %v560, 5
        %v563 = vsel %vm213, %v558, %v562
        %v564 = vshrl.u32 %v191, 16
        %v566 = vrot.slane %v564, 4
        %v567 = vor.u32 %v566, %v562
        %v568 = vrot.slane %v567, 4
        %v570 = vshll.u32 %v209, 16
        %v572 = vrot.slane %v570, 5
        %v573 = vsel %vm213, %v568, %v572
        %v575 = vshrl.u32 %v192, 16
        %v577 = vrot.slane %v575, 4
        %v578 = vshll.u32 %v192, 16
        %v580 = vrot.slane %v578, 5
        %v581 = vor.u32 %v577, %v580
        %v582 = vrot.slane %v581, 4
        %v584 = vshll.u32 %v193, 16
        %v586 = vrot.slane %v584, 5
        %v587 = vsel %vm213, %v582, %v586
        %v588 = vshrl.u32 %v193, 16
        %v590 = vrot.slane %v588, 4
        %v591 = vor.u32 %v590, %v586
        %v592 = vrot.slane %v591, 4
        %v594 = vshll.u32 %v210, 16
        %v596 = vrot.slane %v594, 5
        %v597 = vsel %vm213, %v592, %v596
        %s598 = scalar_lea.vmem %s1, 4
        %v599 = vld [vmem:[%s598] sm:$0xf]
        %v600 = vunpack.c.l.b16 %v227
        %v601 = vunpack.c.l.b16 %v237
        %v602 = vunpack.c.l.b16 %v251
        %v603 = vunpack.c.l.b16 %v261
        %v604 = vunpack.c.l.b16 %v275
        %v605 = vunpack.c.l.b16 %v285
        %v606 = vunpack.c.l.b16 %v299
        %v607 = vunpack.c.l.b16 %v309
        %v608 = vunpack.c.l.b16 %v323
        %v609 = vunpack.c.l.b16 %v333
        %v610 = vunpack.c.l.b16 %v347
        %v611 = vunpack.c.l.b16 %v357
        %v612 = vunpack.c.l.b16 %v371
        %v613 = vunpack.c.l.b16 %v381
        %v614 = vunpack.c.l.b16 %v395
        %v615 = vunpack.c.l.b16 %v405
        %v616 = vunpack.c.l.b16 %v419
        %v617 = vunpack.c.l.b16 %v429
        %v618 = vunpack.c.l.b16 %v443
        %v619 = vunpack.c.l.b16 %v453
        %v620 = vunpack.c.l.b16 %v467
        %v621 = vunpack.c.l.b16 %v477
        %v622 = vunpack.c.l.b16 %v491
        %v623 = vunpack.c.l.b16 %v501
        %v624 = vunpack.c.l.b16 %v515
        %v625 = vunpack.c.l.b16 %v525
        %v626 = vunpack.c.l.b16 %v539
        %v627 = vunpack.c.l.b16 %v549
        %v628 = vunpack.c.l.b16 %v563
        %v629 = vunpack.c.l.b16 %v573
        %v630 = vunpack.c.l.b16 %v587
        %v631 = vunpack.c.l.b16 %v597
        %v632 = vpack.c.b16 %v601, %v600
        %v633 = vpack.c.b16 %v603, %v602
        %v634 = vpack.c.b16 %v605, %v604
        %v635 = vpack.c.b16 %v607, %v606
        %v636 = vpack.c.b16 %v609, %v608
        %v637 = vpack.c.b16 %v611, %v610
        %v638 = vpack.c.b16 %v613, %v612
        %v639 = vpack.c.b16 %v615, %v614
        %v640 = vpack.c.b16 %v617, %v616
        %v641 = vpack.c.b16 %v619, %v618
        %v642 = vpack.c.b16 %v621, %v620
        %v643 = vpack.c.b16 %v623, %v622
        %v644 = vpack.c.b16 %v625, %v624
        %v645 = vpack.c.b16 %v627, %v626
        %v646 = vpack.c.b16 %v629, %v628
        %v647 = vpack.c.b16 %v631, %v630
        %vm648 = vcmask 64512
        %v650 = vsel %vm648, %v632, 0
        %v653 = vsel %vm648, %v633, 0
        %v656 = vsel %vm648, %v634, 0
        %v659 = vsel %vm648, %v635, 0
        %v662 = vsel %vm648, %v636, 0
        %v665 = vsel %vm648, %v637, 0
        %v668 = vsel %vm648, %v638, 0
        %v671 = vsel %vm648, %v639, 0
        %v674 = vsel %vm648, %v640, 0
        %v677 = vsel %vm648, %v641, 0
        %v680 = vsel %vm648, %v642, 0
        %v683 = vsel %vm648, %v643, 0
        %v686 = vsel %vm648, %v644, 0
        %v689 = vsel %vm648, %v645, 0
        %v692 = vsel %vm648, %v646, 0
        %v695 = vsel %vm648, %v647, 0
        %vm697 = vcmask 1043456
        %v699 = vsel %vm697, %v599, 0
        %701 = vmatpush.bf16.msra.mxu0 0
        %702 = vmatpush.bf16.msra.mxu0 0
        %703 = vmatpush.bf16.msra.mxu0 0
        %704 = vmatpush.bf16.msra.mxu0 0
        %705 = vmatpush.bf16.msra.mxu0 0
        %706 = vmatpush.bf16.msra.mxu0 0
        %707 = vmatpush.bf16.msra.mxu0 0
        %708 = vmatpush.bf16.msra.mxu0 %v699
        %709 = vmatmul.bf16.gmra.mxu0 %v650
        %v710 = vpop.f32.mrf.mxu0
        %v711 = vadd.f32 0.0, %v710
        %v712 = vpop.f32.mrf.mxu0
        %v713 = vadd.f32 0.0, %v712
        %714 = vmatmul.bf16.gmra.mxu0 %v653
        %v715 = vpop.f32.mrf.mxu0
        %v716 = vadd.f32 0.0, %v715
        %v717 = vpop.f32.mrf.mxu0
        %v718 = vadd.f32 0.0, %v717
        %719 = vmatmul.bf16.gmra.mxu0 %v656
        %v720 = vpop.f32.mrf.mxu0
        %v721 = vadd.f32 0.0, %v720
        %v722 = vpop.f32.mrf.mxu0
        %v723 = vadd.f32 0.0, %v722
        %724 = vmatmul.bf16.gmra.mxu0 %v659
        %v725 = vpop.f32.mrf.mxu0
        %v726 = vadd.f32 0.0, %v725
        %v727 = vpop.f32.mrf.mxu0
        %v728 = vadd.f32 0.0, %v727
        %729 = vmatmul.bf16.gmra.mxu0 %v662
        %v730 = vpop.f32.mrf.mxu0
        %v731 = vadd.f32 0.0, %v730
        %v732 = vpop.f32.mrf.mxu0
        %v733 = vadd.f32 0.0, %v732
        %734 = vmatmul.bf16.gmra.mxu0 %v665
        %v735 = vpop.f32.mrf.mxu0
        %v736 = vadd.f32 0.0, %v735
        %v737 = vpop.f32.mrf.mxu0
        %v738 = vadd.f32 0.0, %v737
        %739 = vmatmul.bf16.gmra.mxu0 %v668
        %v740 = vpop.f32.mrf.mxu0
        %v741 = vadd.f32 0.0, %v740
        %v742 = vpop.f32.mrf.mxu0
        %v743 = vadd.f32 0.0, %v742
        %744 = vmatmul.bf16.gmra.mxu0 %v671
        %v745 = vpop.f32.mrf.mxu0
        %v746 = vadd.f32 0.0, %v745
        %v747 = vpop.f32.mrf.mxu0
        %v748 = vadd.f32 0.0, %v747
        %749 = vmatmul.bf16.gmra.mxu0 %v674
        %v750 = vpop.f32.mrf.mxu0
        %v751 = vadd.f32 0.0, %v750
        %v752 = vpop.f32.mrf.mxu0
        %v753 = vadd.f32 0.0, %v752
        %754 = vmatmul.bf16.gmra.mxu0 %v677
        %v755 = vpop.f32.mrf.mxu0
        %v756 = vadd.f32 0.0, %v755
        %v757 = vpop.f32.mrf.mxu0
        %v758 = vadd.f32 0.0, %v757
        %759 = vmatmul.bf16.gmra.mxu0 %v680
        %v760 = vpop.f32.mrf.mxu0
        %v761 = vadd.f32 0.0, %v760
        %v762 = vpop.f32.mrf.mxu0
        %v763 = vadd.f32 0.0, %v762
        %764 = vmatmul.bf16.gmra.mxu0 %v683
        %v765 = vpop.f32.mrf.mxu0
        %v766 = vadd.f32 0.0, %v765
        %v767 = vpop.f32.mrf.mxu0
        %v768 = vadd.f32 0.0, %v767
        %769 = vmatmul.bf16.gmra.mxu0 %v686
        %v770 = vpop.f32.mrf.mxu0
        %v771 = vadd.f32 0.0, %v770
        %v772 = vpop.f32.mrf.mxu0
        %v773 = vadd.f32 0.0, %v772
        %774 = vmatmul.bf16.gmra.mxu0 %v689
        %v775 = vpop.f32.mrf.mxu0
        %v776 = vadd.f32 0.0, %v775
        %v777 = vpop.f32.mrf.mxu0
        %v778 = vadd.f32 0.0, %v777
        %779 = vmatmul.bf16.gmra.mxu0 %v692
        %v780 = vpop.f32.mrf.mxu0
        %v781 = vadd.f32 0.0, %v780
        %v782 = vpop.f32.mrf.mxu0
        %v783 = vadd.f32 0.0, %v782
        %784 = vmatmul.bf16.gmra.mxu0 %v695
        %v785 = vpop.f32.mrf.mxu0
        %v786 = vadd.f32 0.0, %v785
        %v787 = vpop.f32.mrf.mxu0
        %v788 = vadd.f32 0.0, %v787
        %789 = vdwg.mxu0
        %v822 = vunpack.c.l.b16 %v162
        %v823 = vunpack.c.l.b16 %v163
        %v824 = vunpack.c.l.b16 %v164
        %v825 = vunpack.c.l.b16 %v165
        %v826 = vunpack.c.l.b16 %v166
        %v827 = vunpack.c.l.b16 %v167
        %v828 = vunpack.c.l.b16 %v168
        %v829 = vunpack.c.l.b16 %v169
        %v830 = vunpack.c.l.b16 %v170
        %v831 = vunpack.c.l.b16 %v171
        %v832 = vunpack.c.l.b16 %v172
        %v833 = vunpack.c.l.b16 %v173
        %v834 = vunpack.c.l.b16 %v174
        %v835 = vunpack.c.l.b16 %v175
        %v836 = vunpack.c.l.b16 %v176
        %v837 = vunpack.c.l.b16 %v177
        %v838 = vunpack.c.l.b16 %v178
        %v839 = vunpack.c.l.b16 %v179
        %v840 = vunpack.c.l.b16 %v180
        %v841 = vunpack.c.l.b16 %v181
        %v842 = vunpack.c.l.b16 %v182
        %v843 = vunpack.c.l.b16 %v183
        %v844 = vunpack.c.l.b16 %v184
        %v845 = vunpack.c.l.b16 %v185
        %v846 = vunpack.c.l.b16 %v186
        %v847 = vunpack.c.l.b16 %v187
        %v848 = vunpack.c.l.b16 %v188
        %v849 = vunpack.c.l.b16 %v189
        %v850 = vunpack.c.l.b16 %v190
        %v851 = vunpack.c.l.b16 %v191
        %v852 = vunpack.c.l.b16 %v192
        %v853 = vunpack.c.l.b16 %v193
        %v854 = vpack.c.b16 %v823, %v822
        %v855 = vpack.c.b16 %v825, %v824
        %v856 = vpack.c.b16 %v827, %v826
        %v857 = vpack.c.b16 %v829, %v828
        %v858 = vpack.c.b16 %v831, %v830
        %v859 = vpack.c.b16 %v833, %v832
        %v860 = vpack.c.b16 %v835, %v834
        %v861 = vpack.c.b16 %v837, %v836
        %v862 = vpack.c.b16 %v839, %v838
        %v863 = vpack.c.b16 %v841, %v840
        %v864 = vpack.c.b16 %v843, %v842
        %v865 = vpack.c.b16 %v845, %v844
        %v866 = vpack.c.b16 %v847, %v846
        %v867 = vpack.c.b16 %v849, %v848
        %v868 = vpack.c.b16 %v851, %v850
        %v869 = vpack.c.b16 %v853, %v852
        %v871 = vsel %vm648, %v854, 0
        %v874 = vsel %vm648, %v855, 0
        %v877 = vsel %vm648, %v856, 0
        %v880 = vsel %vm648, %v857, 0
        %v883 = vsel %vm648, %v858, 0
        %v886 = vsel %vm648, %v859, 0
        %v889 = vsel %vm648, %v860, 0
        %v892 = vsel %vm648, %v861, 0
        %v895 = vsel %vm648, %v862, 0
        %v898 = vsel %vm648, %v863, 0
        %v901 = vsel %vm648, %v864, 0
        %v904 = vsel %vm648, %v865, 0
        %v907 = vsel %vm648, %v866, 0
        %v910 = vsel %vm648, %v867, 0
        %v913 = vsel %vm648, %v868, 0
        %v916 = vsel %vm648, %v869, 0
        %v919 = vsel %vm697, %v194, 0
        %921 = vmatpush.bf16.msra.mxu0 0
        %922 = vmatpush.bf16.msra.mxu0 0
        %923 = vmatpush.bf16.msra.mxu0 0
        %924 = vmatpush.bf16.msra.mxu0 0
        %925 = vmatpush.bf16.msra.mxu0 0
        %926 = vmatpush.bf16.msra.mxu0 0
        %927 = vmatpush.bf16.msra.mxu0 0
        %928 = vmatpush.bf16.msra.mxu0 %v919
        %929 = vmatmul.bf16.gmra.mxu0 %v871
        %v930 = vpop.f32.mrf.mxu0
        %v931 = vadd.f32 %v711, %v930
        %v932 = vpop.f32.mrf.mxu0
        %v933 = vadd.f32 %v713, %v932
        %934 = vmatmul.bf16.gmra.mxu0 %v874
        %v935 = vpop.f32.mrf.mxu0
        %v936 = vadd.f32 %v716, %v935
        %v937 = vpop.f32.mrf.mxu0
        %v938 = vadd.f32 %v718, %v937
        %939 = vmatmul.bf16.gmra.mxu0 %v877
        %v940 = vpop.f32.mrf.mxu0
        %v941 = vadd.f32 %v721, %v940
        %v942 = vpop.f32.mrf.mxu0
        %v943 = vadd.f32 %v723, %v942
        %944 = vmatmul.bf16.gmra.mxu0 %v880
        %v945 = vpop.f32.mrf.mxu0
        %v946 = vadd.f32 %v726, %v945
        %v947 = vpop.f32.mrf.mxu0
        %v948 = vadd.f32 %v728, %v947
        %949 = vmatmul.bf16.gmra.mxu0 %v883
        %v950 = vpop.f32.mrf.mxu0
        %v951 = vadd.f32 %v731, %v950
        %v952 = vpop.f32.mrf.mxu0
        %v953 = vadd.f32 %v733, %v952
        %954 = vmatmul.bf16.gmra.mxu0 %v886
        %v955 = vpop.f32.mrf.mxu0
        %v956 = vadd.f32 %v736, %v955
        %v957 = vpop.f32.mrf.mxu0
        %v958 = vadd.f32 %v738, %v957
        %959 = vmatmul.bf16.gmra.mxu0 %v889
        %v960 = vpop.f32.mrf.mxu0
        %v961 = vadd.f32 %v741, %v960
        %v962 = vpop.f32.mrf.mxu0
        %v963 = vadd.f32 %v743, %v962
        %964 = vmatmul.bf16.gmra.mxu0 %v892
        %v965 = vpop.f32.mrf.mxu0
        %v966 = vadd.f32 %v746, %v965
        %v967 = vpop.f32.mrf.mxu0
        %v968 = vadd.f32 %v748, %v967
        %969 = vmatmul.bf16.gmra.mxu0 %v895
        %v970 = vpop.f32.mrf.mxu0
        %v971 = vadd.f32 %v751, %v970
        %v972 = vpop.f32.mrf.mxu0
        %v973 = vadd.f32 %v753, %v972
        %974 = vmatmul.bf16.gmra.mxu0 %v898
        %v975 = vpop.f32.mrf.mxu0
        %v976 = vadd.f32 %v756, %v975
        %v977 = vpop.f32.mrf.mxu0
        %v978 = vadd.f32 %v758, %v977
        %979 = vmatmul.bf16.gmra.mxu0 %v901
        %v980 = vpop.f32.mrf.mxu0
        %v981 = vadd.f32 %v761, %v980
        %v982 = vpop.f32.mrf.mxu0
        %v983 = vadd.f32 %v763, %v982
        %984 = vmatmul.bf16.gmra.mxu0 %v904
        %v985 = vpop.f32.mrf.mxu0
        %v986 = vadd.f32 %v766, %v985
        %v987 = vpop.f32.mrf.mxu0
        %v988 = vadd.f32 %v768, %v987
        %989 = vmatmul.bf16.gmra.mxu0 %v907
        %v990 = vpop.f32.mrf.mxu0
        %v991 = vadd.f32 %v771, %v990
        %v992 = vpop.f32.mrf.mxu0
        %v993 = vadd.f32 %v773, %v992
        %994 = vmatmul.bf16.gmra.mxu0 %v910
        %v995 = vpop.f32.mrf.mxu0
        %v996 = vadd.f32 %v776, %v995
        %v997 = vpop.f32.mrf.mxu0
        %v998 = vadd.f32 %v778, %v997
        %999 = vmatmul.bf16.gmra.mxu0 %v913
        %v1000 = vpop.f32.mrf.mxu0
        %v1001 = vadd.f32 %v781, %v1000
        %v1002 = vpop.f32.mrf.mxu0
        %v1003 = vadd.f32 %v783, %v1002
        %1004 = vmatmul.bf16.gmra.mxu0 %v916
        %v1005 = vpop.f32.mrf.mxu0
        %v1006 = vadd.f32 %v786, %v1005
        %v1007 = vpop.f32.mrf.mxu0
        %v1008 = vadd.f32 %v788, %v1007
        %1009 = vdwg.mxu0
        %v1010 = vld [vmem:[%s161] sm:$0xe]
        %v1011 = vld [vmem:[%s161 + $0xc] sm:$0xe]
        %v1012 = vld [vmem:[%s161 + $0x18] sm:$0xe]
        %v1013 = vld [vmem:[%s161 + $0x24] sm:$0xe]
        %v1014 = vld [vmem:[%s161 + $0x30] sm:$0xe]
        %v1015 = vld [vmem:[%s161 + $0x3c] sm:$0xe]
        %v1016 = vld [vmem:[%s161 + $0x48] sm:$0xe]
        %v1017 = vld [vmem:[%s161 + $0x54] sm:$0xe]
        %v1018 = vld [vmem:[%s161 + $0x60] sm:$0xe]
        %v1019 = vld [vmem:[%s161 + $0x6c] sm:$0xe]
        %v1020 = vld [vmem:[%s161 + $0x78] sm:$0xe]
        %v1021 = vld [vmem:[%s161 + $0x84] sm:$0xe]
        %v1022 = vld [vmem:[%s161 + $0x90] sm:$0xe]
        %v1023 = vld [vmem:[%s161 + $0x9c] sm:$0xe]
        %v1024 = vld [vmem:[%s161 + $0xa8] sm:$0xe]
        %v1025 = vld [vmem:[%s161 + $0xb4] sm:$0xe]
        %vm1058 = vcmask 1042432
        %vm1059 = vcmask 1046532
        %vm1060 = vmor %vm1058, %vm1059
        %v1061 = vrot.slane %v1010, 5
        %v1062 = vrot.slane %v1061, 4
        %v1063 = vrot.slane %v163, 5
        %v1064 = vsel %vm1060, %v1062, %v1063
        %v1065 = vrot.slane %v1063, 4
        %v1066 = vrot.slane %v195, 5
        %v1067 = vsel %vm1060, %v1065, %v1066
        %v1068 = vrot.slane %v1011, 5
        %v1069 = vrot.slane %v1068, 4
        %v1070 = vrot.slane %v165, 5
        %v1071 = vsel %vm1060, %v1069, %v1070
        %v1072 = vrot.slane %v1070, 4
        %v1073 = vrot.slane %v196, 5
        %v1074 = vsel %vm1060, %v1072, %v1073
        %v1075 = vrot.slane %v1012, 5
        %v1076 = vrot.slane %v1075, 4
        %v1077 = vrot.slane %v167, 5
        %v1078 = vsel %vm1060, %v1076, %v1077
        %v1079 = vrot.slane %v1077, 4
        %v1080 = vrot.slane %v197, 5
        %v1081 = vsel %vm1060, %v1079, %v1080
        %v1082 = vrot.slane %v1013, 5
        %v1083 = vrot.slane %v1082, 4
        %v1084 = vrot.slane %v169, 5
        %v1085 = vsel %vm1060, %v1083, %v1084
        %v1086 = vrot.slane %v1084, 4
        %v1087 = vrot.slane %v198, 5
        %v1088 = vsel %vm1060, %v1086, %v1087
        %v1089 = vrot.slane %v1014, 5
        %v1090 = vrot.slane %v1089, 4
        %v1091 = vrot.slane %v171, 5
        %v1092 = vsel %vm1060, %v1090, %v1091
        %v1093 = vrot.slane %v1091, 4
        %v1094 = vrot.slane %v199, 5
        %v1095 = vsel %vm1060, %v1093, %v1094
        %v1096 = vrot.slane %v1015, 5
        %v1097 = vrot.slane %v1096, 4
        %v1098 = vrot.slane %v173, 5
        %v1099 = vsel %vm1060, %v1097, %v1098
        %v1100 = vrot.slane %v1098, 4
        %v1101 = vrot.slane %v200, 5
        %v1102 = vsel %vm1060, %v1100, %v1101
        %v1103 = vrot.slane %v1016, 5
        %v1104 = vrot.slane %v1103, 4
        %v1105 = vrot.slane %v175, 5
        %v1106 = vsel %vm1060, %v1104, %v1105
        %v1107 = vrot.slane %v1105, 4
        %v1108 = vrot.slane %v201, 5
        %v1109 = vsel %vm1060, %v1107, %v1108
        %v1110 = vrot.slane %v1017, 5
        %v1111 = vrot.slane %v1110, 4
        %v1112 = vrot.slane %v177, 5
        %v1113 = vsel %vm1060, %v1111, %v1112
        %v1114 = vrot.slane %v1112, 4
        %v1115 = vrot.slane %v202, 5
        %v1116 = vsel %vm1060, %v1114, %v1115
        %v1117 = vrot.slane %v1018, 5
        %v1118 = vrot.slane %v1117, 4
        %v1119 = vrot.slane %v179, 5
        %v1120 = vsel %vm1060, %v1118, %v1119
        %v1121 = vrot.slane %v1119, 4
        %v1122 = vrot.slane %v203, 5
        %v1123 = vsel %vm1060, %v1121, %v1122
        %v1124 = vrot.slane %v1019, 5
        %v1125 = vrot.slane %v1124, 4
        %v1126 = vrot.slane %v181, 5
        %v1127 = vsel %vm1060, %v1125, %v1126
        %v1128 = vrot.slane %v1126, 4
        %v1129 = vrot.slane %v204, 5
        %v1130 = vsel %vm1060, %v1128, %v1129
        %v1131 = vrot.slane %v1020, 5
        %v1132 = vrot.slane %v1131, 4
        %v1133 = vrot.slane %v183, 5
        %v1134 = vsel %vm1060, %v1132, %v1133
        %v1135 = vrot.slane %v1133, 4
        %v1136 = vrot.slane %v205, 5
        %v1137 = vsel %vm1060, %v1135, %v1136
        %v1138 = vrot.slane %v1021, 5
        %v1139 = vrot.slane %v1138, 4
        %v1140 = vrot.slane %v185, 5
        %v1141 = vsel %vm1060, %v1139, %v1140
        %v1142 = vrot.slane %v1140, 4
        %v1143 = vrot.slane %v206, 5
        %v1144 = vsel %vm1060, %v1142, %v1143
        %v1145 = vrot.slane %v1022, 5
        %v1146 = vrot.slane %v1145, 4
        %v1147 = vrot.slane %v187, 5
        %v1148 = vsel %vm1060, %v1146, %v1147
        %v1149 = vrot.slane %v1147, 4
        %v1150 = vrot.slane %v207, 5
        %v1151 = vsel %vm1060, %v1149, %v1150
        %v1152 = vrot.slane %v1023, 5
        %v1153 = vrot.slane %v1152, 4
        %v1154 = vrot.slane %v189, 5
        %v1155 = vsel %vm1060, %v1153, %v1154
        %v1156 = vrot.slane %v1154, 4
        %v1157 = vrot.slane %v208, 5
        %v1158 = vsel %vm1060, %v1156, %v1157
        %v1159 = vrot.slane %v1024, 5
        %v1160 = vrot.slane %v1159, 4
        %v1161 = vrot.slane %v191, 5
        %v1162 = vsel %vm1060, %v1160, %v1161
        %v1163 = vrot.slane %v1161, 4
        %v1164 = vrot.slane %v209, 5
        %v1165 = vsel %vm1060, %v1163, %v1164
        %v1166 = vrot.slane %v1025, 5
        %v1167 = vrot.slane %v1166, 4
        %v1168 = vrot.slane %v193, 5
        %v1169 = vsel %vm1060, %v1167, %v1168
        %v1170 = vrot.slane %v1168, 4
        %v1171 = vrot.slane %v210, 5
        %v1172 = vsel %vm1060, %v1170, %v1171
        %s1173 = scalar_lea.vmem %s1, 8
        %v1174 = vld [vmem:[%s1173] sm:$0xf]
        %v1175 = vunpack.c.l.b16 %v1064
        %v1176 = vunpack.c.l.b16 %v1067
        %v1177 = vunpack.c.l.b16 %v1071
        %v1178 = vunpack.c.l.b16 %v1074
        %v1179 = vunpack.c.l.b16 %v1078
        %v1180 = vunpack.c.l.b16 %v1081
        %v1181 = vunpack.c.l.b16 %v1085
        %v1182 = vunpack.c.l.b16 %v1088
        %v1183 = vunpack.c.l.b16 %v1092
        %v1184 = vunpack.c.l.b16 %v1095
        %v1185 = vunpack.c.l.b16 %v1099
        %v1186 = vunpack.c.l.b16 %v1102
        %v1187 = vunpack.c.l.b16 %v1106
        %v1188 = vunpack.c.l.b16 %v1109
        %v1189 = vunpack.c.l.b16 %v1113
        %v1190 = vunpack.c.l.b16 %v1116
        %v1191 = vunpack.c.l.b16 %v1120
        %v1192 = vunpack.c.l.b16 %v1123
        %v1193 = vunpack.c.l.b16 %v1127
        %v1194 = vunpack.c.l.b16 %v1130
        %v1195 = vunpack.c.l.b16 %v1134
        %v1196 = vunpack.c.l.b16 %v1137
        %v1197 = vunpack.c.l.b16 %v1141
        %v1198 = vunpack.c.l.b16 %v1144
        %v1199 = vunpack.c.l.b16 %v1148
        %v1200 = vunpack.c.l.b16 %v1151
        %v1201 = vunpack.c.l.b16 %v1155
        %v1202 = vunpack.c.l.b16 %v1158
        %v1203 = vunpack.c.l.b16 %v1162
        %v1204 = vunpack.c.l.b16 %v1165
        %v1205 = vunpack.c.l.b16 %v1169
        %v1206 = vunpack.c.l.b16 %v1172
        %v1207 = vpack.c.b16 %v1176, %v1175
        %v1208 = vpack.c.b16 %v1178, %v1177
        %v1209 = vpack.c.b16 %v1180, %v1179
        %v1210 = vpack.c.b16 %v1182, %v1181
        %v1211 = vpack.c.b16 %v1184, %v1183
        %v1212 = vpack.c.b16 %v1186, %v1185
        %v1213 = vpack.c.b16 %v1188, %v1187
        %v1214 = vpack.c.b16 %v1190, %v1189
        %v1215 = vpack.c.b16 %v1192, %v1191
        %v1216 = vpack.c.b16 %v1194, %v1193
        %v1217 = vpack.c.b16 %v1196, %v1195
        %v1218 = vpack.c.b16 %v1198, %v1197
        %v1219 = vpack.c.b16 %v1200, %v1199
        %v1220 = vpack.c.b16 %v1202, %v1201
        %v1221 = vpack.c.b16 %v1204, %v1203
        %v1222 = vpack.c.b16 %v1206, %v1205
        %v1224 = vsel %vm648, %v1207, 0
        %v1227 = vsel %vm648, %v1208, 0
        %v1230 = vsel %vm648, %v1209, 0
        %v1233 = vsel %vm648, %v1210, 0
        %v1236 = vsel %vm648, %v1211, 0
        %v1239 = vsel %vm648, %v1212, 0
        %v1242 = vsel %vm648, %v1213, 0
        %v1245 = vsel %vm648, %v1214, 0
        %v1248 = vsel %vm648, %v1215, 0
        %v1251 = vsel %vm648, %v1216, 0
        %v1254 = vsel %vm648, %v1217, 0
        %v1257 = vsel %vm648, %v1218, 0
        %v1260 = vsel %vm648, %v1219, 0
        %v1263 = vsel %vm648, %v1220, 0
        %v1266 = vsel %vm648, %v1221, 0
        %v1269 = vsel %vm648, %v1222, 0
        %v1272 = vsel %vm697, %v1174, 0
        %1274 = vmatpush.bf16.msra.mxu0 0
        %1275 = vmatpush.bf16.msra.mxu0 0
        %1276 = vmatpush.bf16.msra.mxu0 0
        %1277 = vmatpush.bf16.msra.mxu0 0
        %1278 = vmatpush.bf16.msra.mxu0 0
        %1279 = vmatpush.bf16.msra.mxu0 0
        %1280 = vmatpush.bf16.msra.mxu0 0
        %1281 = vmatpush.bf16.msra.mxu0 %v1272
        %1282 = vmatmul.bf16.gmra.mxu0 %v1224
        %v1283 = vpop.f32.mrf.mxu0
        %v1284 = vadd.f32 0.0, %v1283
        %v1285 = vpop.f32.mrf.mxu0
        %v1286 = vadd.f32 0.0, %v1285
        %1287 = vmatmul.bf16.gmra.mxu0 %v1227
        %v1288 = vpop.f32.mrf.mxu0
        %v1289 = vadd.f32 0.0, %v1288
        %v1290 = vpop.f32.mrf.mxu0
        %v1291 = vadd.f32 0.0, %v1290
        %1292 = vmatmul.bf16.gmra.mxu0 %v1230
        %v1293 = vpop.f32.mrf.mxu0
        %v1294 = vadd.f32 0.0, %v1293
        %v1295 = vpop.f32.mrf.mxu0
        %v1296 = vadd.f32 0.0, %v1295
        %1297 = vmatmul.bf16.gmra.mxu0 %v1233
        %v1298 = vpop.f32.mrf.mxu0
        %v1299 = vadd.f32 0.0, %v1298
        %v1300 = vpop.f32.mrf.mxu0
        %v1301 = vadd.f32 0.0, %v1300
        %1302 = vmatmul.bf16.gmra.mxu0 %v1236
        %v1303 = vpop.f32.mrf.mxu0
        %v1304 = vadd.f32 0.0, %v1303
        %v1305 = vpop.f32.mrf.mxu0
        %v1306 = vadd.f32 0.0, %v1305
        %1307 = vmatmul.bf16.gmra.mxu0 %v1239
        %v1308 = vpop.f32.mrf.mxu0
        %v1309 = vadd.f32 0.0, %v1308
        %v1310 = vpop.f32.mrf.mxu0
        %v1311 = vadd.f32 0.0, %v1310
        %1312 = vmatmul.bf16.gmra.mxu0 %v1242
        %v1313 = vpop.f32.mrf.mxu0
        %v1314 = vadd.f32 0.0, %v1313
        %v1315 = vpop.f32.mrf.mxu0
        %v1316 = vadd.f32 0.0, %v1315
        %1317 = vmatmul.bf16.gmra.mxu0 %v1245
        %v1318 = vpop.f32.mrf.mxu0
        %v1319 = vadd.f32 0.0, %v1318
        %v1320 = vpop.f32.mrf.mxu0
        %v1321 = vadd.f32 0.0, %v1320
        %1322 = vmatmul.bf16.gmra.mxu0 %v1248
        %v1323 = vpop.f32.mrf.mxu0
        %v1324 = vadd.f32 0.0, %v1323
        %v1325 = vpop.f32.mrf.mxu0
        %v1326 = vadd.f32 0.0, %v1325
        %1327 = vmatmul.bf16.gmra.mxu0 %v1251
        %v1328 = vpop.f32.mrf.mxu0
        %v1329 = vadd.f32 0.0, %v1328
        %v1330 = vpop.f32.mrf.mxu0
        %v1331 = vadd.f32 0.0, %v1330
        %1332 = vmatmul.bf16.gmra.mxu0 %v1254
        %v1333 = vpop.f32.mrf.mxu0
        %v1334 = vadd.f32 0.0, %v1333
        %v1335 = vpop.f32.mrf.mxu0
        %v1336 = vadd.f32 0.0, %v1335
        %1337 = vmatmul.bf16.gmra.mxu0 %v1257
        %v1338 = vpop.f32.mrf.mxu0
        %v1339 = vadd.f32 0.0, %v1338
        %v1340 = vpop.f32.mrf.mxu0
        %v1341 = vadd.f32 0.0, %v1340
        %1342 = vmatmul.bf16.gmra.mxu0 %v1260
        %v1343 = vpop.f32.mrf.mxu0
        %v1344 = vadd.f32 0.0, %v1343
        %v1345 = vpop.f32.mrf.mxu0
        %v1346 = vadd.f32 0.0, %v1345
        %1347 = vmatmul.bf16.gmra.mxu0 %v1263
        %v1348 = vpop.f32.mrf.mxu0
        %v1349 = vadd.f32 0.0, %v1348
        %v1350 = vpop.f32.mrf.mxu0
        %v1351 = vadd.f32 0.0, %v1350
        %1352 = vmatmul.bf16.gmra.mxu0 %v1266
        %v1353 = vpop.f32.mrf.mxu0
        %v1354 = vadd.f32 0.0, %v1353
        %v1355 = vpop.f32.mrf.mxu0
        %v1356 = vadd.f32 0.0, %v1355
        %1357 = vmatmul.bf16.gmra.mxu0 %v1269
        %v1358 = vpop.f32.mrf.mxu0
        %v1359 = vadd.f32 0.0, %v1358
        %v1360 = vpop.f32.mrf.mxu0
        %v1361 = vadd.f32 0.0, %v1360
        %1362 = vdwg.mxu0
        %v1363 = vadd.f32 %v931, %v1284
        %v1364 = vadd.f32 %v933, %v1286
        %v1365 = vadd.f32 %v936, %v1289
        %v1366 = vadd.f32 %v938, %v1291
        %v1367 = vadd.f32 %v941, %v1294
        %v1368 = vadd.f32 %v943, %v1296
        %v1369 = vadd.f32 %v946, %v1299
        %v1370 = vadd.f32 %v948, %v1301
        %v1371 = vadd.f32 %v951, %v1304
        %v1372 = vadd.f32 %v953, %v1306
        %v1373 = vadd.f32 %v956, %v1309
        %v1374 = vadd.f32 %v958, %v1311
        %v1375 = vadd.f32 %v961, %v1314
        %v1376 = vadd.f32 %v963, %v1316
        %v1377 = vadd.f32 %v966, %v1319
        %v1378 = vadd.f32 %v968, %v1321
        %v1379 = vadd.f32 %v971, %v1324
        %v1380 = vadd.f32 %v973, %v1326
        %v1381 = vadd.f32 %v976, %v1329
        %v1382 = vadd.f32 %v978, %v1331
        %v1383 = vadd.f32 %v981, %v1334
        %v1384 = vadd.f32 %v983, %v1336
        %v1385 = vadd.f32 %v986, %v1339
        %v1386 = vadd.f32 %v988, %v1341
        %v1387 = vadd.f32 %v991, %v1344
        %v1388 = vadd.f32 %v993, %v1346
        %v1389 = vadd.f32 %v996, %v1349
        %v1390 = vadd.f32 %v998, %v1351
        %v1391 = vadd.f32 %v1001, %v1354
        %v1392 = vadd.f32 %v1003, %v1356
        %v1393 = vadd.f32 %v1006, %v1359
        %v1394 = vadd.f32 %v1008, %v1361
        %s1395 = sadd.s32 %s158, 1
        %s1396 = smul.u32 %s1395, 3
        %s1397 = smul.addr %s1396, 4
        %s1398 = scalar_lea.vmem %s155, %s1397
        %v1399 = vld [vmem:[%s1398] sm:$0xf]
        %v1400 = vld [vmem:[%s1398 + $0x4] sm:$0xf]
        %v1401 = vld [vmem:[%s1398 + $0xc] sm:$0xf]
        %v1402 = vld [vmem:[%s1398 + $0x10] sm:$0xf]
        %v1403 = vld [vmem:[%s1398 + $0x18] sm:$0xf]
        %v1404 = vld [vmem:[%s1398 + $0x1c] sm:$0xf]
        %v1405 = vld [vmem:[%s1398 + $0x24] sm:$0xf]
        %v1406 = vld [vmem:[%s1398 + $0x28] sm:$0xf]
        %v1407 = vld [vmem:[%s1398 + $0x30] sm:$0xf]
        %v1408 = vld [vmem:[%s1398 + $0x34] sm:$0xf]
        %v1409 = vld [vmem:[%s1398 + $0x3c] sm:$0xf]
        %v1410 = vld [vmem:[%s1398 + $0x40] sm:$0xf]
        %v1411 = vld [vmem:[%s1398 + $0x48] sm:$0xf]
        %v1412 = vld [vmem:[%s1398 + $0x4c] sm:$0xf]
        %v1413 = vld [vmem:[%s1398 + $0x54] sm:$0xf]
        %v1414 = vld [vmem:[%s1398 + $0x58] sm:$0xf]
        %v1415 = vld [vmem:[%s1398 + $0x60] sm:$0xf]
        %v1416 = vld [vmem:[%s1398 + $0x64] sm:$0xf]
        %v1417 = vld [vmem:[%s1398 + $0x6c] sm:$0xf]
        %v1418 = vld [vmem:[%s1398 + $0x70] sm:$0xf]
        %v1419 = vld [vmem:[%s1398 + $0x78] sm:$0xf]
        %v1420 = vld [vmem:[%s1398 + $0x7c] sm:$0xf]
        %v1421 = vld [vmem:[%s1398 + $0x84] sm:$0xf]
        %v1422 = vld [vmem:[%s1398 + $0x88] sm:$0xf]
        %v1423 = vld [vmem:[%s1398 + $0x90] sm:$0xf]
        %v1424 = vld [vmem:[%s1398 + $0x94] sm:$0xf]
        %v1425 = vld [vmem:[%s1398 + $0x9c] sm:$0xf]
        %v1426 = vld [vmem:[%s1398 + $0xa0] sm:$0xf]
        %v1427 = vld [vmem:[%s1398 + $0xa8] sm:$0xf]
        %v1428 = vld [vmem:[%s1398 + $0xac] sm:$0xf]
        %v1429 = vld [vmem:[%s1398 + $0xb4] sm:$0xf]
        %v1430 = vld [vmem:[%s1398 + $0xb8] sm:$0xf]
        %s1431 = scalar_lea.vmem %s1, 12
        %v1432 = vld [vmem:[%s1431] sm:$0xf]
        %v1465 = vunpack.c.l.b16 %v1399
        %v1466 = vunpack.c.l.b16 %v1400
        %v1467 = vunpack.c.l.b16 %v1401
        %v1468 = vunpack.c.l.b16 %v1402
        %v1469 = vunpack.c.l.b16 %v1403
        %v1470 = vunpack.c.l.b16 %v1404
        %v1471 = vunpack.c.l.b16 %v1405
        %v1472 = vunpack.c.l.b16 %v1406
        %v1473 = vunpack.c.l.b16 %v1407
        %v1474 = vunpack.c.l.b16 %v1408
        %v1475 = vunpack.c.l.b16 %v1409
        %v1476 = vunpack.c.l.b16 %v1410
        %v1477 = vunpack.c.l.b16 %v1411
        %v1478 = vunpack.c.l.b16 %v1412
        %v1479 = vunpack.c.l.b16 %v1413
        %v1480 = vunpack.c.l.b16 %v1414
        %v1481 = vunpack.c.l.b16 %v1415
        %v1482 = vunpack.c.l.b16 %v1416
        %v1483 = vunpack.c.l.b16 %v1417
        %v1484 = vunpack.c.l.b16 %v1418
        %v1485 = vunpack.c.l.b16 %v1419
        %v1486 = vunpack.c.l.b16 %v1420
        %v1487 = vunpack.c.l.b16 %v1421
        %v1488 = vunpack.c.l.b16 %v1422
        %v1489 = vunpack.c.l.b16 %v1423
        %v1490 = vunpack.c.l.b16 %v1424
        %v1491 = vunpack.c.l.b16 %v1425
        %v1492 = vunpack.c.l.b16 %v1426
        %v1493 = vunpack.c.l.b16 %v1427
        %v1494 = vunpack.c.l.b16 %v1428
        %v1495 = vunpack.c.l.b16 %v1429
        %v1496 = vunpack.c.l.b16 %v1430
        %v1497 = vpack.c.b16 %v1466, %v1465
        %v1498 = vpack.c.b16 %v1468, %v1467
        %v1499 = vpack.c.b16 %v1470, %v1469
        %v1500 = vpack.c.b16 %v1472, %v1471
        %v1501 = vpack.c.b16 %v1474, %v1473
        %v1502 = vpack.c.b16 %v1476, %v1475
        %v1503 = vpack.c.b16 %v1478, %v1477
        %v1504 = vpack.c.b16 %v1480, %v1479
        %v1505 = vpack.c.b16 %v1482, %v1481
        %v1506 = vpack.c.b16 %v1484, %v1483
        %v1507 = vpack.c.b16 %v1486, %v1485
        %v1508 = vpack.c.b16 %v1488, %v1487
        %v1509 = vpack.c.b16 %v1490, %v1489
        %v1510 = vpack.c.b16 %v1492, %v1491
        %v1511 = vpack.c.b16 %v1494, %v1493
        %v1512 = vpack.c.b16 %v1496, %v1495
        %v1514 = vsel %vm648, %v1497, 0
        %v1517 = vsel %vm648, %v1498, 0
        %v1520 = vsel %vm648, %v1499, 0
        %v1523 = vsel %vm648, %v1500, 0
        %v1526 = vsel %vm648, %v1501, 0
        %v1529 = vsel %vm648, %v1502, 0
        %v1532 = vsel %vm648, %v1503, 0
        %v1535 = vsel %vm648, %v1504, 0
        %v1538 = vsel %vm648, %v1505, 0
        %v1541 = vsel %vm648, %v1506, 0
        %v1544 = vsel %vm648, %v1507, 0
        %v1547 = vsel %vm648, %v1508, 0
        %v1550 = vsel %vm648, %v1509, 0
        %v1553 = vsel %vm648, %v1510, 0
        %v1556 = vsel %vm648, %v1511, 0
        %v1559 = vsel %vm648, %v1512, 0
        %v1562 = vsel %vm697, %v1432, 0
        %1564 = vmatpush.bf16.msra.mxu0 0
        %1565 = vmatpush.bf16.msra.mxu0 0
        %1566 = vmatpush.bf16.msra.mxu0 0
        %1567 = vmatpush.bf16.msra.mxu0 0
        %1568 = vmatpush.bf16.msra.mxu0 0
        %1569 = vmatpush.bf16.msra.mxu0 0
        %1570 = vmatpush.bf16.msra.mxu0 0
        %1571 = vmatpush.bf16.msra.mxu0 %v1562
        %1572 = vmatmul.bf16.gmra.mxu0 %v1514
        %v1573 = vpop.f32.mrf.mxu0
        %v1574 = vadd.f32 0.0, %v1573
        %v1575 = vpop.f32.mrf.mxu0
        %v1576 = vadd.f32 0.0, %v1575
        %1577 = vmatmul.bf16.gmra.mxu0 %v1517
        %v1578 = vpop.f32.mrf.mxu0
        %v1579 = vadd.f32 0.0, %v1578
        %v1580 = vpop.f32.mrf.mxu0
        %v1581 = vadd.f32 0.0, %v1580
        %1582 = vmatmul.bf16.gmra.mxu0 %v1520
        %v1583 = vpop.f32.mrf.mxu0
        %v1584 = vadd.f32 0.0, %v1583
        %v1585 = vpop.f32.mrf.mxu0
        %v1586 = vadd.f32 0.0, %v1585
        %1587 = vmatmul.bf16.gmra.mxu0 %v1523
        %v1588 = vpop.f32.mrf.mxu0
        %v1589 = vadd.f32 0.0, %v1588
        %v1590 = vpop.f32.mrf.mxu0
        %v1591 = vadd.f32 0.0, %v1590
        %1592 = vmatmul.bf16.gmra.mxu0 %v1526
        %v1593 = vpop.f32.mrf.mxu0
        %v1594 = vadd.f32 0.0, %v1593
        %v1595 = vpop.f32.mrf.mxu0
        %v1596 = vadd.f32 0.0, %v1595
        %1597 = vmatmul.bf16.gmra.mxu0 %v1529
        %v1598 = vpop.f32.mrf.mxu0
        %v1599 = vadd.f32 0.0, %v1598
        %v1600 = vpop.f32.mrf.mxu0
        %v1601 = vadd.f32 0.0, %v1600
        %1602 = vmatmul.bf16.gmra.mxu0 %v1532
        %v1603 = vpop.f32.mrf.mxu0
        %v1604 = vadd.f32 0.0, %v1603
        %v1605 = vpop.f32.mrf.mxu0
        %v1606 = vadd.f32 0.0, %v1605
        %1607 = vmatmul.bf16.gmra.mxu0 %v1535
        %v1608 = vpop.f32.mrf.mxu0
        %v1609 = vadd.f32 0.0, %v1608
        %v1610 = vpop.f32.mrf.mxu0
        %v1611 = vadd.f32 0.0, %v1610
        %1612 = vmatmul.bf16.gmra.mxu0 %v1538
        %v1613 = vpop.f32.mrf.mxu0
        %v1614 = vadd.f32 0.0, %v1613
        %v1615 = vpop.f32.mrf.mxu0
        %v1616 = vadd.f32 0.0, %v1615
        %1617 = vmatmul.bf16.gmra.mxu0 %v1541
        %v1618 = vpop.f32.mrf.mxu0
        %v1619 = vadd.f32 0.0, %v1618
        %v1620 = vpop.f32.mrf.mxu0
        %v1621 = vadd.f32 0.0, %v1620
        %1622 = vmatmul.bf16.gmra.mxu0 %v1544
        %v1623 = vpop.f32.mrf.mxu0
        %v1624 = vadd.f32 0.0, %v1623
        %v1625 = vpop.f32.mrf.mxu0
        %v1626 = vadd.f32 0.0, %v1625
        %1627 = vmatmul.bf16.gmra.mxu0 %v1547
        %v1628 = vpop.f32.mrf.mxu0
        %v1629 = vadd.f32 0.0, %v1628
        %v1630 = vpop.f32.mrf.mxu0
        %v1631 = vadd.f32 0.0, %v1630
        %1632 = vmatmul.bf16.gmra.mxu0 %v1550
        %v1633 = vpop.f32.mrf.mxu0
        %v1634 = vadd.f32 0.0, %v1633
        %v1635 = vpop.f32.mrf.mxu0
        %v1636 = vadd.f32 0.0, %v1635
        %1637 = vmatmul.bf16.gmra.mxu0 %v1553
        %v1638 = vpop.f32.mrf.mxu0
        %v1639 = vadd.f32 0.0, %v1638
        %v1640 = vpop.f32.mrf.mxu0
        %v1641 = vadd.f32 0.0, %v1640
        %1642 = vmatmul.bf16.gmra.mxu0 %v1556
        %v1643 = vpop.f32.mrf.mxu0
        %v1644 = vadd.f32 0.0, %v1643
        %v1645 = vpop.f32.mrf.mxu0
        %v1646 = vadd.f32 0.0, %v1645
        %1647 = vmatmul.bf16.gmra.mxu0 %v1559
        %v1648 = vpop.f32.mrf.mxu0
        %v1649 = vadd.f32 0.0, %v1648
        %v1650 = vpop.f32.mrf.mxu0
        %v1651 = vadd.f32 0.0, %v1650
        %1652 = vdwg.mxu0
        %v1653 = vadd.f32 %v1363, %v1574
        %v1654 = vadd.f32 %v1364, %v1576
        %v1655 = vadd.f32 %v1365, %v1579
        %v1656 = vadd.f32 %v1366, %v1581
        %v1657 = vadd.f32 %v1367, %v1584
        %v1658 = vadd.f32 %v1368, %v1586
        %v1659 = vadd.f32 %v1369, %v1589
        %v1660 = vadd.f32 %v1370, %v1591
        %v1661 = vadd.f32 %v1371, %v1594
        %v1662 = vadd.f32 %v1372, %v1596
        %v1663 = vadd.f32 %v1373, %v1599
        %v1664 = vadd.f32 %v1374, %v1601
        %v1665 = vadd.f32 %v1375, %v1604
        %v1666 = vadd.f32 %v1376, %v1606
        %v1667 = vadd.f32 %v1377, %v1609
        %v1668 = vadd.f32 %v1378, %v1611
        %v1669 = vadd.f32 %v1379, %v1614
        %v1670 = vadd.f32 %v1380, %v1616
        %v1671 = vadd.f32 %v1381, %v1619
        %v1672 = vadd.f32 %v1382, %v1621
        %v1673 = vadd.f32 %v1383, %v1624
        %v1674 = vadd.f32 %v1384, %v1626
        %v1675 = vadd.f32 %v1385, %v1629
        %v1676 = vadd.f32 %v1386, %v1631
        %v1677 = vadd.f32 %v1387, %v1634
        %v1678 = vadd.f32 %v1388, %v1636
        %v1679 = vadd.f32 %v1389, %v1639
        %v1680 = vadd.f32 %v1390, %v1641
        %v1681 = vadd.f32 %v1391, %v1644
        %v1682 = vadd.f32 %v1392, %v1646
        %v1683 = vadd.f32 %v1393, %v1649
        %v1684 = vadd.f32 %v1394, %v1651
        %v1685 = vld [vmem:[%s1398] sm:$0xf]
        %v1686 = vld [vmem:[%s1398 + $0x4] sm:$0xf]
        %v1687 = vld [vmem:[%s1398 + $0x8] sm:$0x1]
        %v1688 = vld [vmem:[%s1398 + $0xc] sm:$0xf]
        %v1689 = vld [vmem:[%s1398 + $0x10] sm:$0xf]
        %v1690 = vld [vmem:[%s1398 + $0x14] sm:$0x1]
        %v1691 = vld [vmem:[%s1398 + $0x18] sm:$0xf]
        %v1692 = vld [vmem:[%s1398 + $0x1c] sm:$0xf]
        %v1693 = vld [vmem:[%s1398 + $0x20] sm:$0x1]
        %v1694 = vld [vmem:[%s1398 + $0x24] sm:$0xf]
        %v1695 = vld [vmem:[%s1398 + $0x28] sm:$0xf]
        %v1696 = vld [vmem:[%s1398 + $0x2c] sm:$0x1]
        %v1697 = vld [vmem:[%s1398 + $0x30] sm:$0xf]
        %v1698 = vld [vmem:[%s1398 + $0x34] sm:$0xf]
        %v1699 = vld [vmem:[%s1398 + $0x38] sm:$0x1]
        %v1700 = vld [vmem:[%s1398 + $0x3c] sm:$0xf]
        %v1701 = vld [vmem:[%s1398 + $0x40] sm:$0xf]
        %v1702 = vld [vmem:[%s1398 + $0x44] sm:$0x1]
        %v1703 = vld [vmem:[%s1398 + $0x48] sm:$0xf]
        %v1704 = vld [vmem:[%s1398 + $0x4c] sm:$0xf]
        %v1705 = vld [vmem:[%s1398 + $0x50] sm:$0x1]
        %v1706 = vld [vmem:[%s1398 + $0x54] sm:$0xf]
        %v1707 = vld [vmem:[%s1398 + $0x58] sm:$0xf]
        %v1708 = vld [vmem:[%s1398 + $0x5c] sm:$0x1]
        %v1709 = vld [vmem:[%s1398 + $0x60] sm:$0xf]
        %v1710 = vld [vmem:[%s1398 + $0x64] sm:$0xf]
        %v1711 = vld [vmem:[%s1398 + $0x68] sm:$0x1]
        %v1712 = vld [vmem:[%s1398 + $0x6c] sm:$0xf]
        %v1713 = vld [vmem:[%s1398 + $0x70] sm:$0xf]
        %v1714 = vld [vmem:[%s1398 + $0x74] sm:$0x1]
        %v1715 = vld [vmem:[%s1398 + $0x78] sm:$0xf]
        %v1716 = vld [vmem:[%s1398 + $0x7c] sm:$0xf]
        %v1717 = vld [vmem:[%s1398 + $0x80] sm:$0x1]
        %v1718 = vld [vmem:[%s1398 + $0x84] sm:$0xf]
        %v1719 = vld [vmem:[%s1398 + $0x88] sm:$0xf]
        %v1720 = vld [vmem:[%s1398 + $0x8c] sm:$0x1]
        %v1721 = vld [vmem:[%s1398 + $0x90] sm:$0xf]
        %v1722 = vld [vmem:[%s1398 + $0x94] sm:$0xf]
        %v1723 = vld [vmem:[%s1398 + $0x98] sm:$0x1]
        %v1724 = vld [vmem:[%s1398 + $0x9c] sm:$0xf]
        %v1725 = vld [vmem:[%s1398 + $0xa0] sm:$0xf]
        %v1726 = vld [vmem:[%s1398 + $0xa4] sm:$0x1]
        %v1727 = vld [vmem:[%s1398 + $0xa8] sm:$0xf]
        %v1728 = vld [vmem:[%s1398 + $0xac] sm:$0xf]
        %v1729 = vld [vmem:[%s1398 + $0xb0] sm:$0x1]
        %v1730 = vld [vmem:[%s1398 + $0xb4] sm:$0xf]
        %v1731 = vld [vmem:[%s1398 + $0xb8] sm:$0xf]
        %v1732 = vld [vmem:[%s1398 + $0xbc] sm:$0x1]
        %v1734 = vshrl.u32 %v1685, 16
        %v1736 = vrot.slane %v1734, 4
        %v1737 = vshll.u32 %v1685, 16
        %v1739 = vrot.slane %v1737, 5
        %v1740 = vor.u32 %v1736, %v1739
        %v1741 = vrot.slane %v1740, 4
        %v1743 = vshll.u32 %v1686, 16
        %v1745 = vrot.slane %v1743, 5
        %v1746 = vsel %vm213, %v1741, %v1745
        %v1747 = vshrl.u32 %v1686, 16
        %v1749 = vrot.slane %v1747, 4
        %v1750 = vor.u32 %v1749, %v1745
        %v1751 = vrot.slane %v1750, 4
        %v1753 = vshll.u32 %v1687, 16
        %v1755 = vrot.slane %v1753, 5
        %v1756 = vsel %vm213, %v1751, %v1755
        %v1758 = vshrl.u32 %v1688, 16
        %v1760 = vrot.slane %v1758, 4
        %v1761 = vshll.u32 %v1688, 16
        %v1763 = vrot.slane %v1761, 5
        %v1764 = vor.u32 %v1760, %v1763
        %v1765 = vrot.slane %v1764, 4
        %v1767 = vshll.u32 %v1689, 16
        %v1769 = vrot.slane %v1767, 5
        %v1770 = vsel %vm213, %v1765, %v1769
        %v1771 = vshrl.u32 %v1689, 16
        %v1773 = vrot.slane %v1771, 4
        %v1774 = vor.u32 %v1773, %v1769
        %v1775 = vrot.slane %v1774, 4
        %v1777 = vshll.u32 %v1690, 16
        %v1779 = vrot.slane %v1777, 5
        %v1780 = vsel %vm213, %v1775, %v1779
        %v1782 = vshrl.u32 %v1691, 16
        %v1784 = vrot.slane %v1782, 4
        %v1785 = vshll.u32 %v1691, 16
        %v1787 = vrot.slane %v1785, 5
        %v1788 = vor.u32 %v1784, %v1787
        %v1789 = vrot.slane %v1788, 4
        %v1791 = vshll.u32 %v1692, 16
        %v1793 = vrot.slane %v1791, 5
        %v1794 = vsel %vm213, %v1789, %v1793
        %v1795 = vshrl.u32 %v1692, 16
        %v1797 = vrot.slane %v1795, 4
        %v1798 = vor.u32 %v1797, %v1793
        %v1799 = vrot.slane %v1798, 4
        %v1801 = vshll.u32 %v1693, 16
        %v1803 = vrot.slane %v1801, 5
        %v1804 = vsel %vm213, %v1799, %v1803
        %v1806 = vshrl.u32 %v1694, 16
        %v1808 = vrot.slane %v1806, 4
        %v1809 = vshll.u32 %v1694, 16
        %v1811 = vrot.slane %v1809, 5
        %v1812 = vor.u32 %v1808, %v1811
        %v1813 = vrot.slane %v1812, 4
        %v1815 = vshll.u32 %v1695, 16
        %v1817 = vrot.slane %v1815, 5
        %v1818 = vsel %vm213, %v1813, %v1817
        %v1819 = vshrl.u32 %v1695, 16
        %v1821 = vrot.slane %v1819, 4
        %v1822 = vor.u32 %v1821, %v1817
        %v1823 = vrot.slane %v1822, 4
        %v1825 = vshll.u32 %v1696, 16
        %v1827 = vrot.slane %v1825, 5
        %v1828 = vsel %vm213, %v1823, %v1827
        %v1830 = vshrl.u32 %v1697, 16
        %v1832 = vrot.slane %v1830, 4
        %v1833 = vshll.u32 %v1697, 16
        %v1835 = vrot.slane %v1833, 5
        %v1836 = vor.u32 %v1832, %v1835
        %v1837 = vrot.slane %v1836, 4
        %v1839 = vshll.u32 %v1698, 16
        %v1841 = vrot.slane %v1839, 5
        %v1842 = vsel %vm213, %v1837, %v1841
        %v1843 = vshrl.u32 %v1698, 16
        %v1845 = vrot.slane %v1843, 4
        %v1846 = vor.u32 %v1845, %v1841
        %v1847 = vrot.slane %v1846, 4
        %v1849 = vshll.u32 %v1699, 16
        %v1851 = vrot.slane %v1849, 5
        %v1852 = vsel %vm213, %v1847, %v1851
        %v1854 = vshrl.u32 %v1700, 16
        %v1856 = vrot.slane %v1854, 4
        %v1857 = vshll.u32 %v1700, 16
        %v1859 = vrot.slane %v1857, 5
        %v1860 = vor.u32 %v1856, %v1859
        %v1861 = vrot.slane %v1860, 4
        %v1863 = vshll.u32 %v1701, 16
        %v1865 = vrot.slane %v1863, 5
        %v1866 = vsel %vm213, %v1861, %v1865
        %v1867 = vshrl.u32 %v1701, 16
        %v1869 = vrot.slane %v1867, 4
        %v1870 = vor.u32 %v1869, %v1865
        %v1871 = vrot.slane %v1870, 4
        %v1873 = vshll.u32 %v1702, 16
        %v1875 = vrot.slane %v1873, 5
        %v1876 = vsel %vm213, %v1871, %v1875
        %v1878 = vshrl.u32 %v1703, 16
        %v1880 = vrot.slane %v1878, 4
        %v1881 = vshll.u32 %v1703, 16
        %v1883 = vrot.slane %v1881, 5
        %v1884 = vor.u32 %v1880, %v1883
        %v1885 = vrot.slane %v1884, 4
        %v1887 = vshll.u32 %v1704, 16
        %v1889 = vrot.slane %v1887, 5
        %v1890 = vsel %vm213, %v1885, %v1889
        %v1891 = vshrl.u32 %v1704, 16
        %v1893 = vrot.slane %v1891, 4
        %v1894 = vor.u32 %v1893, %v1889
        %v1895 = vrot.slane %v1894, 4
        %v1897 = vshll.u32 %v1705, 16
        %v1899 = vrot.slane %v1897, 5
        %v1900 = vsel %vm213, %v1895, %v1899
        %v1902 = vshrl.u32 %v1706, 16
        %v1904 = vrot.slane %v1902, 4
        %v1905 = vshll.u32 %v1706, 16
        %v1907 = vrot.slane %v1905, 5
        %v1908 = vor.u32 %v1904, %v1907
        %v1909 = vrot.slane %v1908, 4
        %v1911 = vshll.u32 %v1707, 16
        %v1913 = vrot.slane %v1911, 5
        %v1914 = vsel %vm213, %v1909, %v1913
        %v1915 = vshrl.u32 %v1707, 16
        %v1917 = vrot.slane %v1915, 4
        %v1918 = vor.u32 %v1917, %v1913
        %v1919 = vrot.slane %v1918, 4
        %v1921 = vshll.u32 %v1708, 16
        %v1923 = vrot.slane %v1921, 5
        %v1924 = vsel %vm213, %v1919, %v1923
        %v1926 = vshrl.u32 %v1709, 16
        %v1928 = vrot.slane %v1926, 4
        %v1929 = vshll.u32 %v1709, 16
        %v1931 = vrot.slane %v1929, 5
        %v1932 = vor.u32 %v1928, %v1931
        %v1933 = vrot.slane %v1932, 4
        %v1935 = vshll.u32 %v1710, 16
        %v1937 = vrot.slane %v1935, 5
        %v1938 = vsel %vm213, %v1933, %v1937
        %v1939 = vshrl.u32 %v1710, 16
        %v1941 = vrot.slane %v1939, 4
        %v1942 = vor.u32 %v1941, %v1937
        %v1943 = vrot.slane %v1942, 4
        %v1945 = vshll.u32 %v1711, 16
        %v1947 = vrot.slane %v1945, 5
        %v1948 = vsel %vm213, %v1943, %v1947
        %v1950 = vshrl.u32 %v1712, 16
        %v1952 = vrot.slane %v1950, 4
        %v1953 = vshll.u32 %v1712, 16
        %v1955 = vrot.slane %v1953, 5
        %v1956 = vor.u32 %v1952, %v1955
        %v1957 = vrot.slane %v1956, 4
        %v1959 = vshll.u32 %v1713, 16
        %v1961 = vrot.slane %v1959, 5
        %v1962 = vsel %vm213, %v1957, %v1961
        %v1963 = vshrl.u32 %v1713, 16
        %v1965 = vrot.slane %v1963, 4
        %v1966 = vor.u32 %v1965, %v1961
        %v1967 = vrot.slane %v1966, 4
        %v1969 = vshll.u32 %v1714, 16
        %v1971 = vrot.slane %v1969, 5
        %v1972 = vsel %vm213, %v1967, %v1971
        %v1974 = vshrl.u32 %v1715, 16
        %v1976 = vrot.slane %v1974, 4
        %v1977 = vshll.u32 %v1715, 16
        %v1979 = vrot.slane %v1977, 5
        %v1980 = vor.u32 %v1976, %v1979
        %v1981 = vrot.slane %v1980, 4
        %v1983 = vshll.u32 %v1716, 16
        %v1985 = vrot.slane %v1983, 5
        %v1986 = vsel %vm213, %v1981, %v1985
        %v1987 = vshrl.u32 %v1716, 16
        %v1989 = vrot.slane %v1987, 4
        %v1990 = vor.u32 %v1989, %v1985
        %v1991 = vrot.slane %v1990, 4
        %v1993 = vshll.u32 %v1717, 16
        %v1995 = vrot.slane %v1993, 5
        %v1996 = vsel %vm213, %v1991, %v1995
        %v1998 = vshrl.u32 %v1718, 16
        %v2000 = vrot.slane %v1998, 4
        %v2001 = vshll.u32 %v1718, 16
        %v2003 = vrot.slane %v2001, 5
        %v2004 = vor.u32 %v2000, %v2003
        %v2005 = vrot.slane %v2004, 4
        %v2007 = vshll.u32 %v1719, 16
        %v2009 = vrot.slane %v2007, 5
        %v2010 = vsel %vm213, %v2005, %v2009
        %v2011 = vshrl.u32 %v1719, 16
        %v2013 = vrot.slane %v2011, 4
        %v2014 = vor.u32 %v2013, %v2009
        %v2015 = vrot.slane %v2014, 4
        %v2017 = vshll.u32 %v1720, 16
        %v2019 = vrot.slane %v2017, 5
        %v2020 = vsel %vm213, %v2015, %v2019
        %v2022 = vshrl.u32 %v1721, 16
        %v2024 = vrot.slane %v2022, 4
        %v2025 = vshll.u32 %v1721, 16
        %v2027 = vrot.slane %v2025, 5
        %v2028 = vor.u32 %v2024, %v2027
        %v2029 = vrot.slane %v2028, 4
        %v2031 = vshll.u32 %v1722, 16
        %v2033 = vrot.slane %v2031, 5
        %v2034 = vsel %vm213, %v2029, %v2033
        %v2035 = vshrl.u32 %v1722, 16
        %v2037 = vrot.slane %v2035, 4
        %v2038 = vor.u32 %v2037, %v2033
        %v2039 = vrot.slane %v2038, 4
        %v2041 = vshll.u32 %v1723, 16
        %v2043 = vrot.slane %v2041, 5
        %v2044 = vsel %vm213, %v2039, %v2043
        %v2046 = vshrl.u32 %v1724, 16
        %v2048 = vrot.slane %v2046, 4
        %v2049 = vshll.u32 %v1724, 16
        %v2051 = vrot.slane %v2049, 5
        %v2052 = vor.u32 %v2048, %v2051
        %v2053 = vrot.slane %v2052, 4
        %v2055 = vshll.u32 %v1725, 16
        %v2057 = vrot.slane %v2055, 5
        %v2058 = vsel %vm213, %v2053, %v2057
        %v2059 = vshrl.u32 %v1725, 16
        %v2061 = vrot.slane %v2059, 4
        %v2062 = vor.u32 %v2061, %v2057
        %v2063 = vrot.slane %v2062, 4
        %v2065 = vshll.u32 %v1726, 16
        %v2067 = vrot.slane %v2065, 5
        %v2068 = vsel %vm213, %v2063, %v2067
        %v2070 = vshrl.u32 %v1727, 16
        %v2072 = vrot.slane %v2070, 4
        %v2073 = vshll.u32 %v1727, 16
        %v2075 = vrot.slane %v2073, 5
        %v2076 = vor.u32 %v2072, %v2075
        %v2077 = vrot.slane %v2076, 4
        %v2079 = vshll.u32 %v1728, 16
        %v2081 = vrot.slane %v2079, 5
        %v2082 = vsel %vm213, %v2077, %v2081
        %v2083 = vshrl.u32 %v1728, 16
        %v2085 = vrot.slane %v2083, 4
        %v2086 = vor.u32 %v2085, %v2081
        %v2087 = vrot.slane %v2086, 4
        %v2089 = vshll.u32 %v1729, 16
        %v2091 = vrot.slane %v2089, 5
        %v2092 = vsel %vm213, %v2087, %v2091
        %v2094 = vshrl.u32 %v1730, 16
        %v2096 = vrot.slane %v2094, 4
        %v2097 = vshll.u32 %v1730, 16
        %v2099 = vrot.slane %v2097, 5
        %v2100 = vor.u32 %v2096, %v2099
        %v2101 = vrot.slane %v2100, 4
        %v2103 = vshll.u32 %v1731, 16
        %v2105 = vrot.slane %v2103, 5
        %v2106 = vsel %vm213, %v2101, %v2105
        %v2107 = vshrl.u32 %v1731, 16
        %v2109 = vrot.slane %v2107, 4
        %v2110 = vor.u32 %v2109, %v2105
        %v2111 = vrot.slane %v2110, 4
        %v2113 = vshll.u32 %v1732, 16
        %v2115 = vrot.slane %v2113, 5
        %v2116 = vsel %vm213, %v2111, %v2115
        %s2117 = scalar_lea.vmem %s1, 16
        %v2118 = vld [vmem:[%s2117] sm:$0xf]
        %v2119 = vunpack.c.l.b16 %v1746
        %v2120 = vunpack.c.l.b16 %v1756
        %v2121 = vunpack.c.l.b16 %v1770
        %v2122 = vunpack.c.l.b16 %v1780
        %v2123 = vunpack.c.l.b16 %v1794
        %v2124 = vunpack.c.l.b16 %v1804
        %v2125 = vunpack.c.l.b16 %v1818
        %v2126 = vunpack.c.l.b16 %v1828
        %v2127 = vunpack.c.l.b16 %v1842
        %v2128 = vunpack.c.l.b16 %v1852
        %v2129 = vunpack.c.l.b16 %v1866
        %v2130 = vunpack.c.l.b16 %v1876
        %v2131 = vunpack.c.l.b16 %v1890
        %v2132 = vunpack.c.l.b16 %v1900
        %v2133 = vunpack.c.l.b16 %v1914
        %v2134 = vunpack.c.l.b16 %v1924
        %v2135 = vunpack.c.l.b16 %v1938
        %v2136 = vunpack.c.l.b16 %v1948
        %v2137 = vunpack.c.l.b16 %v1962
        %v2138 = vunpack.c.l.b16 %v1972
        %v2139 = vunpack.c.l.b16 %v1986
        %v2140 = vunpack.c.l.b16 %v1996
        %v2141 = vunpack.c.l.b16 %v2010
        %v2142 = vunpack.c.l.b16 %v2020
        %v2143 = vunpack.c.l.b16 %v2034
        %v2144 = vunpack.c.l.b16 %v2044
        %v2145 = vunpack.c.l.b16 %v2058
        %v2146 = vunpack.c.l.b16 %v2068
        %v2147 = vunpack.c.l.b16 %v2082
        %v2148 = vunpack.c.l.b16 %v2092
        %v2149 = vunpack.c.l.b16 %v2106
        %v2150 = vunpack.c.l.b16 %v2116
        %v2151 = vpack.c.b16 %v2120, %v2119
        %v2152 = vpack.c.b16 %v2122, %v2121
        %v2153 = vpack.c.b16 %v2124, %v2123
        %v2154 = vpack.c.b16 %v2126, %v2125
        %v2155 = vpack.c.b16 %v2128, %v2127
        %v2156 = vpack.c.b16 %v2130, %v2129
        %v2157 = vpack.c.b16 %v2132, %v2131
        %v2158 = vpack.c.b16 %v2134, %v2133
        %v2159 = vpack.c.b16 %v2136, %v2135
        %v2160 = vpack.c.b16 %v2138, %v2137
        %v2161 = vpack.c.b16 %v2140, %v2139
        %v2162 = vpack.c.b16 %v2142, %v2141
        %v2163 = vpack.c.b16 %v2144, %v2143
        %v2164 = vpack.c.b16 %v2146, %v2145
        %v2165 = vpack.c.b16 %v2148, %v2147
        %v2166 = vpack.c.b16 %v2150, %v2149
        %v2168 = vsel %vm648, %v2151, 0
        %v2171 = vsel %vm648, %v2152, 0
        %v2174 = vsel %vm648, %v2153, 0
        %v2177 = vsel %vm648, %v2154, 0
        %v2180 = vsel %vm648, %v2155, 0
        %v2183 = vsel %vm648, %v2156, 0
        %v2186 = vsel %vm648, %v2157, 0
        %v2189 = vsel %vm648, %v2158, 0
        %v2192 = vsel %vm648, %v2159, 0
        %v2195 = vsel %vm648, %v2160, 0
        %v2198 = vsel %vm648, %v2161, 0
        %v2201 = vsel %vm648, %v2162, 0
        %v2204 = vsel %vm648, %v2163, 0
        %v2207 = vsel %vm648, %v2164, 0
        %v2210 = vsel %vm648, %v2165, 0
        %v2213 = vsel %vm648, %v2166, 0
        %v2216 = vsel %vm697, %v2118, 0
        %2218 = vmatpush.bf16.msra.mxu0 0
        %2219 = vmatpush.bf16.msra.mxu0 0
        %2220 = vmatpush.bf16.msra.mxu0 0
        %2221 = vmatpush.bf16.msra.mxu0 0
        %2222 = vmatpush.bf16.msra.mxu0 0
        %2223 = vmatpush.bf16.msra.mxu0 0
        %2224 = vmatpush.bf16.msra.mxu0 0
        %2225 = vmatpush.bf16.msra.mxu0 %v2216
        %2226 = vmatmul.bf16.gmra.mxu0 %v2168
        %v2227 = vpop.f32.mrf.mxu0
        %v2228 = vadd.f32 0.0, %v2227
        %v2229 = vpop.f32.mrf.mxu0
        %v2230 = vadd.f32 0.0, %v2229
        %2231 = vmatmul.bf16.gmra.mxu0 %v2171
        %v2232 = vpop.f32.mrf.mxu0
        %v2233 = vadd.f32 0.0, %v2232
        %v2234 = vpop.f32.mrf.mxu0
        %v2235 = vadd.f32 0.0, %v2234
        %2236 = vmatmul.bf16.gmra.mxu0 %v2174
        %v2237 = vpop.f32.mrf.mxu0
        %v2238 = vadd.f32 0.0, %v2237
        %v2239 = vpop.f32.mrf.mxu0
        %v2240 = vadd.f32 0.0, %v2239
        %2241 = vmatmul.bf16.gmra.mxu0 %v2177
        %v2242 = vpop.f32.mrf.mxu0
        %v2243 = vadd.f32 0.0, %v2242
        %v2244 = vpop.f32.mrf.mxu0
        %v2245 = vadd.f32 0.0, %v2244
        %2246 = vmatmul.bf16.gmra.mxu0 %v2180
        %v2247 = vpop.f32.mrf.mxu0
        %v2248 = vadd.f32 0.0, %v2247
        %v2249 = vpop.f32.mrf.mxu0
        %v2250 = vadd.f32 0.0, %v2249
        %2251 = vmatmul.bf16.gmra.mxu0 %v2183
        %v2252 = vpop.f32.mrf.mxu0
        %v2253 = vadd.f32 0.0, %v2252
        %v2254 = vpop.f32.mrf.mxu0
        %v2255 = vadd.f32 0.0, %v2254
        %2256 = vmatmul.bf16.gmra.mxu0 %v2186
        %v2257 = vpop.f32.mrf.mxu0
        %v2258 = vadd.f32 0.0, %v2257
        %v2259 = vpop.f32.mrf.mxu0
        %v2260 = vadd.f32 0.0, %v2259
        %2261 = vmatmul.bf16.gmra.mxu0 %v2189
        %v2262 = vpop.f32.mrf.mxu0
        %v2263 = vadd.f32 0.0, %v2262
        %v2264 = vpop.f32.mrf.mxu0
        %v2265 = vadd.f32 0.0, %v2264
        %2266 = vmatmul.bf16.gmra.mxu0 %v2192
        %v2267 = vpop.f32.mrf.mxu0
        %v2268 = vadd.f32 0.0, %v2267
        %v2269 = vpop.f32.mrf.mxu0
        %v2270 = vadd.f32 0.0, %v2269
        %2271 = vmatmul.bf16.gmra.mxu0 %v2195
        %v2272 = vpop.f32.mrf.mxu0
        %v2273 = vadd.f32 0.0, %v2272
        %v2274 = vpop.f32.mrf.mxu0
        %v2275 = vadd.f32 0.0, %v2274
        %2276 = vmatmul.bf16.gmra.mxu0 %v2198
        %v2277 = vpop.f32.mrf.mxu0
        %v2278 = vadd.f32 0.0, %v2277
        %v2279 = vpop.f32.mrf.mxu0
        %v2280 = vadd.f32 0.0, %v2279
        %2281 = vmatmul.bf16.gmra.mxu0 %v2201
        %v2282 = vpop.f32.mrf.mxu0
        %v2283 = vadd.f32 0.0, %v2282
        %v2284 = vpop.f32.mrf.mxu0
        %v2285 = vadd.f32 0.0, %v2284
        %2286 = vmatmul.bf16.gmra.mxu0 %v2204
        %v2287 = vpop.f32.mrf.mxu0
        %v2288 = vadd.f32 0.0, %v2287
        %v2289 = vpop.f32.mrf.mxu0
        %v2290 = vadd.f32 0.0, %v2289
        %2291 = vmatmul.bf16.gmra.mxu0 %v2207
        %v2292 = vpop.f32.mrf.mxu0
        %v2293 = vadd.f32 0.0, %v2292
        %v2294 = vpop.f32.mrf.mxu0
        %v2295 = vadd.f32 0.0, %v2294
        %2296 = vmatmul.bf16.gmra.mxu0 %v2210
        %v2297 = vpop.f32.mrf.mxu0
        %v2298 = vadd.f32 0.0, %v2297
        %v2299 = vpop.f32.mrf.mxu0
        %v2300 = vadd.f32 0.0, %v2299
        %2301 = vmatmul.bf16.gmra.mxu0 %v2213
        %v2302 = vpop.f32.mrf.mxu0
        %v2303 = vadd.f32 0.0, %v2302
        %v2304 = vpop.f32.mrf.mxu0
        %v2305 = vadd.f32 0.0, %v2304
        %2306 = vdwg.mxu0
        %v2307 = vadd.f32 %v1653, %v2228
        %v2308 = vadd.f32 %v1654, %v2230
        %v2309 = vadd.f32 %v1655, %v2233
        %v2310 = vadd.f32 %v1656, %v2235
        %v2311 = vadd.f32 %v1657, %v2238
        %v2312 = vadd.f32 %v1658, %v2240
        %v2313 = vadd.f32 %v1659, %v2243
        %v2314 = vadd.f32 %v1660, %v2245
        %v2315 = vadd.f32 %v1661, %v2248
        %v2316 = vadd.f32 %v1662, %v2250
        %v2317 = vadd.f32 %v1663, %v2253
        %v2318 = vadd.f32 %v1664, %v2255
        %v2319 = vadd.f32 %v1665, %v2258
        %v2320 = vadd.f32 %v1666, %v2260
        %v2321 = vadd.f32 %v1667, %v2263
        %v2322 = vadd.f32 %v1668, %v2265
        %v2323 = vadd.f32 %v1669, %v2268
        %v2324 = vadd.f32 %v1670, %v2270
        %v2325 = vadd.f32 %v1671, %v2273
        %v2326 = vadd.f32 %v1672, %v2275
        %v2327 = vadd.f32 %v1673, %v2278
        %v2328 = vadd.f32 %v1674, %v2280
        %v2329 = vadd.f32 %v1675, %v2283
        %v2330 = vadd.f32 %v1676, %v2285
        %v2331 = vadd.f32 %v1677, %v2288
        %v2332 = vadd.f32 %v1678, %v2290
        %v2333 = vadd.f32 %v1679, %v2293
        %v2334 = vadd.f32 %v1680, %v2295
        %v2335 = vadd.f32 %v1681, %v2298
        %v2336 = vadd.f32 %v1682, %v2300
        %v2337 = vadd.f32 %v1683, %v2303
        %v2338 = vadd.f32 %v1684, %v2305
        %v2339 = vld [vmem:[%s1398] sm:$0xe]
        %v2340 = vld [vmem:[%s1398 + $0xc] sm:$0xe]
        %v2341 = vld [vmem:[%s1398 + $0x18] sm:$0xe]
        %v2342 = vld [vmem:[%s1398 + $0x24] sm:$0xe]
        %v2343 = vld [vmem:[%s1398 + $0x30] sm:$0xe]
        %v2344 = vld [vmem:[%s1398 + $0x3c] sm:$0xe]
        %v2345 = vld [vmem:[%s1398 + $0x48] sm:$0xe]
        %v2346 = vld [vmem:[%s1398 + $0x54] sm:$0xe]
        %v2347 = vld [vmem:[%s1398 + $0x60] sm:$0xe]
        %v2348 = vld [vmem:[%s1398 + $0x6c] sm:$0xe]
        %v2349 = vld [vmem:[%s1398 + $0x78] sm:$0xe]
        %v2350 = vld [vmem:[%s1398 + $0x84] sm:$0xe]
        %v2351 = vld [vmem:[%s1398 + $0x90] sm:$0xe]
        %v2352 = vld [vmem:[%s1398 + $0x9c] sm:$0xe]
        %v2353 = vld [vmem:[%s1398 + $0xa8] sm:$0xe]
        %v2354 = vld [vmem:[%s1398 + $0xb4] sm:$0xe]
        %v2403 = vrot.slane %v2339, 5
        %v2404 = vrot.slane %v2403, 4
        %v2405 = vrot.slane %v1686, 5
        %v2406 = vsel %vm1060, %v2404, %v2405
        %v2407 = vrot.slane %v2405, 4
        %v2408 = vrot.slane %v1687, 5
        %v2409 = vsel %vm1060, %v2407, %v2408
        %v2410 = vrot.slane %v2340, 5
        %v2411 = vrot.slane %v2410, 4
        %v2412 = vrot.slane %v1689, 5
        %v2413 = vsel %vm1060, %v2411, %v2412
        %v2414 = vrot.slane %v2412, 4
        %v2415 = vrot.slane %v1690, 5
        %v2416 = vsel %vm1060, %v2414, %v2415
        %v2417 = vrot.slane %v2341, 5
        %v2418 = vrot.slane %v2417, 4
        %v2419 = vrot.slane %v1692, 5
        %v2420 = vsel %vm1060, %v2418, %v2419
        %v2421 = vrot.slane %v2419, 4
        %v2422 = vrot.slane %v1693, 5
        %v2423 = vsel %vm1060, %v2421, %v2422
        %v2424 = vrot.slane %v2342, 5
        %v2425 = vrot.slane %v2424, 4
        %v2426 = vrot.slane %v1695, 5
        %v2427 = vsel %vm1060, %v2425, %v2426
        %v2428 = vrot.slane %v2426, 4
        %v2429 = vrot.slane %v1696, 5
        %v2430 = vsel %vm1060, %v2428, %v2429
        %v2431 = vrot.slane %v2343, 5
        %v2432 = vrot.slane %v2431, 4
        %v2433 = vrot.slane %v1698, 5
        %v2434 = vsel %vm1060, %v2432, %v2433
        %v2435 = vrot.slane %v2433, 4
        %v2436 = vrot.slane %v1699, 5
        %v2437 = vsel %vm1060, %v2435, %v2436
        %v2438 = vrot.slane %v2344, 5
        %v2439 = vrot.slane %v2438, 4
        %v2440 = vrot.slane %v1701, 5
        %v2441 = vsel %vm1060, %v2439, %v2440
        %v2442 = vrot.slane %v2440, 4
        %v2443 = vrot.slane %v1702, 5
        %v2444 = vsel %vm1060, %v2442, %v2443
        %v2445 = vrot.slane %v2345, 5
        %v2446 = vrot.slane %v2445, 4
        %v2447 = vrot.slane %v1704, 5
        %v2448 = vsel %vm1060, %v2446, %v2447
        %v2449 = vrot.slane %v2447, 4
        %v2450 = vrot.slane %v1705, 5
        %v2451 = vsel %vm1060, %v2449, %v2450
        %v2452 = vrot.slane %v2346, 5
        %v2453 = vrot.slane %v2452, 4
        %v2454 = vrot.slane %v1707, 5
        %v2455 = vsel %vm1060, %v2453, %v2454
        %v2456 = vrot.slane %v2454, 4
        %v2457 = vrot.slane %v1708, 5
        %v2458 = vsel %vm1060, %v2456, %v2457
        %v2459 = vrot.slane %v2347, 5
        %v2460 = vrot.slane %v2459, 4
        %v2461 = vrot.slane %v1710, 5
        %v2462 = vsel %vm1060, %v2460, %v2461
        %v2463 = vrot.slane %v2461, 4
        %v2464 = vrot.slane %v1711, 5
        %v2465 = vsel %vm1060, %v2463, %v2464
        %v2466 = vrot.slane %v2348, 5
        %v2467 = vrot.slane %v2466, 4
        %v2468 = vrot.slane %v1713, 5
        %v2469 = vsel %vm1060, %v2467, %v2468
        %v2470 = vrot.slane %v2468, 4
        %v2471 = vrot.slane %v1714, 5
        %v2472 = vsel %vm1060, %v2470, %v2471
        %v2473 = vrot.slane %v2349, 5
        %v2474 = vrot.slane %v2473, 4
        %v2475 = vrot.slane %v1716, 5
        %v2476 = vsel %vm1060, %v2474, %v2475
        %v2477 = vrot.slane %v2475, 4
        %v2478 = vrot.slane %v1717, 5
        %v2479 = vsel %vm1060, %v2477, %v2478
        %v2480 = vrot.slane %v2350, 5
        %v2481 = vrot.slane %v2480, 4
        %v2482 = vrot.slane %v1719, 5
        %v2483 = vsel %vm1060, %v2481, %v2482
        %v2484 = vrot.slane %v2482, 4
        %v2485 = vrot.slane %v1720, 5
        %v2486 = vsel %vm1060, %v2484, %v2485
        %v2487 = vrot.slane %v2351, 5
        %v2488 = vrot.slane %v2487, 4
        %v2489 = vrot.slane %v1722, 5
        %v2490 = vsel %vm1060, %v2488, %v2489
        %v2491 = vrot.slane %v2489, 4
        %v2492 = vrot.slane %v1723, 5
        %v2493 = vsel %vm1060, %v2491, %v2492
        %v2494 = vrot.slane %v2352, 5
        %v2495 = vrot.slane %v2494, 4
        %v2496 = vrot.slane %v1725, 5
        %v2497 = vsel %vm1060, %v2495, %v2496
        %v2498 = vrot.slane %v2496, 4
        %v2499 = vrot.slane %v1726, 5
        %v2500 = vsel %vm1060, %v2498, %v2499
        %v2501 = vrot.slane %v2353, 5
        %v2502 = vrot.slane %v2501, 4
        %v2503 = vrot.slane %v1728, 5
        %v2504 = vsel %vm1060, %v2502, %v2503
        %v2505 = vrot.slane %v2503, 4
        %v2506 = vrot.slane %v1729, 5
        %v2507 = vsel %vm1060, %v2505, %v2506
        %v2508 = vrot.slane %v2354, 5
        %v2509 = vrot.slane %v2508, 4
        %v2510 = vrot.slane %v1731, 5
        %v2511 = vsel %vm1060, %v2509, %v2510
        %v2512 = vrot.slane %v2510, 4
        %v2513 = vrot.slane %v1732, 5
        %v2514 = vsel %vm1060, %v2512, %v2513
        %s2515 = scalar_lea.vmem %s1, 20
        %v2516 = vld [vmem:[%s2515] sm:$0xf]
        %v2517 = vunpack.c.l.b16 %v2406
        %v2518 = vunpack.c.l.b16 %v2409
        %v2519 = vunpack.c.l.b16 %v2413
        %v2520 = vunpack.c.l.b16 %v2416
        %v2521 = vunpack.c.l.b16 %v2420
        %v2522 = vunpack.c.l.b16 %v2423
        %v2523 = vunpack.c.l.b16 %v2427
        %v2524 = vunpack.c.l.b16 %v2430
        %v2525 = vunpack.c.l.b16 %v2434
        %v2526 = vunpack.c.l.b16 %v2437
        %v2527 = vunpack.c.l.b16 %v2441
        %v2528 = vunpack.c.l.b16 %v2444
        %v2529 = vunpack.c.l.b16 %v2448
        %v2530 = vunpack.c.l.b16 %v2451
        %v2531 = vunpack.c.l.b16 %v2455
        %v2532 = vunpack.c.l.b16 %v2458
        %v2533 = vunpack.c.l.b16 %v2462
        %v2534 = vunpack.c.l.b16 %v2465
        %v2535 = vunpack.c.l.b16 %v2469
        %v2536 = vunpack.c.l.b16 %v2472
        %v2537 = vunpack.c.l.b16 %v2476
        %v2538 = vunpack.c.l.b16 %v2479
        %v2539 = vunpack.c.l.b16 %v2483
        %v2540 = vunpack.c.l.b16 %v2486
        %v2541 = vunpack.c.l.b16 %v2490
        %v2542 = vunpack.c.l.b16 %v2493
        %v2543 = vunpack.c.l.b16 %v2497
        %v2544 = vunpack.c.l.b16 %v2500
        %v2545 = vunpack.c.l.b16 %v2504
        %v2546 = vunpack.c.l.b16 %v2507
        %v2547 = vunpack.c.l.b16 %v2511
        %v2548 = vunpack.c.l.b16 %v2514
        %v2549 = vpack.c.b16 %v2518, %v2517
        %v2550 = vpack.c.b16 %v2520, %v2519
        %v2551 = vpack.c.b16 %v2522, %v2521
        %v2552 = vpack.c.b16 %v2524, %v2523
        %v2553 = vpack.c.b16 %v2526, %v2525
        %v2554 = vpack.c.b16 %v2528, %v2527
        %v2555 = vpack.c.b16 %v2530, %v2529
        %v2556 = vpack.c.b16 %v2532, %v2531
        %v2557 = vpack.c.b16 %v2534, %v2533
        %v2558 = vpack.c.b16 %v2536, %v2535
        %v2559 = vpack.c.b16 %v2538, %v2537
        %v2560 = vpack.c.b16 %v2540, %v2539
        %v2561 = vpack.c.b16 %v2542, %v2541
        %v2562 = vpack.c.b16 %v2544, %v2543
        %v2563 = vpack.c.b16 %v2546, %v2545
        %v2564 = vpack.c.b16 %v2548, %v2547
        %v2566 = vsel %vm648, %v2549, 0
        %v2569 = vsel %vm648, %v2550, 0
        %v2572 = vsel %vm648, %v2551, 0
        %v2575 = vsel %vm648, %v2552, 0
        %v2578 = vsel %vm648, %v2553, 0
        %v2581 = vsel %vm648, %v2554, 0
        %v2584 = vsel %vm648, %v2555, 0
        %v2587 = vsel %vm648, %v2556, 0
        %v2590 = vsel %vm648, %v2557, 0
        %v2593 = vsel %vm648, %v2558, 0
        %v2596 = vsel %vm648, %v2559, 0
        %v2599 = vsel %vm648, %v2560, 0
        %v2602 = vsel %vm648, %v2561, 0
        %v2605 = vsel %vm648, %v2562, 0
        %v2608 = vsel %vm648, %v2563, 0
        %v2611 = vsel %vm648, %v2564, 0
        %v2614 = vsel %vm697, %v2516, 0
        %2616 = vmatpush.bf16.msra.mxu0 0
        %2617 = vmatpush.bf16.msra.mxu0 0
        %2618 = vmatpush.bf16.msra.mxu0 0
        %2619 = vmatpush.bf16.msra.mxu0 0
        %2620 = vmatpush.bf16.msra.mxu0 0
        %2621 = vmatpush.bf16.msra.mxu0 0
        %2622 = vmatpush.bf16.msra.mxu0 0
        %2623 = vmatpush.bf16.msra.mxu0 %v2614
        %2624 = vmatmul.bf16.gmra.mxu0 %v2566
        %v2625 = vpop.f32.mrf.mxu0
        %v2626 = vadd.f32 0.0, %v2625
        %v2627 = vpop.f32.mrf.mxu0
        %v2628 = vadd.f32 0.0, %v2627
        %2629 = vmatmul.bf16.gmra.mxu0 %v2569
        %v2630 = vpop.f32.mrf.mxu0
        %v2631 = vadd.f32 0.0, %v2630
        %v2632 = vpop.f32.mrf.mxu0
        %v2633 = vadd.f32 0.0, %v2632
        %2634 = vmatmul.bf16.gmra.mxu0 %v2572
        %v2635 = vpop.f32.mrf.mxu0
        %v2636 = vadd.f32 0.0, %v2635
        %v2637 = vpop.f32.mrf.mxu0
        %v2638 = vadd.f32 0.0, %v2637
        %2639 = vmatmul.bf16.gmra.mxu0 %v2575
        %v2640 = vpop.f32.mrf.mxu0
        %v2641 = vadd.f32 0.0, %v2640
        %v2642 = vpop.f32.mrf.mxu0
        %v2643 = vadd.f32 0.0, %v2642
        %2644 = vmatmul.bf16.gmra.mxu0 %v2578
        %v2645 = vpop.f32.mrf.mxu0
        %v2646 = vadd.f32 0.0, %v2645
        %v2647 = vpop.f32.mrf.mxu0
        %v2648 = vadd.f32 0.0, %v2647
        %2649 = vmatmul.bf16.gmra.mxu0 %v2581
        %v2650 = vpop.f32.mrf.mxu0
        %v2651 = vadd.f32 0.0, %v2650
        %v2652 = vpop.f32.mrf.mxu0
        %v2653 = vadd.f32 0.0, %v2652
        %2654 = vmatmul.bf16.gmra.mxu0 %v2584
        %v2655 = vpop.f32.mrf.mxu0
        %v2656 = vadd.f32 0.0, %v2655
        %v2657 = vpop.f32.mrf.mxu0
        %v2658 = vadd.f32 0.0, %v2657
        %2659 = vmatmul.bf16.gmra.mxu0 %v2587
        %v2660 = vpop.f32.mrf.mxu0
        %v2661 = vadd.f32 0.0, %v2660
        %v2662 = vpop.f32.mrf.mxu0
        %v2663 = vadd.f32 0.0, %v2662
        %2664 = vmatmul.bf16.gmra.mxu0 %v2590
        %v2665 = vpop.f32.mrf.mxu0
        %v2666 = vadd.f32 0.0, %v2665
        %v2667 = vpop.f32.mrf.mxu0
        %v2668 = vadd.f32 0.0, %v2667
        %2669 = vmatmul.bf16.gmra.mxu0 %v2593
        %v2670 = vpop.f32.mrf.mxu0
        %v2671 = vadd.f32 0.0, %v2670
        %v2672 = vpop.f32.mrf.mxu0
        %v2673 = vadd.f32 0.0, %v2672
        %2674 = vmatmul.bf16.gmra.mxu0 %v2596
        %v2675 = vpop.f32.mrf.mxu0
        %v2676 = vadd.f32 0.0, %v2675
        %v2677 = vpop.f32.mrf.mxu0
        %v2678 = vadd.f32 0.0, %v2677
        %2679 = vmatmul.bf16.gmra.mxu0 %v2599
        %v2680 = vpop.f32.mrf.mxu0
        %v2681 = vadd.f32 0.0, %v2680
        %v2682 = vpop.f32.mrf.mxu0
        %v2683 = vadd.f32 0.0, %v2682
        %2684 = vmatmul.bf16.gmra.mxu0 %v2602
        %v2685 = vpop.f32.mrf.mxu0
        %v2686 = vadd.f32 0.0, %v2685
        %v2687 = vpop.f32.mrf.mxu0
        %v2688 = vadd.f32 0.0, %v2687
        %2689 = vmatmul.bf16.gmra.mxu0 %v2605
        %v2690 = vpop.f32.mrf.mxu0
        %v2691 = vadd.f32 0.0, %v2690
        %v2692 = vpop.f32.mrf.mxu0
        %v2693 = vadd.f32 0.0, %v2692
        %2694 = vmatmul.bf16.gmra.mxu0 %v2608
        %v2695 = vpop.f32.mrf.mxu0
        %v2696 = vadd.f32 0.0, %v2695
        %v2697 = vpop.f32.mrf.mxu0
        %v2698 = vadd.f32 0.0, %v2697
        %2699 = vmatmul.bf16.gmra.mxu0 %v2611
        %v2700 = vpop.f32.mrf.mxu0
        %v2701 = vadd.f32 0.0, %v2700
        %v2702 = vpop.f32.mrf.mxu0
        %v2703 = vadd.f32 0.0, %v2702
        %2704 = vdwg.mxu0
        %v2705 = vadd.f32 %v2307, %v2626
        %v2706 = vadd.f32 %v2308, %v2628
        %v2707 = vadd.f32 %v2309, %v2631
        %v2708 = vadd.f32 %v2310, %v2633
        %v2709 = vadd.f32 %v2311, %v2636
        %v2710 = vadd.f32 %v2312, %v2638
        %v2711 = vadd.f32 %v2313, %v2641
        %v2712 = vadd.f32 %v2314, %v2643
        %v2713 = vadd.f32 %v2315, %v2646
        %v2714 = vadd.f32 %v2316, %v2648
        %v2715 = vadd.f32 %v2317, %v2651
        %v2716 = vadd.f32 %v2318, %v2653
        %v2717 = vadd.f32 %v2319, %v2656
        %v2718 = vadd.f32 %v2320, %v2658
        %v2719 = vadd.f32 %v2321, %v2661
        %v2720 = vadd.f32 %v2322, %v2663
        %v2721 = vadd.f32 %v2323, %v2666
        %v2722 = vadd.f32 %v2324, %v2668
        %v2723 = vadd.f32 %v2325, %v2671
        %v2724 = vadd.f32 %v2326, %v2673
        %v2725 = vadd.f32 %v2327, %v2676
        %v2726 = vadd.f32 %v2328, %v2678
        %v2727 = vadd.f32 %v2329, %v2681
        %v2728 = vadd.f32 %v2330, %v2683
        %v2729 = vadd.f32 %v2331, %v2686
        %v2730 = vadd.f32 %v2332, %v2688
        %v2731 = vadd.f32 %v2333, %v2691
        %v2732 = vadd.f32 %v2334, %v2693
        %v2733 = vadd.f32 %v2335, %v2696
        %v2734 = vadd.f32 %v2336, %v2698
        %v2735 = vadd.f32 %v2337, %v2701
        %v2736 = vadd.f32 %v2338, %v2703
        %s2737 = sadd.s32 %s158, 2
        %s2738 = smul.u32 %s2737, 3
        %s2739 = smul.addr %s2738, 4
        %s2740 = scalar_lea.vmem %s155, %s2739
        %v2741 = vld [vmem:[%s2740] sm:$0xf]
        %v2742 = vld [vmem:[%s2740 + $0x4] sm:$0xf]
        %v2743 = vld [vmem:[%s2740 + $0xc] sm:$0xf]
        %v2744 = vld [vmem:[%s2740 + $0x10] sm:$0xf]
        %v2745 = vld [vmem:[%s2740 + $0x18] sm:$0xf]
        %v2746 = vld [vmem:[%s2740 + $0x1c] sm:$0xf]
        %v2747 = vld [vmem:[%s2740 + $0x24] sm:$0xf]
        %v2748 = vld [vmem:[%s2740 + $0x28] sm:$0xf]
        %v2749 = vld [vmem:[%s2740 + $0x30] sm:$0xf]
        %v2750 = vld [vmem:[%s2740 + $0x34] sm:$0xf]
        %v2751 = vld [vmem:[%s2740 + $0x3c] sm:$0xf]
        %v2752 = vld [vmem:[%s2740 + $0x40] sm:$0xf]
        %v2753 = vld [vmem:[%s2740 + $0x48] sm:$0xf]
        %v2754 = vld [vmem:[%s2740 + $0x4c] sm:$0xf]
        %v2755 = vld [vmem:[%s2740 + $0x54] sm:$0xf]
        %v2756 = vld [vmem:[%s2740 + $0x58] sm:$0xf]
        %v2757 = vld [vmem:[%s2740 + $0x60] sm:$0xf]
        %v2758 = vld [vmem:[%s2740 + $0x64] sm:$0xf]
        %v2759 = vld [vmem:[%s2740 + $0x6c] sm:$0xf]
        %v2760 = vld [vmem:[%s2740 + $0x70] sm:$0xf]
        %v2761 = vld [vmem:[%s2740 + $0x78] sm:$0xf]
        %v2762 = vld [vmem:[%s2740 + $0x7c] sm:$0xf]
        %v2763 = vld [vmem:[%s2740 + $0x84] sm:$0xf]
        %v2764 = vld [vmem:[%s2740 + $0x88] sm:$0xf]
        %v2765 = vld [vmem:[%s2740 + $0x90] sm:$0xf]
        %v2766 = vld [vmem:[%s2740 + $0x94] sm:$0xf]
        %v2767 = vld [vmem:[%s2740 + $0x9c] sm:$0xf]
        %v2768 = vld [vmem:[%s2740 + $0xa0] sm:$0xf]
        %v2769 = vld [vmem:[%s2740 + $0xa8] sm:$0xf]
        %v2770 = vld [vmem:[%s2740 + $0xac] sm:$0xf]
        %v2771 = vld [vmem:[%s2740 + $0xb4] sm:$0xf]
        %v2772 = vld [vmem:[%s2740 + $0xb8] sm:$0xf]
        %s2773 = scalar_lea.vmem %s1, 24
        %v2774 = vld [vmem:[%s2773] sm:$0xf]
        %v2807 = vunpack.c.l.b16 %v2741
        %v2808 = vunpack.c.l.b16 %v2742
        %v2809 = vunpack.c.l.b16 %v2743
        %v2810 = vunpack.c.l.b16 %v2744
        %v2811 = vunpack.c.l.b16 %v2745
        %v2812 = vunpack.c.l.b16 %v2746
        %v2813 = vunpack.c.l.b16 %v2747
        %v2814 = vunpack.c.l.b16 %v2748
        %v2815 = vunpack.c.l.b16 %v2749
        %v2816 = vunpack.c.l.b16 %v2750
        %v2817 = vunpack.c.l.b16 %v2751
        %v2818 = vunpack.c.l.b16 %v2752
        %v2819 = vunpack.c.l.b16 %v2753
        %v2820 = vunpack.c.l.b16 %v2754
        %v2821 = vunpack.c.l.b16 %v2755
        %v2822 = vunpack.c.l.b16 %v2756
        %v2823 = vunpack.c.l.b16 %v2757
        %v2824 = vunpack.c.l.b16 %v2758
        %v2825 = vunpack.c.l.b16 %v2759
        %v2826 = vunpack.c.l.b16 %v2760
        %v2827 = vunpack.c.l.b16 %v2761
        %v2828 = vunpack.c.l.b16 %v2762
        %v2829 = vunpack.c.l.b16 %v2763
        %v2830 = vunpack.c.l.b16 %v2764
        %v2831 = vunpack.c.l.b16 %v2765
        %v2832 = vunpack.c.l.b16 %v2766
        %v2833 = vunpack.c.l.b16 %v2767
        %v2834 = vunpack.c.l.b16 %v2768
        %v2835 = vunpack.c.l.b16 %v2769
        %v2836 = vunpack.c.l.b16 %v2770
        %v2837 = vunpack.c.l.b16 %v2771
        %v2838 = vunpack.c.l.b16 %v2772
        %v2839 = vpack.c.b16 %v2808, %v2807
        %v2840 = vpack.c.b16 %v2810, %v2809
        %v2841 = vpack.c.b16 %v2812, %v2811
        %v2842 = vpack.c.b16 %v2814, %v2813
        %v2843 = vpack.c.b16 %v2816, %v2815
        %v2844 = vpack.c.b16 %v2818, %v2817
        %v2845 = vpack.c.b16 %v2820, %v2819
        %v2846 = vpack.c.b16 %v2822, %v2821
        %v2847 = vpack.c.b16 %v2824, %v2823
        %v2848 = vpack.c.b16 %v2826, %v2825
        %v2849 = vpack.c.b16 %v2828, %v2827
        %v2850 = vpack.c.b16 %v2830, %v2829
        %v2851 = vpack.c.b16 %v2832, %v2831
        %v2852 = vpack.c.b16 %v2834, %v2833
        %v2853 = vpack.c.b16 %v2836, %v2835
        %v2854 = vpack.c.b16 %v2838, %v2837
        %v2856 = vsel %vm648, %v2839, 0
        %v2859 = vsel %vm648, %v2840, 0
        %v2862 = vsel %vm648, %v2841, 0
        %v2865 = vsel %vm648, %v2842, 0
        %v2868 = vsel %vm648, %v2843, 0
        %v2871 = vsel %vm648, %v2844, 0
        %v2874 = vsel %vm648, %v2845, 0
        %v2877 = vsel %vm648, %v2846, 0
        %v2880 = vsel %vm648, %v2847, 0
        %v2883 = vsel %vm648, %v2848, 0
        %v2886 = vsel %vm648, %v2849, 0
        %v2889 = vsel %vm648, %v2850, 0
        %v2892 = vsel %vm648, %v2851, 0
        %v2895 = vsel %vm648, %v2852, 0
        %v2898 = vsel %vm648, %v2853, 0
        %v2901 = vsel %vm648, %v2854, 0
        %v2904 = vsel %vm697, %v2774, 0
        %2906 = vmatpush.bf16.msra.mxu0 0
        %2907 = vmatpush.bf16.msra.mxu0 0
        %2908 = vmatpush.bf16.msra.mxu0 0
        %2909 = vmatpush.bf16.msra.mxu0 0
        %2910 = vmatpush.bf16.msra.mxu0 0
        %2911 = vmatpush.bf16.msra.mxu0 0
        %2912 = vmatpush.bf16.msra.mxu0 0
        %2913 = vmatpush.bf16.msra.mxu0 %v2904
        %2914 = vmatmul.bf16.gmra.mxu0 %v2856
        %v2915 = vpop.f32.mrf.mxu0
        %v2916 = vadd.f32 0.0, %v2915
        %v2917 = vpop.f32.mrf.mxu0
        %v2918 = vadd.f32 0.0, %v2917
        %2919 = vmatmul.bf16.gmra.mxu0 %v2859
        %v2920 = vpop.f32.mrf.mxu0
        %v2921 = vadd.f32 0.0, %v2920
        %v2922 = vpop.f32.mrf.mxu0
        %v2923 = vadd.f32 0.0, %v2922
        %2924 = vmatmul.bf16.gmra.mxu0 %v2862
        %v2925 = vpop.f32.mrf.mxu0
        %v2926 = vadd.f32 0.0, %v2925
        %v2927 = vpop.f32.mrf.mxu0
        %v2928 = vadd.f32 0.0, %v2927
        %2929 = vmatmul.bf16.gmra.mxu0 %v2865
        %v2930 = vpop.f32.mrf.mxu0
        %v2931 = vadd.f32 0.0, %v2930
        %v2932 = vpop.f32.mrf.mxu0
        %v2933 = vadd.f32 0.0, %v2932
        %2934 = vmatmul.bf16.gmra.mxu0 %v2868
        %v2935 = vpop.f32.mrf.mxu0
        %v2936 = vadd.f32 0.0, %v2935
        %v2937 = vpop.f32.mrf.mxu0
        %v2938 = vadd.f32 0.0, %v2937
        %2939 = vmatmul.bf16.gmra.mxu0 %v2871
        %v2940 = vpop.f32.mrf.mxu0
        %v2941 = vadd.f32 0.0, %v2940
        %v2942 = vpop.f32.mrf.mxu0
        %v2943 = vadd.f32 0.0, %v2942
        %2944 = vmatmul.bf16.gmra.mxu0 %v2874
        %v2945 = vpop.f32.mrf.mxu0
        %v2946 = vadd.f32 0.0, %v2945
        %v2947 = vpop.f32.mrf.mxu0
        %v2948 = vadd.f32 0.0, %v2947
        %2949 = vmatmul.bf16.gmra.mxu0 %v2877
        %v2950 = vpop.f32.mrf.mxu0
        %v2951 = vadd.f32 0.0, %v2950
        %v2952 = vpop.f32.mrf.mxu0
        %v2953 = vadd.f32 0.0, %v2952
        %2954 = vmatmul.bf16.gmra.mxu0 %v2880
        %v2955 = vpop.f32.mrf.mxu0
        %v2956 = vadd.f32 0.0, %v2955
        %v2957 = vpop.f32.mrf.mxu0
        %v2958 = vadd.f32 0.0, %v2957
        %2959 = vmatmul.bf16.gmra.mxu0 %v2883
        %v2960 = vpop.f32.mrf.mxu0
        %v2961 = vadd.f32 0.0, %v2960
        %v2962 = vpop.f32.mrf.mxu0
        %v2963 = vadd.f32 0.0, %v2962
        %2964 = vmatmul.bf16.gmra.mxu0 %v2886
        %v2965 = vpop.f32.mrf.mxu0
        %v2966 = vadd.f32 0.0, %v2965
        %v2967 = vpop.f32.mrf.mxu0
        %v2968 = vadd.f32 0.0, %v2967
        %2969 = vmatmul.bf16.gmra.mxu0 %v2889
        %v2970 = vpop.f32.mrf.mxu0
        %v2971 = vadd.f32 0.0, %v2970
        %v2972 = vpop.f32.mrf.mxu0
        %v2973 = vadd.f32 0.0, %v2972
        %2974 = vmatmul.bf16.gmra.mxu0 %v2892
        %v2975 = vpop.f32.mrf.mxu0
        %v2976 = vadd.f32 0.0, %v2975
        %v2977 = vpop.f32.mrf.mxu0
        %v2978 = vadd.f32 0.0, %v2977
        %2979 = vmatmul.bf16.gmra.mxu0 %v2895
        %v2980 = vpop.f32.mrf.mxu0
        %v2981 = vadd.f32 0.0, %v2980
        %v2982 = vpop.f32.mrf.mxu0
        %v2983 = vadd.f32 0.0, %v2982
        %2984 = vmatmul.bf16.gmra.mxu0 %v2898
        %v2985 = vpop.f32.mrf.mxu0
        %v2986 = vadd.f32 0.0, %v2985
        %v2987 = vpop.f32.mrf.mxu0
        %v2988 = vadd.f32 0.0, %v2987
        %2989 = vmatmul.bf16.gmra.mxu0 %v2901
        %v2990 = vpop.f32.mrf.mxu0
        %v2991 = vadd.f32 0.0, %v2990
        %v2992 = vpop.f32.mrf.mxu0
        %v2993 = vadd.f32 0.0, %v2992
        %2994 = vdwg.mxu0
        %v2995 = vadd.f32 %v2705, %v2916
        %v2996 = vadd.f32 %v2706, %v2918
        %v2997 = vadd.f32 %v2707, %v2921
        %v2998 = vadd.f32 %v2708, %v2923
        %v2999 = vadd.f32 %v2709, %v2926
        %v3000 = vadd.f32 %v2710, %v2928
        %v3001 = vadd.f32 %v2711, %v2931
        %v3002 = vadd.f32 %v2712, %v2933
        %v3003 = vadd.f32 %v2713, %v2936
        %v3004 = vadd.f32 %v2714, %v2938
        %v3005 = vadd.f32 %v2715, %v2941
        %v3006 = vadd.f32 %v2716, %v2943
        %v3007 = vadd.f32 %v2717, %v2946
        %v3008 = vadd.f32 %v2718, %v2948
        %v3009 = vadd.f32 %v2719, %v2951
        %v3010 = vadd.f32 %v2720, %v2953
        %v3011 = vadd.f32 %v2721, %v2956
        %v3012 = vadd.f32 %v2722, %v2958
        %v3013 = vadd.f32 %v2723, %v2961
        %v3014 = vadd.f32 %v2724, %v2963
        %v3015 = vadd.f32 %v2725, %v2966
        %v3016 = vadd.f32 %v2726, %v2968
        %v3017 = vadd.f32 %v2727, %v2971
        %v3018 = vadd.f32 %v2728, %v2973
        %v3019 = vadd.f32 %v2729, %v2976
        %v3020 = vadd.f32 %v2730, %v2978
        %v3021 = vadd.f32 %v2731, %v2981
        %v3022 = vadd.f32 %v2732, %v2983
        %v3023 = vadd.f32 %v2733, %v2986
        %v3024 = vadd.f32 %v2734, %v2988
        %v3025 = vadd.f32 %v2735, %v2991
        %v3026 = vadd.f32 %v2736, %v2993
        %v3027 = vld [vmem:[%s2740] sm:$0xf]
        %v3028 = vld [vmem:[%s2740 + $0x4] sm:$0xf]
        %v3029 = vld [vmem:[%s2740 + $0x8] sm:$0x1]
        %v3030 = vld [vmem:[%s2740 + $0xc] sm:$0xf]
        %v3031 = vld [vmem:[%s2740 + $0x10] sm:$0xf]
        %v3032 = vld [vmem:[%s2740 + $0x14] sm:$0x1]
        %v3033 = vld [vmem:[%s2740 + $0x18] sm:$0xf]
        %v3034 = vld [vmem:[%s2740 + $0x1c] sm:$0xf]
        %v3035 = vld [vmem:[%s2740 + $0x20] sm:$0x1]
        %v3036 = vld [vmem:[%s2740 + $0x24] sm:$0xf]
        %v3037 = vld [vmem:[%s2740 + $0x28] sm:$0xf]
        %v3038 = vld [vmem:[%s2740 + $0x2c] sm:$0x1]
        %v3039 = vld [vmem:[%s2740 + $0x30] sm:$0xf]
        %v3040 = vld [vmem:[%s2740 + $0x34] sm:$0xf]
        %v3041 = vld [vmem:[%s2740 + $0x38] sm:$0x1]
        %v3042 = vld [vmem:[%s2740 + $0x3c] sm:$0xf]
        %v3043 = vld [vmem:[%s2740 + $0x40] sm:$0xf]
        %v3044 = vld [vmem:[%s2740 + $0x44] sm:$0x1]
        %v3045 = vld [vmem:[%s2740 + $0x48] sm:$0xf]
        %v3046 = vld [vmem:[%s2740 + $0x4c] sm:$0xf]
        %v3047 = vld [vmem:[%s2740 + $0x50] sm:$0x1]
        %v3048 = vld [vmem:[%s2740 + $0x54] sm:$0xf]
        %v3049 = vld [vmem:[%s2740 + $0x58] sm:$0xf]
        %v3050 = vld [vmem:[%s2740 + $0x5c] sm:$0x1]
        %v3051 = vld [vmem:[%s2740 + $0x60] sm:$0xf]
        %v3052 = vld [vmem:[%s2740 + $0x64] sm:$0xf]
        %v3053 = vld [vmem:[%s2740 + $0x68] sm:$0x1]
        %v3054 = vld [vmem:[%s2740 + $0x6c] sm:$0xf]
        %v3055 = vld [vmem:[%s2740 + $0x70] sm:$0xf]
        %v3056 = vld [vmem:[%s2740 + $0x74] sm:$0x1]
        %v3057 = vld [vmem:[%s2740 + $0x78] sm:$0xf]
        %v3058 = vld [vmem:[%s2740 + $0x7c] sm:$0xf]
        %v3059 = vld [vmem:[%s2740 + $0x80] sm:$0x1]
        %v3060 = vld [vmem:[%s2740 + $0x84] sm:$0xf]
        %v3061 = vld [vmem:[%s2740 + $0x88] sm:$0xf]
        %v3062 = vld [vmem:[%s2740 + $0x8c] sm:$0x1]
        %v3063 = vld [vmem:[%s2740 + $0x90] sm:$0xf]
        %v3064 = vld [vmem:[%s2740 + $0x94] sm:$0xf]
        %v3065 = vld [vmem:[%s2740 + $0x98] sm:$0x1]
        %v3066 = vld [vmem:[%s2740 + $0x9c] sm:$0xf]
        %v3067 = vld [vmem:[%s2740 + $0xa0] sm:$0xf]
        %v3068 = vld [vmem:[%s2740 + $0xa4] sm:$0x1]
        %v3069 = vld [vmem:[%s2740 + $0xa8] sm:$0xf]
        %v3070 = vld [vmem:[%s2740 + $0xac] sm:$0xf]
        %v3071 = vld [vmem:[%s2740 + $0xb0] sm:$0x1]
        %v3072 = vld [vmem:[%s2740 + $0xb4] sm:$0xf]
        %v3073 = vld [vmem:[%s2740 + $0xb8] sm:$0xf]
        %v3074 = vld [vmem:[%s2740 + $0xbc] sm:$0x1]
        %v3076 = vshrl.u32 %v3027, 16
        %v3078 = vrot.slane %v3076, 4
        %v3079 = vshll.u32 %v3027, 16
        %v3081 = vrot.slane %v3079, 5
        %v3082 = vor.u32 %v3078, %v3081
        %v3083 = vrot.slane %v3082, 4
        %v3085 = vshll.u32 %v3028, 16
        %v3087 = vrot.slane %v3085, 5
        %v3088 = vsel %vm213, %v3083, %v3087
        %v3089 = vshrl.u32 %v3028, 16
        %v3091 = vrot.slane %v3089, 4
        %v3092 = vor.u32 %v3091, %v3087
        %v3093 = vrot.slane %v3092, 4
        %v3095 = vshll.u32 %v3029, 16
        %v3097 = vrot.slane %v3095, 5
        %v3098 = vsel %vm213, %v3093, %v3097
        %v3100 = vshrl.u32 %v3030, 16
        %v3102 = vrot.slane %v3100, 4
        %v3103 = vshll.u32 %v3030, 16
        %v3105 = vrot.slane %v3103, 5
        %v3106 = vor.u32 %v3102, %v3105
        %v3107 = vrot.slane %v3106, 4
        %v3109 = vshll.u32 %v3031, 16
        %v3111 = vrot.slane %v3109, 5
        %v3112 = vsel %vm213, %v3107, %v3111
        %v3113 = vshrl.u32 %v3031, 16
        %v3115 = vrot.slane %v3113, 4
        %v3116 = vor.u32 %v3115, %v3111
        %v3117 = vrot.slane %v3116, 4
        %v3119 = vshll.u32 %v3032, 16
        %v3121 = vrot.slane %v3119, 5
        %v3122 = vsel %vm213, %v3117, %v3121
        %v3124 = vshrl.u32 %v3033, 16
        %v3126 = vrot.slane %v3124, 4
        %v3127 = vshll.u32 %v3033, 16
        %v3129 = vrot.slane %v3127, 5
        %v3130 = vor.u32 %v3126, %v3129
        %v3131 = vrot.slane %v3130, 4
        %v3133 = vshll.u32 %v3034, 16
        %v3135 = vrot.slane %v3133, 5
        %v3136 = vsel %vm213, %v3131, %v3135
        %v3137 = vshrl.u32 %v3034, 16
        %v3139 = vrot.slane %v3137, 4
        %v3140 = vor.u32 %v3139, %v3135
        %v3141 = vrot.slane %v3140, 4
        %v3143 = vshll.u32 %v3035, 16
        %v3145 = vrot.slane %v3143, 5
        %v3146 = vsel %vm213, %v3141, %v3145
        %v3148 = vshrl.u32 %v3036, 16
        %v3150 = vrot.slane %v3148, 4
        %v3151 = vshll.u32 %v3036, 16
        %v3153 = vrot.slane %v3151, 5
        %v3154 = vor.u32 %v3150, %v3153
        %v3155 = vrot.slane %v3154, 4
        %v3157 = vshll.u32 %v3037, 16
        %v3159 = vrot.slane %v3157, 5
        %v3160 = vsel %vm213, %v3155, %v3159
        %v3161 = vshrl.u32 %v3037, 16
        %v3163 = vrot.slane %v3161, 4
        %v3164 = vor.u32 %v3163, %v3159
        %v3165 = vrot.slane %v3164, 4
        %v3167 = vshll.u32 %v3038, 16
        %v3169 = vrot.slane %v3167, 5
        %v3170 = vsel %vm213, %v3165, %v3169
        %v3172 = vshrl.u32 %v3039, 16
        %v3174 = vrot.slane %v3172, 4
        %v3175 = vshll.u32 %v3039, 16
        %v3177 = vrot.slane %v3175, 5
        %v3178 = vor.u32 %v3174, %v3177
        %v3179 = vrot.slane %v3178, 4
        %v3181 = vshll.u32 %v3040, 16
        %v3183 = vrot.slane %v3181, 5
        %v3184 = vsel %vm213, %v3179, %v3183
        %v3185 = vshrl.u32 %v3040, 16
        %v3187 = vrot.slane %v3185, 4
        %v3188 = vor.u32 %v3187, %v3183
        %v3189 = vrot.slane %v3188, 4
        %v3191 = vshll.u32 %v3041, 16
        %v3193 = vrot.slane %v3191, 5
        %v3194 = vsel %vm213, %v3189, %v3193
        %v3196 = vshrl.u32 %v3042, 16
        %v3198 = vrot.slane %v3196, 4
        %v3199 = vshll.u32 %v3042, 16
        %v3201 = vrot.slane %v3199, 5
        %v3202 = vor.u32 %v3198, %v3201
        %v3203 = vrot.slane %v3202, 4
        %v3205 = vshll.u32 %v3043, 16
        %v3207 = vrot.slane %v3205, 5
        %v3208 = vsel %vm213, %v3203, %v3207
        %v3209 = vshrl.u32 %v3043, 16
        %v3211 = vrot.slane %v3209, 4
        %v3212 = vor.u32 %v3211, %v3207
        %v3213 = vrot.slane %v3212, 4
        %v3215 = vshll.u32 %v3044, 16
        %v3217 = vrot.slane %v3215, 5
        %v3218 = vsel %vm213, %v3213, %v3217
        %v3220 = vshrl.u32 %v3045, 16
        %v3222 = vrot.slane %v3220, 4
        %v3223 = vshll.u32 %v3045, 16
        %v3225 = vrot.slane %v3223, 5
        %v3226 = vor.u32 %v3222, %v3225
        %v3227 = vrot.slane %v3226, 4
        %v3229 = vshll.u32 %v3046, 16
        %v3231 = vrot.slane %v3229, 5
        %v3232 = vsel %vm213, %v3227, %v3231
        %v3233 = vshrl.u32 %v3046, 16
        %v3235 = vrot.slane %v3233, 4
        %v3236 = vor.u32 %v3235, %v3231
        %v3237 = vrot.slane %v3236, 4
        %v3239 = vshll.u32 %v3047, 16
        %v3241 = vrot.slane %v3239, 5
        %v3242 = vsel %vm213, %v3237, %v3241
        %v3244 = vshrl.u32 %v3048, 16
        %v3246 = vrot.slane %v3244, 4
        %v3247 = vshll.u32 %v3048, 16
        %v3249 = vrot.slane %v3247, 5
        %v3250 = vor.u32 %v3246, %v3249
        %v3251 = vrot.slane %v3250, 4
        %v3253 = vshll.u32 %v3049, 16
        %v3255 = vrot.slane %v3253, 5
        %v3256 = vsel %vm213, %v3251, %v3255
        %v3257 = vshrl.u32 %v3049, 16
        %v3259 = vrot.slane %v3257, 4
        %v3260 = vor.u32 %v3259, %v3255
        %v3261 = vrot.slane %v3260, 4
        %v3263 = vshll.u32 %v3050, 16
        %v3265 = vrot.slane %v3263, 5
        %v3266 = vsel %vm213, %v3261, %v3265
        %v3268 = vshrl.u32 %v3051, 16
        %v3270 = vrot.slane %v3268, 4
        %v3271 = vshll.u32 %v3051, 16
        %v3273 = vrot.slane %v3271, 5
        %v3274 = vor.u32 %v3270, %v3273
        %v3275 = vrot.slane %v3274, 4
        %v3277 = vshll.u32 %v3052, 16
        %v3279 = vrot.slane %v3277, 5
        %v3280 = vsel %vm213, %v3275, %v3279
        %v3281 = vshrl.u32 %v3052, 16
        %v3283 = vrot.slane %v3281, 4
        %v3284 = vor.u32 %v3283, %v3279
        %v3285 = vrot.slane %v3284, 4
        %v3287 = vshll.u32 %v3053, 16
        %v3289 = vrot.slane %v3287, 5
        %v3290 = vsel %vm213, %v3285, %v3289
        %v3292 = vshrl.u32 %v3054, 16
        %v3294 = vrot.slane %v3292, 4
        %v3295 = vshll.u32 %v3054, 16
        %v3297 = vrot.slane %v3295, 5
        %v3298 = vor.u32 %v3294, %v3297
        %v3299 = vrot.slane %v3298, 4
        %v3301 = vshll.u32 %v3055, 16
        %v3303 = vrot.slane %v3301, 5
        %v3304 = vsel %vm213, %v3299, %v3303
        %v3305 = vshrl.u32 %v3055, 16
        %v3307 = vrot.slane %v3305, 4
        %v3308 = vor.u32 %v3307, %v3303
        %v3309 = vrot.slane %v3308, 4
        %v3311 = vshll.u32 %v3056, 16
        %v3313 = vrot.slane %v3311, 5
        %v3314 = vsel %vm213, %v3309, %v3313
        %v3316 = vshrl.u32 %v3057, 16
        %v3318 = vrot.slane %v3316, 4
        %v3319 = vshll.u32 %v3057, 16
        %v3321 = vrot.slane %v3319, 5
        %v3322 = vor.u32 %v3318, %v3321
        %v3323 = vrot.slane %v3322, 4
        %v3325 = vshll.u32 %v3058, 16
        %v3327 = vrot.slane %v3325, 5
        %v3328 = vsel %vm213, %v3323, %v3327
        %v3329 = vshrl.u32 %v3058, 16
        %v3331 = vrot.slane %v3329, 4
        %v3332 = vor.u32 %v3331, %v3327
        %v3333 = vrot.slane %v3332, 4
        %v3335 = vshll.u32 %v3059, 16
        %v3337 = vrot.slane %v3335, 5
        %v3338 = vsel %vm213, %v3333, %v3337
        %v3340 = vshrl.u32 %v3060, 16
        %v3342 = vrot.slane %v3340, 4
        %v3343 = vshll.u32 %v3060, 16
        %v3345 = vrot.slane %v3343, 5
        %v3346 = vor.u32 %v3342, %v3345
        %v3347 = vrot.slane %v3346, 4
        %v3349 = vshll.u32 %v3061, 16
        %v3351 = vrot.slane %v3349, 5
        %v3352 = vsel %vm213, %v3347, %v3351
        %v3353 = vshrl.u32 %v3061, 16
        %v3355 = vrot.slane %v3353, 4
        %v3356 = vor.u32 %v3355, %v3351
        %v3357 = vrot.slane %v3356, 4
        %v3359 = vshll.u32 %v3062, 16
        %v3361 = vrot.slane %v3359, 5
        %v3362 = vsel %vm213, %v3357, %v3361
        %v3364 = vshrl.u32 %v3063, 16
        %v3366 = vrot.slane %v3364, 4
        %v3367 = vshll.u32 %v3063, 16
        %v3369 = vrot.slane %v3367, 5
        %v3370 = vor.u32 %v3366, %v3369
        %v3371 = vrot.slane %v3370, 4
        %v3373 = vshll.u32 %v3064, 16
        %v3375 = vrot.slane %v3373, 5
        %v3376 = vsel %vm213, %v3371, %v3375
        %v3377 = vshrl.u32 %v3064, 16
        %v3379 = vrot.slane %v3377, 4
        %v3380 = vor.u32 %v3379, %v3375
        %v3381 = vrot.slane %v3380, 4
        %v3383 = vshll.u32 %v3065, 16
        %v3385 = vrot.slane %v3383, 5
        %v3386 = vsel %vm213, %v3381, %v3385
        %v3388 = vshrl.u32 %v3066, 16
        %v3390 = vrot.slane %v3388, 4
        %v3391 = vshll.u32 %v3066, 16
        %v3393 = vrot.slane %v3391, 5
        %v3394 = vor.u32 %v3390, %v3393
        %v3395 = vrot.slane %v3394, 4
        %v3397 = vshll.u32 %v3067, 16
        %v3399 = vrot.slane %v3397, 5
        %v3400 = vsel %vm213, %v3395, %v3399
        %v3401 = vshrl.u32 %v3067, 16
        %v3403 = vrot.slane %v3401, 4
        %v3404 = vor.u32 %v3403, %v3399
        %v3405 = vrot.slane %v3404, 4
        %v3407 = vshll.u32 %v3068, 16
        %v3409 = vrot.slane %v3407, 5
        %v3410 = vsel %vm213, %v3405, %v3409
        %v3412 = vshrl.u32 %v3069, 16
        %v3414 = vrot.slane %v3412, 4
        %v3415 = vshll.u32 %v3069, 16
        %v3417 = vrot.slane %v3415, 5
        %v3418 = vor.u32 %v3414, %v3417
        %v3419 = vrot.slane %v3418, 4
        %v3421 = vshll.u32 %v3070, 16
        %v3423 = vrot.slane %v3421, 5
        %v3424 = vsel %vm213, %v3419, %v3423
        %v3425 = vshrl.u32 %v3070, 16
        %v3427 = vrot.slane %v3425, 4
        %v3428 = vor.u32 %v3427, %v3423
        %v3429 = vrot.slane %v3428, 4
        %v3431 = vshll.u32 %v3071, 16
        %v3433 = vrot.slane %v3431, 5
        %v3434 = vsel %vm213, %v3429, %v3433
        %v3436 = vshrl.u32 %v3072, 16
        %v3438 = vrot.slane %v3436, 4
        %v3439 = vshll.u32 %v3072, 16
        %v3441 = vrot.slane %v3439, 5
        %v3442 = vor.u32 %v3438, %v3441
        %v3443 = vrot.slane %v3442, 4
        %v3445 = vshll.u32 %v3073, 16
        %v3447 = vrot.slane %v3445, 5
        %v3448 = vsel %vm213, %v3443, %v3447
        %v3449 = vshrl.u32 %v3073, 16
        %v3451 = vrot.slane %v3449, 4
        %v3452 = vor.u32 %v3451, %v3447
        %v3453 = vrot.slane %v3452, 4
        %v3455 = vshll.u32 %v3074, 16
        %v3457 = vrot.slane %v3455, 5
        %v3458 = vsel %vm213, %v3453, %v3457
        %s3459 = scalar_lea.vmem %s1, 28
        %v3460 = vld [vmem:[%s3459] sm:$0xf]
        %v3461 = vunpack.c.l.b16 %v3088
        %v3462 = vunpack.c.l.b16 %v3098
        %v3463 = vunpack.c.l.b16 %v3112
        %v3464 = vunpack.c.l.b16 %v3122
        %v3465 = vunpack.c.l.b16 %v3136
        %v3466 = vunpack.c.l.b16 %v3146
        %v3467 = vunpack.c.l.b16 %v3160
        %v3468 = vunpack.c.l.b16 %v3170
        %v3469 = vunpack.c.l.b16 %v3184
        %v3470 = vunpack.c.l.b16 %v3194
        %v3471 = vunpack.c.l.b16 %v3208
        %v3472 = vunpack.c.l.b16 %v3218
        %v3473 = vunpack.c.l.b16 %v3232
        %v3474 = vunpack.c.l.b16 %v3242
        %v3475 = vunpack.c.l.b16 %v3256
        %v3476 = vunpack.c.l.b16 %v3266
        %v3477 = vunpack.c.l.b16 %v3280
        %v3478 = vunpack.c.l.b16 %v3290
        %v3479 = vunpack.c.l.b16 %v3304
        %v3480 = vunpack.c.l.b16 %v3314
        %v3481 = vunpack.c.l.b16 %v3328
        %v3482 = vunpack.c.l.b16 %v3338
        %v3483 = vunpack.c.l.b16 %v3352
        %v3484 = vunpack.c.l.b16 %v3362
        %v3485 = vunpack.c.l.b16 %v3376
        %v3486 = vunpack.c.l.b16 %v3386
        %v3487 = vunpack.c.l.b16 %v3400
        %v3488 = vunpack.c.l.b16 %v3410
        %v3489 = vunpack.c.l.b16 %v3424
        %v3490 = vunpack.c.l.b16 %v3434
        %v3491 = vunpack.c.l.b16 %v3448
        %v3492 = vunpack.c.l.b16 %v3458
        %v3493 = vpack.c.b16 %v3462, %v3461
        %v3494 = vpack.c.b16 %v3464, %v3463
        %v3495 = vpack.c.b16 %v3466, %v3465
        %v3496 = vpack.c.b16 %v3468, %v3467
        %v3497 = vpack.c.b16 %v3470, %v3469
        %v3498 = vpack.c.b16 %v3472, %v3471
        %v3499 = vpack.c.b16 %v3474, %v3473
        %v3500 = vpack.c.b16 %v3476, %v3475
        %v3501 = vpack.c.b16 %v3478, %v3477
        %v3502 = vpack.c.b16 %v3480, %v3479
        %v3503 = vpack.c.b16 %v3482, %v3481
        %v3504 = vpack.c.b16 %v3484, %v3483
        %v3505 = vpack.c.b16 %v3486, %v3485
        %v3506 = vpack.c.b16 %v3488, %v3487
        %v3507 = vpack.c.b16 %v3490, %v3489
        %v3508 = vpack.c.b16 %v3492, %v3491
        %v3510 = vsel %vm648, %v3493, 0
        %v3513 = vsel %vm648, %v3494, 0
        %v3516 = vsel %vm648, %v3495, 0
        %v3519 = vsel %vm648, %v3496, 0
        %v3522 = vsel %vm648, %v3497, 0
        %v3525 = vsel %vm648, %v3498, 0
        %v3528 = vsel %vm648, %v3499, 0
        %v3531 = vsel %vm648, %v3500, 0
        %v3534 = vsel %vm648, %v3501, 0
        %v3537 = vsel %vm648, %v3502, 0
        %v3540 = vsel %vm648, %v3503, 0
        %v3543 = vsel %vm648, %v3504, 0
        %v3546 = vsel %vm648, %v3505, 0
        %v3549 = vsel %vm648, %v3506, 0
        %v3552 = vsel %vm648, %v3507, 0
        %v3555 = vsel %vm648, %v3508, 0
        %v3558 = vsel %vm697, %v3460, 0
        %3560 = vmatpush.bf16.msra.mxu0 0
        %3561 = vmatpush.bf16.msra.mxu0 0
        %3562 = vmatpush.bf16.msra.mxu0 0
        %3563 = vmatpush.bf16.msra.mxu0 0
        %3564 = vmatpush.bf16.msra.mxu0 0
        %3565 = vmatpush.bf16.msra.mxu0 0
        %3566 = vmatpush.bf16.msra.mxu0 0
        %3567 = vmatpush.bf16.msra.mxu0 %v3558
        %3568 = vmatmul.bf16.gmra.mxu0 %v3510
        %v3569 = vpop.f32.mrf.mxu0
        %v3570 = vadd.f32 0.0, %v3569
        %v3571 = vpop.f32.mrf.mxu0
        %v3572 = vadd.f32 0.0, %v3571
        %3573 = vmatmul.bf16.gmra.mxu0 %v3513
        %v3574 = vpop.f32.mrf.mxu0
        %v3575 = vadd.f32 0.0, %v3574
        %v3576 = vpop.f32.mrf.mxu0
        %v3577 = vadd.f32 0.0, %v3576
        %3578 = vmatmul.bf16.gmra.mxu0 %v3516
        %v3579 = vpop.f32.mrf.mxu0
        %v3580 = vadd.f32 0.0, %v3579
        %v3581 = vpop.f32.mrf.mxu0
        %v3582 = vadd.f32 0.0, %v3581
        %3583 = vmatmul.bf16.gmra.mxu0 %v3519
        %v3584 = vpop.f32.mrf.mxu0
        %v3585 = vadd.f32 0.0, %v3584
        %v3586 = vpop.f32.mrf.mxu0
        %v3587 = vadd.f32 0.0, %v3586
        %3588 = vmatmul.bf16.gmra.mxu0 %v3522
        %v3589 = vpop.f32.mrf.mxu0
        %v3590 = vadd.f32 0.0, %v3589
        %v3591 = vpop.f32.mrf.mxu0
        %v3592 = vadd.f32 0.0, %v3591
        %3593 = vmatmul.bf16.gmra.mxu0 %v3525
        %v3594 = vpop.f32.mrf.mxu0
        %v3595 = vadd.f32 0.0, %v3594
        %v3596 = vpop.f32.mrf.mxu0
        %v3597 = vadd.f32 0.0, %v3596
        %3598 = vmatmul.bf16.gmra.mxu0 %v3528
        %v3599 = vpop.f32.mrf.mxu0
        %v3600 = vadd.f32 0.0, %v3599
        %v3601 = vpop.f32.mrf.mxu0
        %v3602 = vadd.f32 0.0, %v3601
        %3603 = vmatmul.bf16.gmra.mxu0 %v3531
        %v3604 = vpop.f32.mrf.mxu0
        %v3605 = vadd.f32 0.0, %v3604
        %v3606 = vpop.f32.mrf.mxu0
        %v3607 = vadd.f32 0.0, %v3606
        %3608 = vmatmul.bf16.gmra.mxu0 %v3534
        %v3609 = vpop.f32.mrf.mxu0
        %v3610 = vadd.f32 0.0, %v3609
        %v3611 = vpop.f32.mrf.mxu0
        %v3612 = vadd.f32 0.0, %v3611
        %3613 = vmatmul.bf16.gmra.mxu0 %v3537
        %v3614 = vpop.f32.mrf.mxu0
        %v3615 = vadd.f32 0.0, %v3614
        %v3616 = vpop.f32.mrf.mxu0
        %v3617 = vadd.f32 0.0, %v3616
        %3618 = vmatmul.bf16.gmra.mxu0 %v3540
        %v3619 = vpop.f32.mrf.mxu0
        %v3620 = vadd.f32 0.0, %v3619
        %v3621 = vpop.f32.mrf.mxu0
        %v3622 = vadd.f32 0.0, %v3621
        %3623 = vmatmul.bf16.gmra.mxu0 %v3543
        %v3624 = vpop.f32.mrf.mxu0
        %v3625 = vadd.f32 0.0, %v3624
        %v3626 = vpop.f32.mrf.mxu0
        %v3627 = vadd.f32 0.0, %v3626
        %3628 = vmatmul.bf16.gmra.mxu0 %v3546
        %v3629 = vpop.f32.mrf.mxu0
        %v3630 = vadd.f32 0.0, %v3629
        %v3631 = vpop.f32.mrf.mxu0
        %v3632 = vadd.f32 0.0, %v3631
        %3633 = vmatmul.bf16.gmra.mxu0 %v3549
        %v3634 = vpop.f32.mrf.mxu0
        %v3635 = vadd.f32 0.0, %v3634
        %v3636 = vpop.f32.mrf.mxu0
        %v3637 = vadd.f32 0.0, %v3636
        %3638 = vmatmul.bf16.gmra.mxu0 %v3552
        %v3639 = vpop.f32.mrf.mxu0
        %v3640 = vadd.f32 0.0, %v3639
        %v3641 = vpop.f32.mrf.mxu0
        %v3642 = vadd.f32 0.0, %v3641
        %3643 = vmatmul.bf16.gmra.mxu0 %v3555
        %v3644 = vpop.f32.mrf.mxu0
        %v3645 = vadd.f32 0.0, %v3644
        %v3646 = vpop.f32.mrf.mxu0
        %v3647 = vadd.f32 0.0, %v3646
        %3648 = vdwg.mxu0
        %v3649 = vadd.f32 %v2995, %v3570
        %v3650 = vadd.f32 %v2996, %v3572
        %v3651 = vadd.f32 %v2997, %v3575
        %v3652 = vadd.f32 %v2998, %v3577
        %v3653 = vadd.f32 %v2999, %v3580
        %v3654 = vadd.f32 %v3000, %v3582
        %v3655 = vadd.f32 %v3001, %v3585
        %v3656 = vadd.f32 %v3002, %v3587
        %v3657 = vadd.f32 %v3003, %v3590
        %v3658 = vadd.f32 %v3004, %v3592
        %v3659 = vadd.f32 %v3005, %v3595
        %v3660 = vadd.f32 %v3006, %v3597
        %v3661 = vadd.f32 %v3007, %v3600
        %v3662 = vadd.f32 %v3008, %v3602
        %v3663 = vadd.f32 %v3009, %v3605
        %v3664 = vadd.f32 %v3010, %v3607
        %v3665 = vadd.f32 %v3011, %v3610
        %v3666 = vadd.f32 %v3012, %v3612
        %v3667 = vadd.f32 %v3013, %v3615
        %v3668 = vadd.f32 %v3014, %v3617
        %v3669 = vadd.f32 %v3015, %v3620
        %v3670 = vadd.f32 %v3016, %v3622
        %v3671 = vadd.f32 %v3017, %v3625
        %v3672 = vadd.f32 %v3018, %v3627
        %v3673 = vadd.f32 %v3019, %v3630
        %v3674 = vadd.f32 %v3020, %v3632
        %v3675 = vadd.f32 %v3021, %v3635
        %v3676 = vadd.f32 %v3022, %v3637
        %v3677 = vadd.f32 %v3023, %v3640
        %v3678 = vadd.f32 %v3024, %v3642
        %v3679 = vadd.f32 %v3025, %v3645
        %v3680 = vadd.f32 %v3026, %v3647
        %v3681 = vld [vmem:[%s2740] sm:$0xe]
        %v3682 = vld [vmem:[%s2740 + $0xc] sm:$0xe]
        %v3683 = vld [vmem:[%s2740 + $0x18] sm:$0xe]
        %v3684 = vld [vmem:[%s2740 + $0x24] sm:$0xe]
        %v3685 = vld [vmem:[%s2740 + $0x30] sm:$0xe]
        %v3686 = vld [vmem:[%s2740 + $0x3c] sm:$0xe]
        %v3687 = vld [vmem:[%s2740 + $0x48] sm:$0xe]
        %v3688 = vld [vmem:[%s2740 + $0x54] sm:$0xe]
        %v3689 = vld [vmem:[%s2740 + $0x60] sm:$0xe]
        %v3690 = vld [vmem:[%s2740 + $0x6c] sm:$0xe]
        %v3691 = vld [vmem:[%s2740 + $0x78] sm:$0xe]
        %v3692 = vld [vmem:[%s2740 + $0x84] sm:$0xe]
        %v3693 = vld [vmem:[%s2740 + $0x90] sm:$0xe]
        %v3694 = vld [vmem:[%s2740 + $0x9c] sm:$0xe]
        %v3695 = vld [vmem:[%s2740 + $0xa8] sm:$0xe]
        %v3696 = vld [vmem:[%s2740 + $0xb4] sm:$0xe]
        %v3745 = vrot.slane %v3681, 5
        %v3746 = vrot.slane %v3745, 4
        %v3747 = vrot.slane %v3028, 5
        %v3748 = vsel %vm1060, %v3746, %v3747
        %v3749 = vrot.slane %v3747, 4
        %v3750 = vrot.slane %v3029, 5
        %v3751 = vsel %vm1060, %v3749, %v3750
        %v3752 = vrot.slane %v3682, 5
        %v3753 = vrot.slane %v3752, 4
        %v3754 = vrot.slane %v3031, 5
        %v3755 = vsel %vm1060, %v3753, %v3754
        %v3756 = vrot.slane %v3754, 4
        %v3757 = vrot.slane %v3032, 5
        %v3758 = vsel %vm1060, %v3756, %v3757
        %v3759 = vrot.slane %v3683, 5
        %v3760 = vrot.slane %v3759, 4
        %v3761 = vrot.slane %v3034, 5
        %v3762 = vsel %vm1060, %v3760, %v3761
        %v3763 = vrot.slane %v3761, 4
        %v3764 = vrot.slane %v3035, 5
        %v3765 = vsel %vm1060, %v3763, %v3764
        %v3766 = vrot.slane %v3684, 5
        %v3767 = vrot.slane %v3766, 4
        %v3768 = vrot.slane %v3037, 5
        %v3769 = vsel %vm1060, %v3767, %v3768
        %v3770 = vrot.slane %v3768, 4
        %v3771 = vrot.slane %v3038, 5
        %v3772 = vsel %vm1060, %v3770, %v3771
        %v3773 = vrot.slane %v3685, 5
        %v3774 = vrot.slane %v3773, 4
        %v3775 = vrot.slane %v3040, 5
        %v3776 = vsel %vm1060, %v3774, %v3775
        %v3777 = vrot.slane %v3775, 4
        %v3778 = vrot.slane %v3041, 5
        %v3779 = vsel %vm1060, %v3777, %v3778
        %v3780 = vrot.slane %v3686, 5
        %v3781 = vrot.slane %v3780, 4
        %v3782 = vrot.slane %v3043, 5
        %v3783 = vsel %vm1060, %v3781, %v3782
        %v3784 = vrot.slane %v3782, 4
        %v3785 = vrot.slane %v3044, 5
        %v3786 = vsel %vm1060, %v3784, %v3785
        %v3787 = vrot.slane %v3687, 5
        %v3788 = vrot.slane %v3787, 4
        %v3789 = vrot.slane %v3046, 5
        %v3790 = vsel %vm1060, %v3788, %v3789
        %v3791 = vrot.slane %v3789, 4
        %v3792 = vrot.slane %v3047, 5
        %v3793 = vsel %vm1060, %v3791, %v3792
        %v3794 = vrot.slane %v3688, 5
        %v3795 = vrot.slane %v3794, 4
        %v3796 = vrot.slane %v3049, 5
        %v3797 = vsel %vm1060, %v3795, %v3796
        %v3798 = vrot.slane %v3796, 4
        %v3799 = vrot.slane %v3050, 5
        %v3800 = vsel %vm1060, %v3798, %v3799
        %v3801 = vrot.slane %v3689, 5
        %v3802 = vrot.slane %v3801, 4
        %v3803 = vrot.slane %v3052, 5
        %v3804 = vsel %vm1060, %v3802, %v3803
        %v3805 = vrot.slane %v3803, 4
        %v3806 = vrot.slane %v3053, 5
        %v3807 = vsel %vm1060, %v3805, %v3806
        %v3808 = vrot.slane %v3690, 5
        %v3809 = vrot.slane %v3808, 4
        %v3810 = vrot.slane %v3055, 5
        %v3811 = vsel %vm1060, %v3809, %v3810
        %v3812 = vrot.slane %v3810, 4
        %v3813 = vrot.slane %v3056, 5
        %v3814 = vsel %vm1060, %v3812, %v3813
        %v3815 = vrot.slane %v3691, 5
        %v3816 = vrot.slane %v3815, 4
        %v3817 = vrot.slane %v3058, 5
        %v3818 = vsel %vm1060, %v3816, %v3817
        %v3819 = vrot.slane %v3817, 4
        %v3820 = vrot.slane %v3059, 5
        %v3821 = vsel %vm1060, %v3819, %v3820
        %v3822 = vrot.slane %v3692, 5
        %v3823 = vrot.slane %v3822, 4
        %v3824 = vrot.slane %v3061, 5
        %v3825 = vsel %vm1060, %v3823, %v3824
        %v3826 = vrot.slane %v3824, 4
        %v3827 = vrot.slane %v3062, 5
        %v3828 = vsel %vm1060, %v3826, %v3827
        %v3829 = vrot.slane %v3693, 5
        %v3830 = vrot.slane %v3829, 4
        %v3831 = vrot.slane %v3064, 5
        %v3832 = vsel %vm1060, %v3830, %v3831
        %v3833 = vrot.slane %v3831, 4
        %v3834 = vrot.slane %v3065, 5
        %v3835 = vsel %vm1060, %v3833, %v3834
        %v3836 = vrot.slane %v3694, 5
        %v3837 = vrot.slane %v3836, 4
        %v3838 = vrot.slane %v3067, 5
        %v3839 = vsel %vm1060, %v3837, %v3838
        %v3840 = vrot.slane %v3838, 4
        %v3841 = vrot.slane %v3068, 5
        %v3842 = vsel %vm1060, %v3840, %v3841
        %v3843 = vrot.slane %v3695, 5
        %v3844 = vrot.slane %v3843, 4
        %v3845 = vrot.slane %v3070, 5
        %v3846 = vsel %vm1060, %v3844, %v3845
        %v3847 = vrot.slane %v3845, 4
        %v3848 = vrot.slane %v3071, 5
        %v3849 = vsel %vm1060, %v3847, %v3848
        %v3850 = vrot.slane %v3696, 5
        %v3851 = vrot.slane %v3850, 4
        %v3852 = vrot.slane %v3073, 5
        %v3853 = vsel %vm1060, %v3851, %v3852
        %v3854 = vrot.slane %v3852, 4
        %v3855 = vrot.slane %v3074, 5
        %v3856 = vsel %vm1060, %v3854, %v3855
        %s3857 = scalar_lea.vmem %s1, 32
        %v3858 = vld [vmem:[%s3857] sm:$0xf]
        %v3859 = vunpack.c.l.b16 %v3748
        %v3860 = vunpack.c.l.b16 %v3751
        %v3861 = vunpack.c.l.b16 %v3755
        %v3862 = vunpack.c.l.b16 %v3758
        %v3863 = vunpack.c.l.b16 %v3762
        %v3864 = vunpack.c.l.b16 %v3765
        %v3865 = vunpack.c.l.b16 %v3769
        %v3866 = vunpack.c.l.b16 %v3772
        %v3867 = vunpack.c.l.b16 %v3776
        %v3868 = vunpack.c.l.b16 %v3779
        %v3869 = vunpack.c.l.b16 %v3783
        %v3870 = vunpack.c.l.b16 %v3786
        %v3871 = vunpack.c.l.b16 %v3790
        %v3872 = vunpack.c.l.b16 %v3793
        %v3873 = vunpack.c.l.b16 %v3797
        %v3874 = vunpack.c.l.b16 %v3800
        %v3875 = vunpack.c.l.b16 %v3804
        %v3876 = vunpack.c.l.b16 %v3807
        %v3877 = vunpack.c.l.b16 %v3811
        %v3878 = vunpack.c.l.b16 %v3814
        %v3879 = vunpack.c.l.b16 %v3818
        %v3880 = vunpack.c.l.b16 %v3821
        %v3881 = vunpack.c.l.b16 %v3825
        %v3882 = vunpack.c.l.b16 %v3828
        %v3883 = vunpack.c.l.b16 %v3832
        %v3884 = vunpack.c.l.b16 %v3835
        %v3885 = vunpack.c.l.b16 %v3839
        %v3886 = vunpack.c.l.b16 %v3842
        %v3887 = vunpack.c.l.b16 %v3846
        %v3888 = vunpack.c.l.b16 %v3849
        %v3889 = vunpack.c.l.b16 %v3853
        %v3890 = vunpack.c.l.b16 %v3856
        %v3891 = vpack.c.b16 %v3860, %v3859
        %v3892 = vpack.c.b16 %v3862, %v3861
        %v3893 = vpack.c.b16 %v3864, %v3863
        %v3894 = vpack.c.b16 %v3866, %v3865
        %v3895 = vpack.c.b16 %v3868, %v3867
        %v3896 = vpack.c.b16 %v3870, %v3869
        %v3897 = vpack.c.b16 %v3872, %v3871
        %v3898 = vpack.c.b16 %v3874, %v3873
        %v3899 = vpack.c.b16 %v3876, %v3875
        %v3900 = vpack.c.b16 %v3878, %v3877
        %v3901 = vpack.c.b16 %v3880, %v3879
        %v3902 = vpack.c.b16 %v3882, %v3881
        %v3903 = vpack.c.b16 %v3884, %v3883
        %v3904 = vpack.c.b16 %v3886, %v3885
        %v3905 = vpack.c.b16 %v3888, %v3887
        %v3906 = vpack.c.b16 %v3890, %v3889
        %v3908 = vsel %vm648, %v3891, 0
        %v3911 = vsel %vm648, %v3892, 0
        %v3914 = vsel %vm648, %v3893, 0
        %v3917 = vsel %vm648, %v3894, 0
        %v3920 = vsel %vm648, %v3895, 0
        %v3923 = vsel %vm648, %v3896, 0
        %v3926 = vsel %vm648, %v3897, 0
        %v3929 = vsel %vm648, %v3898, 0
        %v3932 = vsel %vm648, %v3899, 0
        %v3935 = vsel %vm648, %v3900, 0
        %v3938 = vsel %vm648, %v3901, 0
        %v3941 = vsel %vm648, %v3902, 0
        %v3944 = vsel %vm648, %v3903, 0
        %v3947 = vsel %vm648, %v3904, 0
        %v3950 = vsel %vm648, %v3905, 0
        %v3953 = vsel %vm648, %v3906, 0
        %v3956 = vsel %vm697, %v3858, 0
        %3958 = vmatpush.bf16.msra.mxu0 0
        %3959 = vmatpush.bf16.msra.mxu0 0
        %3960 = vmatpush.bf16.msra.mxu0 0
        %3961 = vmatpush.bf16.msra.mxu0 0
        %3962 = vmatpush.bf16.msra.mxu0 0
        %3963 = vmatpush.bf16.msra.mxu0 0
        %3964 = vmatpush.bf16.msra.mxu0 0
        %3965 = vmatpush.bf16.msra.mxu0 %v3956
        %3966 = vmatmul.bf16.gmra.mxu0 %v3908
        %v3967 = vpop.f32.mrf.mxu0
        %v3968 = vadd.f32 0.0, %v3967
        %v3969 = vpop.f32.mrf.mxu0
        %v3970 = vadd.f32 0.0, %v3969
        %3971 = vmatmul.bf16.gmra.mxu0 %v3911
        %v3972 = vpop.f32.mrf.mxu0
        %v3973 = vadd.f32 0.0, %v3972
        %v3974 = vpop.f32.mrf.mxu0
        %v3975 = vadd.f32 0.0, %v3974
        %3976 = vmatmul.bf16.gmra.mxu0 %v3914
        %v3977 = vpop.f32.mrf.mxu0
        %v3978 = vadd.f32 0.0, %v3977
        %v3979 = vpop.f32.mrf.mxu0
        %v3980 = vadd.f32 0.0, %v3979
        %3981 = vmatmul.bf16.gmra.mxu0 %v3917
        %v3982 = vpop.f32.mrf.mxu0
        %v3983 = vadd.f32 0.0, %v3982
        %v3984 = vpop.f32.mrf.mxu0
        %v3985 = vadd.f32 0.0, %v3984
        %3986 = vmatmul.bf16.gmra.mxu0 %v3920
        %v3987 = vpop.f32.mrf.mxu0
        %v3988 = vadd.f32 0.0, %v3987
        %v3989 = vpop.f32.mrf.mxu0
        %v3990 = vadd.f32 0.0, %v3989
        %3991 = vmatmul.bf16.gmra.mxu0 %v3923
        %v3992 = vpop.f32.mrf.mxu0
        %v3993 = vadd.f32 0.0, %v3992
        %v3994 = vpop.f32.mrf.mxu0
        %v3995 = vadd.f32 0.0, %v3994
        %3996 = vmatmul.bf16.gmra.mxu0 %v3926
        %v3997 = vpop.f32.mrf.mxu0
        %v3998 = vadd.f32 0.0, %v3997
        %v3999 = vpop.f32.mrf.mxu0
        %v4000 = vadd.f32 0.0, %v3999
        %4001 = vmatmul.bf16.gmra.mxu0 %v3929
        %v4002 = vpop.f32.mrf.mxu0
        %v4003 = vadd.f32 0.0, %v4002
        %v4004 = vpop.f32.mrf.mxu0
        %v4005 = vadd.f32 0.0, %v4004
        %4006 = vmatmul.bf16.gmra.mxu0 %v3932
        %v4007 = vpop.f32.mrf.mxu0
        %v4008 = vadd.f32 0.0, %v4007
        %v4009 = vpop.f32.mrf.mxu0
        %v4010 = vadd.f32 0.0, %v4009
        %4011 = vmatmul.bf16.gmra.mxu0 %v3935
        %v4012 = vpop.f32.mrf.mxu0
        %v4013 = vadd.f32 0.0, %v4012
        %v4014 = vpop.f32.mrf.mxu0
        %v4015 = vadd.f32 0.0, %v4014
        %4016 = vmatmul.bf16.gmra.mxu0 %v3938
        %v4017 = vpop.f32.mrf.mxu0
        %v4018 = vadd.f32 0.0, %v4017
        %v4019 = vpop.f32.mrf.mxu0
        %v4020 = vadd.f32 0.0, %v4019
        %4021 = vmatmul.bf16.gmra.mxu0 %v3941
        %v4022 = vpop.f32.mrf.mxu0
        %v4023 = vadd.f32 0.0, %v4022
        %v4024 = vpop.f32.mrf.mxu0
        %v4025 = vadd.f32 0.0, %v4024
        %4026 = vmatmul.bf16.gmra.mxu0 %v3944
        %v4027 = vpop.f32.mrf.mxu0
        %v4028 = vadd.f32 0.0, %v4027
        %v4029 = vpop.f32.mrf.mxu0
        %v4030 = vadd.f32 0.0, %v4029
        %4031 = vmatmul.bf16.gmra.mxu0 %v3947
        %v4032 = vpop.f32.mrf.mxu0
        %v4033 = vadd.f32 0.0, %v4032
        %v4034 = vpop.f32.mrf.mxu0
        %v4035 = vadd.f32 0.0, %v4034
        %4036 = vmatmul.bf16.gmra.mxu0 %v3950
        %v4037 = vpop.f32.mrf.mxu0
        %v4038 = vadd.f32 0.0, %v4037
        %v4039 = vpop.f32.mrf.mxu0
        %v4040 = vadd.f32 0.0, %v4039
        %4041 = vmatmul.bf16.gmra.mxu0 %v3953
        %v4042 = vpop.f32.mrf.mxu0
        %v4043 = vadd.f32 0.0, %v4042
        %v4044 = vpop.f32.mrf.mxu0
        %v4045 = vadd.f32 0.0, %v4044
        %4046 = vdwg.mxu0
        %v4047 = vadd.f32 %v3649, %v3968
        %v4048 = vadd.f32 %v3650, %v3970
        %v4049 = vadd.f32 %v3651, %v3973
        %v4050 = vadd.f32 %v3652, %v3975
        %v4051 = vadd.f32 %v3653, %v3978
        %v4052 = vadd.f32 %v3654, %v3980
        %v4053 = vadd.f32 %v3655, %v3983
        %v4054 = vadd.f32 %v3656, %v3985
        %v4055 = vadd.f32 %v3657, %v3988
        %v4056 = vadd.f32 %v3658, %v3990
        %v4057 = vadd.f32 %v3659, %v3993
        %v4058 = vadd.f32 %v3660, %v3995
        %v4059 = vadd.f32 %v3661, %v3998
        %v4060 = vadd.f32 %v3662, %v4000
        %v4061 = vadd.f32 %v3663, %v4003
        %v4062 = vadd.f32 %v3664, %v4005
        %v4063 = vadd.f32 %v3665, %v4008
        %v4064 = vadd.f32 %v3666, %v4010
        %v4065 = vadd.f32 %v3667, %v4013
        %v4066 = vadd.f32 %v3668, %v4015
        %v4067 = vadd.f32 %v3669, %v4018
        %v4068 = vadd.f32 %v3670, %v4020
        %v4069 = vadd.f32 %v3671, %v4023
        %v4070 = vadd.f32 %v3672, %v4025
        %v4071 = vadd.f32 %v3673, %v4028
        %v4072 = vadd.f32 %v3674, %v4030
        %v4073 = vadd.f32 %v3675, %v4033
        %v4074 = vadd.f32 %v3676, %v4035
        %v4075 = vadd.f32 %v3677, %v4038
        %v4076 = vadd.f32 %v3678, %v4040
        %v4077 = vadd.f32 %v3679, %v4043
        %v4078 = vadd.f32 %v3680, %v4045
        %v4079 = vmax.f32 %v4047, 0.0
        %v4080 = vmax.f32 %v4048, 0.0
        %v4081 = vmax.f32 %v4049, 0.0
        %v4082 = vmax.f32 %v4050, 0.0
        %v4083 = vmax.f32 %v4051, 0.0
        %v4084 = vmax.f32 %v4052, 0.0
        %v4085 = vmax.f32 %v4053, 0.0
        %v4086 = vmax.f32 %v4054, 0.0
        %v4087 = vmax.f32 %v4055, 0.0
        %v4088 = vmax.f32 %v4056, 0.0
        %v4089 = vmax.f32 %v4057, 0.0
        %v4090 = vmax.f32 %v4058, 0.0
        %v4091 = vmax.f32 %v4059, 0.0
        %v4092 = vmax.f32 %v4060, 0.0
        %v4093 = vmax.f32 %v4061, 0.0
        %v4094 = vmax.f32 %v4062, 0.0
        %v4095 = vmax.f32 %v4063, 0.0
        %v4096 = vmax.f32 %v4064, 0.0
        %v4097 = vmax.f32 %v4065, 0.0
        %v4098 = vmax.f32 %v4066, 0.0
        %v4099 = vmax.f32 %v4067, 0.0
        %v4100 = vmax.f32 %v4068, 0.0
        %v4101 = vmax.f32 %v4069, 0.0
        %v4102 = vmax.f32 %v4070, 0.0
        %v4103 = vmax.f32 %v4071, 0.0
        %v4104 = vmax.f32 %v4072, 0.0
        %v4105 = vmax.f32 %v4073, 0.0
        %v4106 = vmax.f32 %v4074, 0.0
        %v4107 = vmax.f32 %v4075, 0.0
        %v4108 = vmax.f32 %v4076, 0.0
        %v4109 = vmax.f32 %v4077, 0.0
        %v4110 = vmax.f32 %v4078, 0.0
        %v4111 = vpack.c.bf16 %v4079, %v4079
        %v4112 = vpack.c.bf16 %v4080, %v4080
        %v4113 = vpack.c.bf16 %v4081, %v4081
        %v4114 = vpack.c.bf16 %v4082, %v4082
        %v4115 = vpack.c.bf16 %v4083, %v4083
        %v4116 = vpack.c.bf16 %v4084, %v4084
        %v4117 = vpack.c.bf16 %v4085, %v4085
        %v4118 = vpack.c.bf16 %v4086, %v4086
        %v4119 = vpack.c.bf16 %v4087, %v4087
        %v4120 = vpack.c.bf16 %v4088, %v4088
        %v4121 = vpack.c.bf16 %v4089, %v4089
        %v4122 = vpack.c.bf16 %v4090, %v4090
        %v4123 = vpack.c.bf16 %v4091, %v4091
        %v4124 = vpack.c.bf16 %v4092, %v4092
        %v4125 = vpack.c.bf16 %v4093, %v4093
        %v4126 = vpack.c.bf16 %v4094, %v4094
        %v4127 = vpack.c.bf16 %v4095, %v4095
        %v4128 = vpack.c.bf16 %v4096, %v4096
        %v4129 = vpack.c.bf16 %v4097, %v4097
        %v4130 = vpack.c.bf16 %v4098, %v4098
        %v4131 = vpack.c.bf16 %v4099, %v4099
        %v4132 = vpack.c.bf16 %v4100, %v4100
        %v4133 = vpack.c.bf16 %v4101, %v4101
        %v4134 = vpack.c.bf16 %v4102, %v4102
        %v4135 = vpack.c.bf16 %v4103, %v4103
        %v4136 = vpack.c.bf16 %v4104, %v4104
        %v4137 = vpack.c.bf16 %v4105, %v4105
        %v4138 = vpack.c.bf16 %v4106, %v4106
        %v4139 = vpack.c.bf16 %v4107, %v4107
        %v4140 = vpack.c.bf16 %v4108, %v4108
        %v4141 = vpack.c.bf16 %v4109, %v4109
        %v4142 = vpack.c.bf16 %v4110, %v4110
        %4143 = vst [vmem:[%s150] sm:$0xf] %v4111
        %4144 = vst [vmem:[%s150 + $0x4] sm:$0xf] %v4112
        %4145 = vst [vmem:[%s150 + $0x8] sm:$0xf] %v4113
        %4146 = vst [vmem:[%s150 + $0xc] sm:$0xf] %v4114
        %4147 = vst [vmem:[%s150 + $0x10] sm:$0xf] %v4115
        %4148 = vst [vmem:[%s150 + $0x14] sm:$0xf] %v4116
        %4149 = vst [vmem:[%s150 + $0x18] sm:$0xf] %v4117
        %4150 = vst [vmem:[%s150 + $0x1c] sm:$0xf] %v4118
        %4151 = vst [vmem:[%s150 + $0x20] sm:$0xf] %v4119
        %4152 = vst [vmem:[%s150 + $0x24] sm:$0xf] %v4120
        %4153 = vst [vmem:[%s150 + $0x28] sm:$0xf] %v4121
        %4154 = vst [vmem:[%s150 + $0x2c] sm:$0xf] %v4122
        %4155 = vst [vmem:[%s150 + $0x30] sm:$0xf] %v4123
        %4156 = vst [vmem:[%s150 + $0x34] sm:$0xf] %v4124
        %4157 = vst [vmem:[%s150 + $0x38] sm:$0xf] %v4125
        %4158 = vst [vmem:[%s150 + $0x3c] sm:$0xf] %v4126
        %4159 = vst [vmem:[%s150 + $0x40] sm:$0xf] %v4127
        %4160 = vst [vmem:[%s150 + $0x44] sm:$0xf] %v4128
        %4161 = vst [vmem:[%s150 + $0x48] sm:$0xf] %v4129
        %4162 = vst [vmem:[%s150 + $0x4c] sm:$0xf] %v4130
        %4163 = vst [vmem:[%s150 + $0x50] sm:$0xf] %v4131
        %4164 = vst [vmem:[%s150 + $0x54] sm:$0xf] %v4132
        %4165 = vst [vmem:[%s150 + $0x58] sm:$0xf] %v4133
        %4166 = vst [vmem:[%s150 + $0x5c] sm:$0xf] %v4134
        %4167 = vst [vmem:[%s150 + $0x60] sm:$0xf] %v4135
        %4168 = vst [vmem:[%s150 + $0x64] sm:$0xf] %v4136
        %4169 = vst [vmem:[%s150 + $0x68] sm:$0xf] %v4137
        %4170 = vst [vmem:[%s150 + $0x6c] sm:$0xf] %v4138
        %4171 = vst [vmem:[%s150 + $0x70] sm:$0xf] %v4139
        %4172 = vst [vmem:[%s150 + $0x74] sm:$0xf] %v4140
        %4173 = vst [vmem:[%s150 + $0x78] sm:$0xf] %v4141
        %4174 = vst [vmem:[%s150 + $0x7c] sm:$0xf] %v4142
        %s4175 = sand.u32 %s85, 1
        %s4176 = scalar_lea.sflag [#allocation3], %s4175
        %s4177 = sand.u32 %s85, 1
        %s4178 = smul.addr %s4177, 128
        %s4179 = scalar_lea.vmem [#allocation2], %s4178
        // Predicated region
        $region29: #{tpu_custom_call.1} parent=27 // pred_check
          %p4180 = pneg %p95
        $region30: #{tpu_custom_call.1} parent=27 // pred_check_branch
          %4182 = sbr.rel (%p4180) target = $region32
        $region31: #{tpu_custom_call.1} parent=27 // pred_region
          %s4183 = smul.u32 32, %s21
          %4185 = vsyncadd %s4176, 0
          %s4186 = smul.addr %s20, 32
          %s4187 = sadd.s32 %s4183, %s4186
          %s4188 = smul.addr %s4187, 4
          %s4189 = scalar_lea.hbm %s2, %s4188
          %s4190 = sshll.u32 %s4179, 4
          %s4191 = int_to_ptr.vmem [resolvable:$true] %s4190
          %s4192 = sshll.u32 %s4189, 4
          %s4193 = int_to_ptr.hbm [resolvable:$true] %s4192
          %4198 = dma.vmem_to_hbm [thread:$0]  %s4191, 2048, %s4193, %s4176, 64, 64, 4
        $region32: #{tpu_custom_call.1} parent=27 // pred_fallthru
          _
      $region28: #{tpu_custom_call.1} parent=5 // pred_fallthru
        _
      %p4199 = scmp.le.s32.totalorder 2, %s11
      // Predicated region
      $region33: #{tpu_custom_call.1} parent=5 // pred_check
        %p4200 = pneg %p4199
      $region34: #{tpu_custom_call.1} parent=5 // pred_check_branch
        %4202 = sbr.rel (%p4200) target = $region36
      $region35: #{tpu_custom_call.1} parent=5 // pred_region
        %s4203 = ssub.s32 %s11, 2
        // Predicated region
        $region37: #{tpu_custom_call.1} parent=35 // pred_check
          %p4204 = pneg %p101
        $region38: #{tpu_custom_call.1} parent=35 // pred_check_branch
          %4206 = sbr.rel (%p4204) target = $region40
        $region39: #{tpu_custom_call.1} parent=35 // pred_region
          %s4207 = sand.u32 %s86, 1
          %s4208 = scalar_lea.sflag [#allocation3], %s4207
          %s4209 = sand.u32 %s86, 1
          %s4210 = smul.addr %s4209, 128
          %s4211 = scalar_lea.vmem [#allocation2], %s4210
          %4213 = dma.done %s4208, 2048
        $region40: #{tpu_custom_call.1} parent=35 // pred_fallthru
          _
      $region36: #{tpu_custom_call.1} parent=5 // pred_fallthru
        _
    $region6: #{tpu_custom_call.1} parent=1 // loop_footer
      %s15 = sadd.s32 1, %s11
    $region7: #{tpu_custom_call.1} parent=1 // loop_footer_branch
      %10 = sbr.rel target = $region3
    $region8: #{tpu_custom_call.1} parent=1 // loop_exit
      _
    %4214 = vsyncpa [#allocation3], 1
    %s4215 = scalar_lea.sflag [#allocation3], 1
    %4216 = vsyncpa %s4215, 1

</llo_original>
